<compile_context>
chip_gen: v7x
topology: tpu7x:2x2x1
jax: 0.10.0
libtpu: 0.0.40
codegen_flags: <defaults>
</compile_context>

<pallas_src>
import functools

import jax
import jax.numpy as jnp
from jax.experimental import pallas as pl
from jax.experimental.pallas import tpu as pltpu

F32 = jnp.float32
BF16 = jnp.bfloat16


def _vmem_spec():
    return pl.BlockSpec(memory_space=pltpu.MemorySpace.VMEM)


def _smem_spec():
    return pl.BlockSpec(memory_space=pltpu.MemorySpace.SMEM)


def _pick_row_tile(n, cap=1024):
    for t in (1024, 512, 256, 128, 64, 32, 16, 8):
        if t <= cap and n % t == 0:
            return t
    return n


# --------------------------------------------------------------------------
# Kernel A: relu(bn1(x)) -> merged [shortcut 1x1 | conv1 1x1] -> relu(bn2)
# Operates on (TILE_N, Cin) row tiles of the flattened feature map.
# --------------------------------------------------------------------------
def _kernel_a_proj(x_ref, s1_ref, b1_ref, wcat_ref, s2_ref, b2_ref,
                   a2_ref, sc_ref):
    cexp = sc_ref.shape[-1]
    a1 = jnp.maximum(x_ref[...] * s1_ref[...] + b1_ref[...], 0.0)   # f32 BN+ReLU
    # one MXU matmul shared by shortcut and conv1 (same LHS, merged weights)
    h = jnp.dot(a1.astype(BF16), wcat_ref[...], preferred_element_type=F32)
    sc_ref[...] = h[:, :cexp]                                       # 1x1 shortcut
    a2 = jnp.maximum(h[:, cexp:] * s2_ref[...] + b2_ref[...], 0.0)  # relu(bn2)
    a2_ref[...] = a2.astype(a2_ref.dtype)


def _kernel_a_id(x_ref, s1_ref, b1_ref, w1_ref, s2_ref, b2_ref, a2_ref):
    # identity-shortcut variant: no shortcut copy is emitted at all
    a1 = jnp.maximum(x_ref[...] * s1_ref[...] + b1_ref[...], 0.0)
    h = jnp.dot(a1.astype(BF16), w1_ref[...], preferred_element_type=F32)
    a2_ref[...] = jnp.maximum(h * s2_ref[...] + b2_ref[...], 0.0).astype(a2_ref.dtype)


# --------------------------------------------------------------------------
# Kernel B: 3x3 conv (9 shifted dots from the in-VMEM padded a2, no HBM
# im2col), relu(bn3), conv3 (1x1), plus fused AdaptiveAvgPool2d(4) means.
# Grid = (batch, 4); each row band is exactly one pool row bin.
# --------------------------------------------------------------------------
def _kernel_b(hp_ref, w2_ref, s3_ref, b3_ref, w3_ref, o_ref, pool_ref):
    RT, W, cexp = o_ref.shape
    planes = w3_ref.shape[0]
    y0 = pl.program_id(1) * RT                      # first output row of this band

    acc = jnp.zeros((RT * W, planes), dtype=F32)
    for dy in range(3):
        for dx in range(3):
            sl = hp_ref[pl.ds(y0 + dy, RT), pl.ds(dx, W), :]        # (RT, W, planes) bf16
            acc = acc + jnp.dot(sl.reshape(RT * W, planes),
                                w2_ref[dy * 3 + dx],
                                preferred_element_type=F32)
    a3 = jnp.maximum(acc * s3_ref[...] + b3_ref[...], 0.0)          # relu(bn3), f32
    h = jnp.dot(a3.astype(BF16), w3_ref[...], preferred_element_type=F32)  # conv3
    hr = h.reshape(RT, W, cexp)
    o_ref[...] = hr

    # fused 4x4 adaptive-pool means for this row bin: reduce H first (VPU adds),
    # then the much smaller W (sublane) reduction.
    W4 = W // 4
    col = jnp.sum(hr, axis=0)                                       # (W, cexp)
    inv = 1.0 / (RT * W4)
    pool_ref[...] = jnp.concatenate(
        [jnp.sum(col[j * W4:(j + 1) * W4, :], axis=0, keepdims=True) * inv
         for j in range(4)], axis=0)                                # (4, cexp)


# --------------------------------------------------------------------------
# RENSE head math, shared by the Pallas kernel and the pure-JAX reference.
# `wg1` / `wg2` may be SMEM refs (in-kernel) or plain arrays (reference).
# --------------------------------------------------------------------------
def _se_attention_math(p4, wg1, wg2, fc1, fc2, pre_att):
    # p4[i][j]: (B, C) means of AdaptiveAvgPool2d(4); derive the 2x2 and 1x1
    # pools, nearest-upsample to 4x4, apply the two ShareGroupConvs, then the
    # SE MLP and the previous-attention term.
    p2 = [[(p4[2 * u][2 * v] + p4[2 * u][2 * v + 1]
            + p4[2 * u + 1][2 * v] + p4[2 * u + 1][2 * v + 1]) * 0.25
           for v in range(2)] for u in range(2)]
    p1 = sum(p4[i][j] for i in range(4) for j in range(4)) * (1.0 / 16.0)
    y1u = [[p1 for _ in range(4)] for _ in range(4)]
    y2u = [[p2[i // 2][j // 2] for j in range(4)] for i in range(4)]

    def g1(s, p, q):
        return wg1[s * 9 + p * 3 + q]

    s1 = [[None, None], [None, None]]
    for u in range(2):
        for v in range(2):
            acc = jnp.zeros_like(p1)
            for p in range(3):
                for q in range(3):
                    acc = (acc
                           + g1(0, p, q) * y1u[u + p][v + q]
                           + g1(1, p, q) * y2u[u + p][v + q]
                           + g1(2, p, q) * p4[u + p][v + q])
            s1[u][v] = acc
    # ShareGroupConv2 (k=3, pad=1, stride=3) on the 2x2 map: only the inner
    # 2x2 taps (indices 4,5,7,8) see valid pixels.
    yvec = (wg2[4] * s1[0][0] + wg2[5] * s1[0][1]
            + wg2[7] * s1[1][0] + wg2[8] * s1[1][1])                # (B, C)
    h = jnp.maximum(jnp.dot(yvec.astype(BF16), fc1,
                            preferred_element_type=F32), 0.0)
    return jnp.dot(h.astype(BF16), fc2, preferred_element_type=F32) + pre_att


def _kernel_se_head(y4_ref, att_ref, fc1_ref, fc2_ref, wg1_ref, wg2_ref,
                    att_out_ref, scale_ref):
    y4 = y4_ref[...]                                                # (B, 4, 4, C)
    p4 = [[y4[:, i, j, :] for j in range(4)] for i in range(4)]
    all_att = _se_attention_math(p4, wg1_ref, wg2_ref,
                                 fc1_ref[...], fc2_ref[...], att_ref[...])
    att_out_ref[...] = all_att
    # sigmoid via exp (EUP) + approximate reciprocal (EUP slot, ~free)
    scale_ref[...] = pl.reciprocal(1.0 + jnp.exp(-all_att), approx=True)


# --------------------------------------------------------------------------
# Kernel C: row-tiled gating + residual add.
# --------------------------------------------------------------------------
def _kernel_gate(pre_ref, sc_ref, scale_ref, o_ref):
    o_ref[...] = pre_ref[...] * scale_ref[...] + sc_ref[...]


# --------------------------------------------------------------------------
# Parameters / BN folding / previous-attention projection.
# --------------------------------------------------------------------------
def init_params(key, in_planes, planes, reduction=16):
    exp = 4
    cexp = exp * planes
    ks = jax.random.split(key, 12)

    def nrm(k, shape, s=0.1):
        return jax.random.normal(k, shape, dtype=F32) * s

    def bn(k, c):
        k1, k2, k3, k4 = jax.random.split(k, 4)
        gamma = 1.0 + 0.1 * jax.random.normal(k1, (c,), dtype=F32)
        beta = 0.1 * jax.random.normal(k2, (c,), dtype=F32)
        mean = 0.1 * jax.random.normal(k3, (c,), dtype=F32)
        var = jnp.abs(jax.random.normal(k4, (c,), dtype=F32)) + 0.5
        return gamma, beta, mean, var

    p = {}
    p['bn1'] = bn(ks[0], in_planes)
    p['bn2'] = bn(ks[1], planes)
    p['bn3'] = bn(ks[2], planes)
    p['conv1'] = nrm(ks[3], (planes, in_planes, 1, 1))
    p['conv2'] = nrm(ks[4], (planes, planes, 3, 3))
    p['conv3'] = nrm(ks[5], (cexp, planes, 1, 1))
    p['shortcut'] = nrm(ks[6], (cexp, in_planes, 1, 1))
    p['se_g1'] = nrm(ks[7], (1, 3, 3, 3))           # ShareGroupConv.oralconv
    p['se_g2'] = nrm(ks[8], (1, 1, 3, 3))           # ShareGroupConv2.oralconv
    p['se_fc1'] = nrm(ks[9], (cexp // reduction, cexp))
    p['se_fc2'] = nrm(ks[10], (cexp, cexp // reduction))
    p['se_att_fc'] = nrm(ks[11], (cexp, in_planes))
    return p


def _bn_fold(bn, eps=1e-5):
    # TODO(synk): inference-mode BN (running stats folded); training-mode batch
    # statistics are not implemented.
    gamma, beta, mean, var = bn
    scale = gamma / jnp.sqrt(var + eps)
    shift = beta - mean * scale
    return scale.reshape(1, -1), shift.reshape(1, -1)


def _pre_attention(att, params, batch, in_planes, cexp):
    if att is None:
        return jnp.zeros((batch, cexp), dtype=F32)   # fc(y) + 0 == fc(y)
    if in_planes != cexp:
        return (att @ params['se_att_fc'].T).astype(F32)
    return att.astype(F32)


# --------------------------------------------------------------------------
# Forward pass.
# --------------------------------------------------------------------------
def preact_bottleneck_forward(x_nchw, att, params, in_planes, planes, stride=1):
    exp = 4
    cexp = exp * planes
    assert stride == 1                       # TODO(synk): stride > 1 unsupported
    B, Cin, H, W = x_nchw.shape
    assert Cin == in_planes
    assert H % 4 == 0 and W % 4 == 0         # TODO(synk): general adaptive pooling
    N = B * H * W
    RT = H // 4                              # one row band per 4x4-pool row bin
    TILE_N = _pick_row_tile(N)

    x = jnp.transpose(x_nchw, (0, 2, 3, 1))  # NCHW -> NHWC (model boundary only)
    x2d = x.reshape(N, Cin)

    s1, b1 = _bn_fold(params['bn1'])
    s2, b2 = _bn_fold(params['bn2'])
    s3, b3 = _bn_fold(params['bn3'])
    w1 = params['conv1'][:, :, 0, 0].T.astype(BF16)                  # (Cin, planes)
    w2 = jnp.transpose(params['conv2'], (2, 3, 1, 0)).reshape(
        9, planes, planes).astype(BF16)                              # (9, cin, cout)
    w3 = params['conv3'][:, :, 0, 0].T.astype(BF16)                  # (planes, cexp)
    needs_sc = (stride != 1) or (in_planes != cexp)

    par1 = pltpu.CompilerParams(dimension_semantics=("parallel",))
    par2 = pltpu.CompilerParams(dimension_semantics=("parallel", "parallel"))

    # ---- Kernel A -------------------------------------------------------
    if needs_sc:
        wsc = params['shortcut'][:, :, 0, 0].T.astype(BF16)          # (Cin, cexp)
        wcat = jnp.concatenate([wsc, w1], axis=1)                    # (Cin, cexp+planes)
        a2_2d, sc2d = pl.pallas_call(
            _kernel_a_proj,
            grid=(N // TILE_N,),
            in_specs=[
                pl.BlockSpec((TILE_N, Cin), lambda i: (i, 0)),
                pl.BlockSpec((1, Cin), lambda i: (0, 0)),
                pl.BlockSpec((1, Cin), lambda i: (0, 0)),
                pl.BlockSpec((Cin, cexp + planes), lambda i: (0, 0)),
                pl.BlockSpec((1, planes), lambda i: (0, 0)),
                pl.BlockSpec((1, planes), lambda i: (0, 0)),
            ],
            out_specs=(
                pl.BlockSpec((TILE_N, planes), lambda i: (i, 0)),
                pl.BlockSpec((TILE_N, cexp), lambda i: (i, 0)),
            ),
            out_shape=(jax.ShapeDtypeStruct((N, planes), BF16),
                       jax.ShapeDtypeStruct((N, cexp), F32)),
            compiler_params=par1,
        )(x2d, s1, b1, wcat, s2, b2)
        sc_map = sc2d.reshape(B, H, W, cexp)
    else:
        a2_2d = pl.pallas_call(
            _kernel_a_id,
            grid=(N // TILE_N,),
            in_specs=[
                pl.BlockSpec((TILE_N, Cin), lambda i: (i, 0)),
                pl.BlockSpec((1, Cin), lambda i: (0, 0)),
                pl.BlockSpec((1, Cin), lambda i: (0, 0)),
                pl.BlockSpec((Cin, planes), lambda i: (0, 0)),
                pl.BlockSpec((1, planes), lambda i: (0, 0)),
                pl.BlockSpec((1, planes), lambda i: (0, 0)),
            ],
            out_specs=pl.BlockSpec((TILE_N, planes), lambda i: (i, 0)),
            out_shape=jax.ShapeDtypeStruct((N, planes), BF16),
            compiler_params=par1,
        )(x2d, s1, b1, w1, s2, b2)
        sc_map = x                      # identity shortcut: no HBM round-trip copy

    # ---- Kernel B: fused 3x3 conv + bn3/relu + conv3 + 4x4 pooling -------
    hp = jnp.pad(a2_2d.reshape(B, H, W, planes),
                 ((0, 0), (1, 1), (1, 1), (0, 0)))                   # small bf16 pad
    pre_se, pool4 = pl.pallas_call(
        _kernel_b,
        grid=(B, 4),
        in_specs=[
            pl.BlockSpec((None, H + 2, W + 2, planes), lambda b, i: (b, 0, 0, 0)),
            pl.BlockSpec((9, planes, planes), lambda b, i: (0, 0, 0)),
            pl.BlockSpec((1, planes), lambda b, i: (0, 0)),
            pl.BlockSpec((1, planes), lambda b, i: (0, 0)),
            pl.BlockSpec((planes, cexp), lambda b, i: (0, 0)),
        ],
        out_specs=(
            pl.BlockSpec((None, RT, W, cexp), lambda b, i: (b, i, 0, 0)),
            pl.BlockSpec((None, None, 4, cexp), lambda b, i: (b, i, 0, 0)),
        ),
        out_shape=(jax.ShapeDtypeStruct((B, H, W, cexp), F32),
                   jax.ShapeDtypeStruct((B, 4, 4, cexp), F32)),
        compiler_params=par2,
    )(hp, w2, s3, b3, w3)

    # ---- Kernel S: RENSE head on the tiny pooled stats -------------------
    pre_att = _pre_attention(att, params, B, in_planes, cexp)
    fc1t = params['se_fc1'].T.astype(BF16)                           # (cexp, cexp//r)
    fc2t = params['se_fc2'].T.astype(BF16)                           # (cexp//r, cexp)
    wg1 = params['se_g1'].reshape(27)
    wg2 = params['se_g2'].reshape(9)
    all_att, scale = pl.pallas_call(
        _kernel_se_head,
        in_specs=[_vmem_spec()] * 4 + [_smem_spec(), _smem_spec()],
        out_specs=(_vmem_spec(), _vmem_spec()),
        out_shape=(jax.ShapeDtypeStruct((B, cexp), F32),
                   jax.ShapeDtypeStruct((B, cexp), F32)),
    )(pool4, pre_att, fc1t, fc2t, wg1, wg2)

    # ---- Kernel C: row-tiled sigmoid gating + residual add ---------------
    scale4 = scale.reshape(B, 1, 1, cexp)
    band_spec = pl.BlockSpec((None, RT, W, cexp), lambda b, i: (b, i, 0, 0))
    out_x = pl.pallas_call(
        _kernel_gate,
        grid=(B, 4),
        in_specs=[band_spec, band_spec,
                  pl.BlockSpec((None, 1, 1, cexp), lambda b, i: (b, 0, 0, 0))],
        out_specs=band_spec,
        out_shape=jax.ShapeDtypeStruct((B, H, W, cexp), F32),
        compiler_params=par2,
    )(pre_se, sc_map, scale4)

    return {0: jnp.transpose(out_x, (0, 3, 1, 2)), 1: all_att}       # back to NCHW


# --------------------------------------------------------------------------
# Pure-JAX reference mirroring the kernel math (same bf16 casts).
# --------------------------------------------------------------------------
def reference_forward(x_nchw, att, params, in_planes, planes, stride=1):
    exp = 4
    cexp = exp * planes
    B, Cin, H, W = x_nchw.shape
    RT, W4 = H // 4, W // 4
    x = jnp.transpose(x_nchw, (0, 2, 3, 1)).astype(F32)
    s1, b1 = _bn_fold(params['bn1'])
    s2, b2 = _bn_fold(params['bn2'])
    s3, b3 = _bn_fold(params['bn3'])
    w1 = params['conv1'][:, :, 0, 0].T.astype(BF16)
    w2 = jnp.transpose(params['conv2'], (2, 3, 1, 0)).astype(BF16)   # (3,3,cin,cout)
    w3 = params['conv3'][:, :, 0, 0].T.astype(BF16)

    a1 = jnp.maximum(x * s1.reshape(1, 1, 1, -1) + b1.reshape(1, 1, 1, -1), 0.0)
    a1b = a1.astype(BF16)
    h1 = jnp.einsum('bhwc,cd->bhwd', a1b, w1, preferred_element_type=F32)
    a2 = jnp.maximum(h1 * s2.reshape(1, 1, 1, -1) + b2.reshape(1, 1, 1, -1),
                     0.0).astype(BF16)
    if (stride != 1) or (in_planes != cexp):
        wsc = params['shortcut'][:, :, 0, 0].T.astype(BF16)
        sc = jnp.einsum('bhwc,cd->bhwd', a1b, wsc, preferred_element_type=F32)
    else:
        sc = x
    hp = jnp.pad(a2, ((0, 0), (1, 1), (1, 1), (0, 0)))
    acc = jnp.zeros((B, H, W, planes), F32)
    for dy in range(3):
        for dx in range(3):
            acc = acc + jnp.einsum('bhwc,cd->bhwd', hp[:, dy:dy + H, dx:dx + W, :],
                                   w2[dy, dx], preferred_element_type=F32)
    a3 = jnp.maximum(acc * s3.reshape(1, 1, 1, -1) + b3.reshape(1, 1, 1, -1),
                     0.0).astype(BF16)
    pre = jnp.einsum('bhwc,cd->bhwd', a3, w3, preferred_element_type=F32)

    pool4 = pre.reshape(B, 4, RT, 4, W4, cexp).mean(axis=(2, 4))     # (B,4,4,cexp)
    pre_att = _pre_attention(att, params, B, in_planes, cexp)
    fc1t = params['se_fc1'].T.astype(BF16)
    fc2t = params['se_fc2'].T.astype(BF16)
    wg1 = params['se_g1'].reshape(27)
    wg2 = params['se_g2'].reshape(9)
    p4 = [[pool4[:, i, j, :] for j in range(4)] for i in range(4)]
    all_att = _se_attention_math(p4, wg1, wg2, fc1t, fc2t, pre_att)
    scale = 1.0 / (1.0 + jnp.exp(-all_att))
    out = pre * scale[:, None, None, :] + sc
    return {0: jnp.transpose(out, (0, 3, 1, 2)), 1: all_att}


if __name__ == "__main__":
    B, H, W = 2, 16, 16
    keys = jax.random.split(jax.random.PRNGKey(0), 6)

    # --- config 1: projection shortcut (in_planes != expansion*planes) ----
    in_planes, planes = 8, 8
    params = init_params(keys[0], in_planes, planes)
    x = jax.random.normal(keys[1], (B, in_planes, H, W), dtype=F32)
    att = jax.random.normal(keys[2], (B, in_planes), dtype=F32)
    fwd = jax.jit(functools.partial(preact_bottleneck_forward,
                                    in_planes=in_planes, planes=planes, stride=1))
    out = fwd(x, att, params)
    jax.block_until_ready((out[0], out[1]))
    assert out[0].shape == (B, 4 * planes, H, W)
    assert out[1].shape == (B, 4 * planes)
    ref = reference_forward(x, att, params, in_planes, planes)
    e0 = float(jnp.max(jnp.abs(out[0] - ref[0])))
    e1 = float(jnp.max(jnp.abs(out[1] - ref[1])))
    assert e0 < 2e-2 and e1 < 2e-2, (e0, e1)

    # --- config 2: identity shortcut (in_planes == expansion*planes) ------
    in_planes2, planes2 = 32, 8
    params2 = init_params(keys[3], in_planes2, planes2)
    x2 = jax.random.normal(keys[4], (B, in_planes2, H, W), dtype=F32)
    att2 = jax.random.normal(keys[5], (B, in_planes2), dtype=F32)
    fwd2 = jax.jit(functools.partial(preact_bottleneck_forward,
                                     in_planes=in_planes2, planes=planes2, stride=1))
    out2 = fwd2(x2, att2, params2)
    jax.block_until_ready((out2[0], out2[1]))
    ref2 = reference_forward(x2, att2, params2, in_planes2, planes2)
    e2 = float(jnp.max(jnp.abs(out2[0] - ref2[0])))
    e3 = float(jnp.max(jnp.abs(out2[1] - ref2[1])))
    assert e2 < 2e-2 and e3 < 2e-2, (e2, e3)

    print("KERNEL_OK")
</pallas_src>

<mosaic_0001>
module attributes {stable_mosaic.version = 11 : i64} {
  func.func @_kernel_a_proj(%arg0: i32, %arg1: memref<512x8xf32, #tpu.memory_space<vmem>>, %arg2: memref<1x8xf32, #tpu.memory_space<vmem>>, %arg3: memref<1x8xf32, #tpu.memory_space<vmem>>, %arg4: memref<8x40xbf16, #tpu.memory_space<vmem>>, %arg5: memref<1x8xf32, #tpu.memory_space<vmem>>, %arg6: memref<1x8xf32, #tpu.memory_space<vmem>>, %arg7: memref<512x8xbf16, #tpu.memory_space<vmem>>, %arg8: memref<512x32xf32, #tpu.memory_space<vmem>>) attributes {dimension_semantics = [#tpu.dimension_semantics<parallel>], iteration_bounds = array<i64: 1>, scalar_prefetch = 0 : i64, scratch_operands = 0 : i64, tpu.core_type = #tpu.core_type<tc>, window_params = [{transform_indices = @transform_0, window_bounds = array<i64: 512, 8>}, {pipeline_mode = #tpu.pipeline_mode<synchronous>, transform_indices = @transform_1, window_bounds = array<i64: 1, 8>}, {pipeline_mode = #tpu.pipeline_mode<synchronous>, transform_indices = @transform_2, window_bounds = array<i64: 1, 8>}, {pipeline_mode = #tpu.pipeline_mode<synchronous>, transform_indices = @transform_3, window_bounds = array<i64: 8, 40>}, {pipeline_mode = #tpu.pipeline_mode<synchronous>, transform_indices = @transform_4, window_bounds = array<i64: 1, 8>}, {pipeline_mode = #tpu.pipeline_mode<synchronous>, transform_indices = @transform_5, window_bounds = array<i64: 1, 8>}, {transform_indices = @transform_6, window_bounds = array<i64: 512, 8>}, {transform_indices = @transform_7, window_bounds = array<i64: 512, 32>}]} {
    %c0 = arith.constant 0 : index
    %c0_0 = arith.constant 0 : index
    %0 = vector.load %arg1[%c0, %c0_0] : memref<512x8xf32, #tpu.memory_space<vmem>>, vector<512x8xf32>
    %c0_1 = arith.constant 0 : index
    %c0_2 = arith.constant 0 : index
    %1 = vector.load %arg2[%c0_1, %c0_2] : memref<1x8xf32, #tpu.memory_space<vmem>>, vector<1x8xf32>
    %2 = vector.broadcast %1 : vector<1x8xf32> to vector<512x8xf32>
    %3 = arith.mulf %0, %2 : vector<512x8xf32>
    %c0_3 = arith.constant 0 : index
    %c0_4 = arith.constant 0 : index
    %4 = vector.load %arg3[%c0_3, %c0_4] : memref<1x8xf32, #tpu.memory_space<vmem>>, vector<1x8xf32>
    %5 = vector.broadcast %4 : vector<1x8xf32> to vector<512x8xf32>
    %6 = arith.addf %3, %5 : vector<512x8xf32>
    %cst = arith.constant 0.000000e+00 : f32
    %7 = vector.broadcast %cst : f32 to vector<512x8xf32>
    %8 = arith.maximumf %6, %7 : vector<512x8xf32>
    %9 = arith.truncf %8 : vector<512x8xf32> to vector<512x8xbf16>
    %c0_5 = arith.constant 0 : index
    %c0_6 = arith.constant 0 : index
    %10 = vector.load %arg4[%c0_5, %c0_6] : memref<8x40xbf16, #tpu.memory_space<vmem>>, vector<8x40xbf16>
    %cst_7 = arith.constant dense<0.000000e+00> : vector<512x40xf32>
    %11 = tpu.matmul %9, %10, %cst_7 {dimension_numbers = #tpu.dot_dimension_numbers<[1], [0], [0], [1], [0, 0, 1, 1], [], []>} : vector<512x8xbf16>, vector<8x40xbf16>, vector<512x40xf32> -> vector<512x40xf32>
    %12 = vector.extract_strided_slice %11 {offsets = [0, 0], sizes = [512, 32], strides = [1, 1]} : vector<512x40xf32> to vector<512x32xf32>
    %c0_8 = arith.constant 0 : index
    %c0_9 = arith.constant 0 : index
    %13 = vector.load %arg8[%c0_8, %c0_9] : memref<512x32xf32, #tpu.memory_space<vmem>>, vector<512x32xf32>
    tpu.vector_store %arg8[%c0_8, %c0_9], %12 {strides = array<i32>} : memref<512x32xf32, #tpu.memory_space<vmem>>, vector<512x32xf32>,
    %14 = vector.extract_strided_slice %11 {offsets = [0, 32], sizes = [512, 8], strides = [1, 1]} : vector<512x40xf32> to vector<512x8xf32>
    %c0_10 = arith.constant 0 : index
    %c0_11 = arith.constant 0 : index
    %15 = vector.load %arg5[%c0_10, %c0_11] : memref<1x8xf32, #tpu.memory_space<vmem>>, vector<1x8xf32>
    %16 = vector.broadcast %15 : vector<1x8xf32> to vector<512x8xf32>
    %17 = arith.mulf %14, %16 : vector<512x8xf32>
    %c0_12 = arith.constant 0 : index
    %c0_13 = arith.constant 0 : index
    %18 = vector.load %arg6[%c0_12, %c0_13] : memref<1x8xf32, #tpu.memory_space<vmem>>, vector<1x8xf32>
    %19 = vector.broadcast %18 : vector<1x8xf32> to vector<512x8xf32>
    %20 = arith.addf %17, %19 : vector<512x8xf32>
    %cst_14 = arith.constant 0.000000e+00 : f32
    %21 = vector.broadcast %cst_14 : f32 to vector<512x8xf32>
    %22 = arith.maximumf %20, %21 : vector<512x8xf32>
    %23 = arith.truncf %22 : vector<512x8xf32> to vector<512x8xbf16>
    %c0_15 = arith.constant 0 : index
    %c0_16 = arith.constant 0 : index
    %24 = vector.load %arg7[%c0_15, %c0_16] : memref<512x8xbf16, #tpu.memory_space<vmem>>, vector<512x8xbf16>
    tpu.vector_store %arg7[%c0_15, %c0_16], %23 {strides = array<i32>} : memref<512x8xbf16, #tpu.memory_space<vmem>>, vector<512x8xbf16>,
    return
  }
  func.func @transform_0(%arg0: i32) -> (i32, i32) {
    %c0_i32 = arith.constant 0 : i32
    %c0_i32_0 = arith.constant 0 : i32
    return %arg0, %c0_i32 : i32, i32
  }
  func.func @transform_1(%arg0: i32) -> (i32, i32) {
    %c0_i32 = arith.constant 0 : i32
    %c0_i32_0 = arith.constant 0 : i32
    %c0_i32_1 = arith.constant 0 : i32
    return %c0_i32, %c0_i32_0 : i32, i32
  }
  func.func @transform_2(%arg0: i32) -> (i32, i32) {
    %c0_i32 = arith.constant 0 : i32
    %c0_i32_0 = arith.constant 0 : i32
    %c0_i32_1 = arith.constant 0 : i32
    return %c0_i32, %c0_i32_0 : i32, i32
  }
  func.func @transform_3(%arg0: i32) -> (i32, i32) {
    %c0_i32 = arith.constant 0 : i32
    %c0_i32_0 = arith.constant 0 : i32
    %c0_i32_1 = arith.constant 0 : i32
    return %c0_i32, %c0_i32_0 : i32, i32
  }
  func.func @transform_4(%arg0: i32) -> (i32, i32) {
    %c0_i32 = arith.constant 0 : i32
    %c0_i32_0 = arith.constant 0 : i32
    %c0_i32_1 = arith.constant 0 : i32
    return %c0_i32, %c0_i32_0 : i32, i32
  }
  func.func @transform_5(%arg0: i32) -> (i32, i32) {
    %c0_i32 = arith.constant 0 : i32
    %c0_i32_0 = arith.constant 0 : i32
    %c0_i32_1 = arith.constant 0 : i32
    return %c0_i32, %c0_i32_0 : i32, i32
  }
  func.func @transform_6(%arg0: i32) -> (i32, i32) {
    %c0_i32 = arith.constant 0 : i32
    %c0_i32_0 = arith.constant 0 : i32
    return %arg0, %c0_i32 : i32, i32
  }
  func.func @transform_7(%arg0: i32) -> (i32, i32) {
    %c0_i32 = arith.constant 0 : i32
    %c0_i32_0 = arith.constant 0 : i32
    return %arg0, %c0_i32 : i32, i32
  }
}

module attributes {stable_mosaic.version = 11 : i64} {
  func.func @_kernel_b(%arg0: i32, %arg1: i32, %arg2: memref<1x18x18x8xbf16, #tpu.memory_space<vmem>>, %arg3: memref<9x8x8xbf16, #tpu.memory_space<vmem>>, %arg4: memref<1x8xf32, #tpu.memory_space<vmem>>, %arg5: memref<1x8xf32, #tpu.memory_space<vmem>>, %arg6: memref<8x32xbf16, #tpu.memory_space<vmem>>, %arg7: memref<1x4x16x32xf32, #tpu.memory_space<vmem>>, %arg8: memref<1x1x4x32xf32, #tpu.memory_space<vmem>>) attributes {dimension_semantics = [#tpu.dimension_semantics<parallel>, #tpu.dimension_semantics<parallel>], iteration_bounds = array<i64: 2, 4>, scalar_prefetch = 0 : i64, scratch_operands = 0 : i64, tpu.core_type = #tpu.core_type<tc>, window_params = [{transform_indices = @transform_0, window_bounds = array<i64: 1, 18, 18, 8>}, {pipeline_mode = #tpu.pipeline_mode<synchronous>, transform_indices = @transform_1, window_bounds = array<i64: 9, 8, 8>}, {pipeline_mode = #tpu.pipeline_mode<synchronous>, transform_indices = @transform_2, window_bounds = array<i64: 1, 8>}, {pipeline_mode = #tpu.pipeline_mode<synchronous>, transform_indices = @transform_3, window_bounds = array<i64: 1, 8>}, {pipeline_mode = #tpu.pipeline_mode<synchronous>, transform_indices = @transform_4, window_bounds = array<i64: 8, 32>}, {transform_indices = @transform_5, window_bounds = array<i64: 1, 4, 16, 32>}, {transform_indices = @transform_6, window_bounds = array<i64: 1, 1, 4, 32>}]} {
    %c4_i32 = arith.constant 4 : i32
    %0 = arith.muli %arg1, %c4_i32 : i32
    %cst = arith.constant 0.000000e+00 : f32
    %1 = vector.broadcast %cst : f32 to vector<64x8xf32>
    %c0_i32 = arith.constant 0 : i32
    %2 = arith.addi %0, %c0_i32 : i32
    %c0 = arith.constant 0 : index
    %3 = arith.index_cast %2 : i32 to index
    %c0_0 = arith.constant 0 : index
    %c0_1 = arith.constant 0 : index
    %4 = vector.load %arg2[%c0, %3, %c0_0, %c0_1] : memref<1x18x18x8xbf16, #tpu.memory_space<vmem>>, vector<1x4x16x8xbf16>
    %5 = vector.shape_cast %4 : vector<1x4x16x8xbf16> to vector<4x16x8xbf16>
    %6 = vector.shape_cast %5 : vector<4x16x8xbf16> to vector<64x8xbf16>
    %c0_2 = arith.constant 0 : index
    %c0_3 = arith.constant 0 : index
    %c0_4 = arith.constant 0 : index
    %7 = vector.load %arg3[%c0_2, %c0_3, %c0_4] : memref<9x8x8xbf16, #tpu.memory_space<vmem>>, vector<1x8x8xbf16>
    %8 = vector.shape_cast %7 : vector<1x8x8xbf16> to vector<8x8xbf16>
    %cst_5 = arith.constant dense<0.000000e+00> : vector<64x8xf32>
    %9 = tpu.matmul %6, %8, %cst_5 {dimension_numbers = #tpu.dot_dimension_numbers<[1], [0], [0], [1], [0, 0, 1, 1], [], []>} : vector<64x8xbf16>, vector<8x8xbf16>, vector<64x8xf32> -> vector<64x8xf32>
    %10 = arith.addf %1, %9 : vector<64x8xf32>
    %c0_i32_6 = arith.constant 0 : i32
    %11 = arith.addi %0, %c0_i32_6 : i32
    %c0_7 = arith.constant 0 : index
    %12 = arith.index_cast %11 : i32 to index
    %c1 = arith.constant 1 : index
    %c0_8 = arith.constant 0 : index
    %13 = vector.load %arg2[%c0_7, %12, %c1, %c0_8] : memref<1x18x18x8xbf16, #tpu.memory_space<vmem>>, vector<1x4x16x8xbf16>
    %14 = vector.shape_cast %13 : vector<1x4x16x8xbf16> to vector<4x16x8xbf16>
    %15 = vector.shape_cast %14 : vector<4x16x8xbf16> to vector<64x8xbf16>
    %c1_9 = arith.constant 1 : index
    %c0_10 = arith.constant 0 : index
    %c0_11 = arith.constant 0 : index
    %16 = vector.load %arg3[%c1_9, %c0_10, %c0_11] : memref<9x8x8xbf16, #tpu.memory_space<vmem>>, vector<1x8x8xbf16>
    %17 = vector.shape_cast %16 : vector<1x8x8xbf16> to vector<8x8xbf16>
    %cst_12 = arith.constant dense<0.000000e+00> : vector<64x8xf32>
    %18 = tpu.matmul %15, %17, %cst_12 {dimension_numbers = #tpu.dot_dimension_numbers<[1], [0], [0], [1], [0, 0, 1, 1], [], []>} : vector<64x8xbf16>, vector<8x8xbf16>, vector<64x8xf32> -> vector<64x8xf32>
    %19 = arith.addf %10, %18 : vector<64x8xf32>
    %c0_i32_13 = arith.constant 0 : i32
    %20 = arith.addi %0, %c0_i32_13 : i32
    %c0_14 = arith.constant 0 : index
    %21 = arith.index_cast %20 : i32 to index
    %c2 = arith.constant 2 : index
    %c0_15 = arith.constant 0 : index
    %22 = vector.load %arg2[%c0_14, %21, %c2, %c0_15] : memref<1x18x18x8xbf16, #tpu.memory_space<vmem>>, vector<1x4x16x8xbf16>
    %23 = vector.shape_cast %22 : vector<1x4x16x8xbf16> to vector<4x16x8xbf16>
    %24 = vector.shape_cast %23 : vector<4x16x8xbf16> to vector<64x8xbf16>
    %c2_16 = arith.constant 2 : index
    %c0_17 = arith.constant 0 : index
    %c0_18 = arith.constant 0 : index
    %25 = vector.load %arg3[%c2_16, %c0_17, %c0_18] : memref<9x8x8xbf16, #tpu.memory_space<vmem>>, vector<1x8x8xbf16>
    %26 = vector.shape_cast %25 : vector<1x8x8xbf16> to vector<8x8xbf16>
    %cst_19 = arith.constant dense<0.000000e+00> : vector<64x8xf32>
    %27 = tpu.matmul %24, %26, %cst_19 {dimension_numbers = #tpu.dot_dimension_numbers<[1], [0], [0], [1], [0, 0, 1, 1], [], []>} : vector<64x8xbf16>, vector<8x8xbf16>, vector<64x8xf32> -> vector<64x8xf32>
    %28 = arith.addf %19, %27 : vector<64x8xf32>
    %c1_i32 = arith.constant 1 : i32
    %29 = arith.addi %0, %c1_i32 : i32
    %c0_20 = arith.constant 0 : index
    %30 = arith.index_cast %29 : i32 to index
    %c0_21 = arith.constant 0 : index
    %c0_22 = arith.constant 0 : index
    %31 = vector.load %arg2[%c0_20, %30, %c0_21, %c0_22] : memref<1x18x18x8xbf16, #tpu.memory_space<vmem>>, vector<1x4x16x8xbf16>
    %32 = vector.shape_cast %31 : vector<1x4x16x8xbf16> to vector<4x16x8xbf16>
    %33 = vector.shape_cast %32 : vector<4x16x8xbf16> to vector<64x8xbf16>
    %c3 = arith.constant 3 : index
    %c0_23 = arith.constant 0 : index
    %c0_24 = arith.constant 0 : index
    %34 = vector.load %arg3[%c3, %c0_23, %c0_24] : memref<9x8x8xbf16, #tpu.memory_space<vmem>>, vector<1x8x8xbf16>
    %35 = vector.shape_cast %34 : vector<1x8x8xbf16> to vector<8x8xbf16>
    %cst_25 = arith.constant dense<0.000000e+00> : vector<64x8xf32>
    %36 = tpu.matmul %33, %35, %cst_25 {dimension_numbers = #tpu.dot_dimension_numbers<[1], [0], [0], [1], [0, 0, 1, 1], [], []>} : vector<64x8xbf16>, vector<8x8xbf16>, vector<64x8xf32> -> vector<64x8xf32>
    %37 = arith.addf %28, %36 : vector<64x8xf32>
    %c1_i32_26 = arith.constant 1 : i32
    %38 = arith.addi %0, %c1_i32_26 : i32
    %c0_27 = arith.constant 0 : index
    %39 = arith.index_cast %38 : i32 to index
    %c1_28 = arith.constant 1 : index
    %c0_29 = arith.constant 0 : index
    %40 = vector.load %arg2[%c0_27, %39, %c1_28, %c0_29] : memref<1x18x18x8xbf16, #tpu.memory_space<vmem>>, vector<1x4x16x8xbf16>
    %41 = vector.shape_cast %40 : vector<1x4x16x8xbf16> to vector<4x16x8xbf16>
    %42 = vector.shape_cast %41 : vector<4x16x8xbf16> to vector<64x8xbf16>
    %c4 = arith.constant 4 : index
    %c0_30 = arith.constant 0 : index
    %c0_31 = arith.constant 0 : index
    %43 = vector.load %arg3[%c4, %c0_30, %c0_31] : memref<9x8x8xbf16, #tpu.memory_space<vmem>>, vector<1x8x8xbf16>
    %44 = vector.shape_cast %43 : vector<1x8x8xbf16> to vector<8x8xbf16>
    %cst_32 = arith.constant dense<0.000000e+00> : vector<64x8xf32>
    %45 = tpu.matmul %42, %44, %cst_32 {dimension_numbers = #tpu.dot_dimension_numbers<[1], [0], [0], [1], [0, 0, 1, 1], [], []>} : vector<64x8xbf16>, vector<8x8xbf16>, vector<64x8xf32> -> vector<64x8xf32>
    %46 = arith.addf %37, %45 : vector<64x8xf32>
    %c1_i32_33 = arith.constant 1 : i32
    %47 = arith.addi %0, %c1_i32_33 : i32
    %c0_34 = arith.constant 0 : index
    %48 = arith.index_cast %47 : i32 to index
    %c2_35 = arith.constant 2 : index
    %c0_36 = arith.constant 0 : index
    %49 = vector.load %arg2[%c0_34, %48, %c2_35, %c0_36] : memref<1x18x18x8xbf16, #tpu.memory_space<vmem>>, vector<1x4x16x8xbf16>
    %50 = vector.shape_cast %49 : vector<1x4x16x8xbf16> to vector<4x16x8xbf16>
    %51 = vector.shape_cast %50 : vector<4x16x8xbf16> to vector<64x8xbf16>
    %c5 = arith.constant 5 : index
    %c0_37 = arith.constant 0 : index
    %c0_38 = arith.constant 0 : index
    %52 = vector.load %arg3[%c5, %c0_37, %c0_38] : memref<9x8x8xbf16, #tpu.memory_space<vmem>>, vector<1x8x8xbf16>
    %53 = vector.shape_cast %52 : vector<1x8x8xbf16> to vector<8x8xbf16>
    %cst_39 = arith.constant dense<0.000000e+00> : vector<64x8xf32>
    %54 = tpu.matmul %51, %53, %cst_39 {dimension_numbers = #tpu.dot_dimension_numbers<[1], [0], [0], [1], [0, 0, 1, 1], [], []>} : vector<64x8xbf16>, vector<8x8xbf16>, vector<64x8xf32> -> vector<64x8xf32>
    %55 = arith.addf %46, %54 : vector<64x8xf32>
    %c2_i32 = arith.constant 2 : i32
    %56 = arith.addi %0, %c2_i32 : i32
    %c0_40 = arith.constant 0 : index
    %57 = arith.index_cast %56 : i32 to index
    %c0_41 = arith.constant 0 : index
    %c0_42 = arith.constant 0 : index
    %58 = vector.load %arg2[%c0_40, %57, %c0_41, %c0_42] : memref<1x18x18x8xbf16, #tpu.memory_space<vmem>>, vector<1x4x16x8xbf16>
    %59 = vector.shape_cast %58 : vector<1x4x16x8xbf16> to vector<4x16x8xbf16>
    %60 = vector.shape_cast %59 : vector<4x16x8xbf16> to vector<64x8xbf16>
    %c6 = arith.constant 6 : index
    %c0_43 = arith.constant 0 : index
    %c0_44 = arith.constant 0 : index
    %61 = vector.load %arg3[%c6, %c0_43, %c0_44] : memref<9x8x8xbf16, #tpu.memory_space<vmem>>, vector<1x8x8xbf16>
    %62 = vector.shape_cast %61 : vector<1x8x8xbf16> to vector<8x8xbf16>
    %cst_45 = arith.constant dense<0.000000e+00> : vector<64x8xf32>
    %63 = tpu.matmul %60, %62, %cst_45 {dimension_numbers = #tpu.dot_dimension_numbers<[1], [0], [0], [1], [0, 0, 1, 1], [], []>} : vector<64x8xbf16>, vector<8x8xbf16>, vector<64x8xf32> -> vector<64x8xf32>
    %64 = arith.addf %55, %63 : vector<64x8xf32>
    %c2_i32_46 = arith.constant 2 : i32
    %65 = arith.addi %0, %c2_i32_46 : i32
    %c0_47 = arith.constant 0 : index
    %66 = arith.index_cast %65 : i32 to index
    %c1_48 = arith.constant 1 : index
    %c0_49 = arith.constant 0 : index
    %67 = vector.load %arg2[%c0_47, %66, %c1_48, %c0_49] : memref<1x18x18x8xbf16, #tpu.memory_space<vmem>>, vector<1x4x16x8xbf16>
    %68 = vector.shape_cast %67 : vector<1x4x16x8xbf16> to vector<4x16x8xbf16>
    %69 = vector.shape_cast %68 : vector<4x16x8xbf16> to vector<64x8xbf16>
    %c7 = arith.constant 7 : index
    %c0_50 = arith.constant 0 : index
    %c0_51 = arith.constant 0 : index
    %70 = vector.load %arg3[%c7, %c0_50, %c0_51] : memref<9x8x8xbf16, #tpu.memory_space<vmem>>, vector<1x8x8xbf16>
    %71 = vector.shape_cast %70 : vector<1x8x8xbf16> to vector<8x8xbf16>
    %cst_52 = arith.constant dense<0.000000e+00> : vector<64x8xf32>
    %72 = tpu.matmul %69, %71, %cst_52 {dimension_numbers = #tpu.dot_dimension_numbers<[1], [0], [0], [1], [0, 0, 1, 1], [], []>} : vector<64x8xbf16>, vector<8x8xbf16>, vector<64x8xf32> -> vector<64x8xf32>
    %73 = arith.addf %64, %72 : vector<64x8xf32>
    %c2_i32_53 = arith.constant 2 : i32
    %74 = arith.addi %0, %c2_i32_53 : i32
    %c0_54 = arith.constant 0 : index
    %75 = arith.index_cast %74 : i32 to index
    %c2_55 = arith.constant 2 : index
    %c0_56 = arith.constant 0 : index
    %76 = vector.load %arg2[%c0_54, %75, %c2_55, %c0_56] : memref<1x18x18x8xbf16, #tpu.memory_space<vmem>>, vector<1x4x16x8xbf16>
    %77 = vector.shape_cast %76 : vector<1x4x16x8xbf16> to vector<4x16x8xbf16>
    %78 = vector.shape_cast %77 : vector<4x16x8xbf16> to vector<64x8xbf16>
    %c8 = arith.constant 8 : index
    %c0_57 = arith.constant 0 : index
    %c0_58 = arith.constant 0 : index
    %79 = vector.load %arg3[%c8, %c0_57, %c0_58] : memref<9x8x8xbf16, #tpu.memory_space<vmem>>, vector<1x8x8xbf16>
    %80 = vector.shape_cast %79 : vector<1x8x8xbf16> to vector<8x8xbf16>
    %cst_59 = arith.constant dense<0.000000e+00> : vector<64x8xf32>
    %81 = tpu.matmul %78, %80, %cst_59 {dimension_numbers = #tpu.dot_dimension_numbers<[1], [0], [0], [1], [0, 0, 1, 1], [], []>} : vector<64x8xbf16>, vector<8x8xbf16>, vector<64x8xf32> -> vector<64x8xf32>
    %82 = arith.addf %73, %81 : vector<64x8xf32>
    %c0_60 = arith.constant 0 : index
    %c0_61 = arith.constant 0 : index
    %83 = vector.load %arg4[%c0_60, %c0_61] : memref<1x8xf32, #tpu.memory_space<vmem>>, vector<1x8xf32>
    %84 = vector.broadcast %83 : vector<1x8xf32> to vector<64x8xf32>
    %85 = arith.mulf %82, %84 : vector<64x8xf32>
    %c0_62 = arith.constant 0 : index
    %c0_63 = arith.constant 0 : index
    %86 = vector.load %arg5[%c0_62, %c0_63] : memref<1x8xf32, #tpu.memory_space<vmem>>, vector<1x8xf32>
    %87 = vector.broadcast %86 : vector<1x8xf32> to vector<64x8xf32>
    %88 = arith.addf %85, %87 : vector<64x8xf32>
    %cst_64 = arith.constant 0.000000e+00 : f32
    %89 = vector.broadcast %cst_64 : f32 to vector<64x8xf32>
    %90 = arith.maximumf %88, %89 : vector<64x8xf32>
    %91 = arith.truncf %90 : vector<64x8xf32> to vector<64x8xbf16>
    %c0_65 = arith.constant 0 : index
    %c0_66 = arith.constant 0 : index
    %92 = vector.load %arg6[%c0_65, %c0_66] : memref<8x32xbf16, #tpu.memory_space<vmem>>, vector<8x32xbf16>
    %cst_67 = arith.constant dense<0.000000e+00> : vector<64x32xf32>
    %93 = tpu.matmul %91, %92, %cst_67 {dimension_numbers = #tpu.dot_dimension_numbers<[1], [0], [0], [1], [0, 0, 1, 1], [], []>} : vector<64x8xbf16>, vector<8x32xbf16>, vector<64x32xf32> -> vector<64x32xf32>
    %94 = vector.shape_cast %93 : vector<64x32xf32> to vector<4x16x32xf32>
    %c0_68 = arith.constant 0 : index
    %c0_69 = arith.constant 0 : index
    %c0_70 = arith.constant 0 : index
    %c0_71 = arith.constant 0 : index
    %95 = vector.load %arg7[%c0_68, %c0_69, %c0_70, %c0_71] : memref<1x4x16x32xf32, #tpu.memory_space<vmem>>, vector<1x4x16x32xf32>
    %96 = vector.shape_cast %95 : vector<1x4x16x32xf32> to vector<4x16x32xf32>
    %97 = vector.shape_cast %94 : vector<4x16x32xf32> to vector<1x4x16x32xf32>
    tpu.vector_store %arg7[%c0_68, %c0_69, %c0_70, %c0_71], %97 {strides = array<i32>} : memref<1x4x16x32xf32, #tpu.memory_space<vmem>>, vector<1x4x16x32xf32>,
    %cst_72 = arith.constant dense<0.000000e+00> : vector<16x32xf32>
    %98 = vector.multi_reduction <add>, %94, %cst_72 [0] : vector<4x16x32xf32> to vector<16x32xf32>
    %99 = vector.extract_strided_slice %98 {offsets = [0, 0], sizes = [4, 32], strides = [1, 1]} : vector<16x32xf32> to vector<4x32xf32>
    %cst_73 = arith.constant dense<0.000000e+00> : vector<32xf32>
    %100 = vector.multi_reduction <add>, %99, %cst_73 [0] : vector<4x32xf32> to vector<32xf32>
    %101 = vector.shape_cast %100 : vector<32xf32> to vector<1x32xf32>
    %cst_74 = arith.constant 6.250000e-02 : f32
    %102 = vector.broadcast %cst_74 : f32 to vector<1x32xf32>
    %103 = arith.mulf %101, %102 : vector<1x32xf32>
    %104 = vector.extract_strided_slice %98 {offsets = [4, 0], sizes = [4, 32], strides = [1, 1]} : vector<16x32xf32> to vector<4x32xf32>
    %cst_75 = arith.constant dense<0.000000e+00> : vector<32xf32>
    %105 = vector.multi_reduction <add>, %104, %cst_75 [0] : vector<4x32xf32> to vector<32xf32>
    %106 = vector.shape_cast %105 : vector<32xf32> to vector<1x32xf32>
    %cst_76 = arith.constant 6.250000e-02 : f32
    %107 = vector.broadcast %cst_76 : f32 to vector<1x32xf32>
    %108 = arith.mulf %106, %107 : vector<1x32xf32>
    %109 = vector.extract_strided_slice %98 {offsets = [8, 0], sizes = [4, 32], strides = [1, 1]} : vector<16x32xf32> to vector<4x32xf32>
    %cst_77 = arith.constant dense<0.000000e+00> : vector<32xf32>
    %110 = vector.multi_reduction <add>, %109, %cst_77 [0] : vector<4x32xf32> to vector<32xf32>
    %111 = vector.shape_cast %110 : vector<32xf32> to vector<1x32xf32>
    %cst_78 = arith.constant 6.250000e-02 : f32
    %112 = vector.broadcast %cst_78 : f32 to vector<1x32xf32>
    %113 = arith.mulf %111, %112 : vector<1x32xf32>
    %114 = vector.extract_strided_slice %98 {offsets = [12, 0], sizes = [4, 32], strides = [1, 1]} : vector<16x32xf32> to vector<4x32xf32>
    %cst_79 = arith.constant dense<0.000000e+00> : vector<32xf32>
    %115 = vector.multi_reduction <add>, %114, %cst_79 [0] : vector<4x32xf32> to vector<32xf32>
    %116 = vector.shape_cast %115 : vector<32xf32> to vector<1x32xf32>
    %cst_80 = arith.constant 6.250000e-02 : f32
    %117 = vector.broadcast %cst_80 : f32 to vector<1x32xf32>
    %118 = arith.mulf %116, %117 : vector<1x32xf32>
    %119 = tpu.concatenate %103, %108, %113, %118 in 0 : vector<1x32xf32>, vector<1x32xf32>, vector<1x32xf32>, vector<1x32xf32> -> vector<4x32xf32>
    %c0_81 = arith.constant 0 : index
    %c0_82 = arith.constant 0 : index
    %c0_83 = arith.constant 0 : index
    %c0_84 = arith.constant 0 : index
    %120 = vector.load %arg8[%c0_81, %c0_82, %c0_83, %c0_84] : memref<1x1x4x32xf32, #tpu.memory_space<vmem>>, vector<1x1x4x32xf32>
    %121 = vector.shape_cast %120 : vector<1x1x4x32xf32> to vector<4x32xf32>
    %122 = vector.shape_cast %119 : vector<4x32xf32> to vector<1x1x4x32xf32>
    tpu.vector_store %arg8[%c0_81, %c0_82, %c0_83, %c0_84], %122 {strides = array<i32>} : memref<1x1x4x32xf32, #tpu.memory_space<vmem>>, vector<1x1x4x32xf32>,
    return
  }
  func.func @transform_0(%arg0: i32, %arg1: i32) -> (i32, i32, i32, i32) {
    %c0_i32 = arith.constant 0 : i32
    %c0_i32_0 = arith.constant 0 : i32
    %c0_i32_1 = arith.constant 0 : i32
    %c0_i32_2 = arith.constant 0 : i32
    return %arg0, %c0_i32, %c0_i32_0, %c0_i32_1 : i32, i32, i32, i32
  }
  func.func @transform_1(%arg0: i32, %arg1: i32) -> (i32, i32, i32) {
    %c0_i32 = arith.constant 0 : i32
    %c0_i32_0 = arith.constant 0 : i32
    %c0_i32_1 = arith.constant 0 : i32
    %c0_i32_2 = arith.constant 0 : i32
    return %c0_i32, %c0_i32_0, %c0_i32_1 : i32, i32, i32
  }
  func.func @transform_2(%arg0: i32, %arg1: i32) -> (i32, i32) {
    %c0_i32 = arith.constant 0 : i32
    %c0_i32_0 = arith.constant 0 : i32
    %c0_i32_1 = arith.constant 0 : i32
    return %c0_i32, %c0_i32_0 : i32, i32
  }
  func.func @transform_3(%arg0: i32, %arg1: i32) -> (i32, i32) {
    %c0_i32 = arith.constant 0 : i32
    %c0_i32_0 = arith.constant 0 : i32
    %c0_i32_1 = arith.constant 0 : i32
    return %c0_i32, %c0_i32_0 : i32, i32
  }
  func.func @transform_4(%arg0: i32, %arg1: i32) -> (i32, i32) {
    %c0_i32 = arith.constant 0 : i32
    %c0_i32_0 = arith.constant 0 : i32
    %c0_i32_1 = arith.constant 0 : i32
    return %c0_i32, %c0_i32_0 : i32, i32
  }
  func.func @transform_5(%arg0: i32, %arg1: i32) -> (i32, i32, i32, i32) {
    %c0_i32 = arith.constant 0 : i32
    %c0_i32_0 = arith.constant 0 : i32
    %c0_i32_1 = arith.constant 0 : i32
    return %arg0, %arg1, %c0_i32, %c0_i32_0 : i32, i32, i32, i32
  }
  func.func @transform_6(%arg0: i32, %arg1: i32) -> (i32, i32, i32, i32) {
    %c0_i32 = arith.constant 0 : i32
    %c0_i32_0 = arith.constant 0 : i32
    %c0_i32_1 = arith.constant 0 : i32
    return %arg0, %arg1, %c0_i32, %c0_i32_0 : i32, i32, i32, i32
  }
}

module attributes {stable_mosaic.version = 11 : i64} {
  func.func @_kernel_gate(%arg0: i32, %arg1: i32, %arg2: memref<1x4x16x32xf32, #tpu.memory_space<vmem>>, %arg3: memref<1x4x16x32xf32, #tpu.memory_space<vmem>>, %arg4: memref<1x1x1x32xf32, #tpu.memory_space<vmem>>, %arg5: memref<1x4x16x32xf32, #tpu.memory_space<vmem>>) attributes {dimension_semantics = [#tpu.dimension_semantics<parallel>, #tpu.dimension_semantics<parallel>], iteration_bounds = array<i64: 2, 4>, scalar_prefetch = 0 : i64, scratch_operands = 0 : i64, tpu.core_type = #tpu.core_type<tc>, window_params = [{transform_indices = @transform_0, window_bounds = array<i64: 1, 4, 16, 32>}, {transform_indices = @transform_1, window_bounds = array<i64: 1, 4, 16, 32>}, {transform_indices = @transform_2, window_bounds = array<i64: 1, 1, 1, 32>}, {transform_indices = @transform_3, window_bounds = array<i64: 1, 4, 16, 32>}]} {
    %c0 = arith.constant 0 : index
    %c0_0 = arith.constant 0 : index
    %c0_1 = arith.constant 0 : index
    %c0_2 = arith.constant 0 : index
    %0 = vector.load %arg2[%c0, %c0_0, %c0_1, %c0_2] : memref<1x4x16x32xf32, #tpu.memory_space<vmem>>, vector<1x4x16x32xf32>
    %1 = vector.shape_cast %0 : vector<1x4x16x32xf32> to vector<4x16x32xf32>
    %c0_3 = arith.constant 0 : index
    %c0_4 = arith.constant 0 : index
    %c0_5 = arith.constant 0 : index
    %c0_6 = arith.constant 0 : index
    %2 = vector.load %arg4[%c0_3, %c0_4, %c0_5, %c0_6] : memref<1x1x1x32xf32, #tpu.memory_space<vmem>>, vector<1x1x1x32xf32>
    %3 = vector.shape_cast %2 : vector<1x1x1x32xf32> to vector<1x1x32xf32>
    %4 = vector.broadcast %3 : vector<1x1x32xf32> to vector<4x16x32xf32>
    %5 = arith.mulf %1, %4 : vector<4x16x32xf32>
    %c0_7 = arith.constant 0 : index
    %c0_8 = arith.constant 0 : index
    %c0_9 = arith.constant 0 : index
    %c0_10 = arith.constant 0 : index
    %6 = vector.load %arg3[%c0_7, %c0_8, %c0_9, %c0_10] : memref<1x4x16x32xf32, #tpu.memory_space<vmem>>, vector<1x4x16x32xf32>
    %7 = vector.shape_cast %6 : vector<1x4x16x32xf32> to vector<4x16x32xf32>
    %8 = arith.addf %5, %7 : vector<4x16x32xf32>
    %c0_11 = arith.constant 0 : index
    %c0_12 = arith.constant 0 : index
    %c0_13 = arith.constant 0 : index
    %c0_14 = arith.constant 0 : index
    %9 = vector.load %arg5[%c0_11, %c0_12, %c0_13, %c0_14] : memref<1x4x16x32xf32, #tpu.memory_space<vmem>>, vector<1x4x16x32xf32>
    %10 = vector.shape_cast %9 : vector<1x4x16x32xf32> to vector<4x16x32xf32>
    %11 = vector.shape_cast %8 : vector<4x16x32xf32> to vector<1x4x16x32xf32>
    tpu.vector_store %arg5[%c0_11, %c0_12, %c0_13, %c0_14], %11 {strides = array<i32>} : memref<1x4x16x32xf32, #tpu.memory_space<vmem>>, vector<1x4x16x32xf32>,
    return
  }
  func.func @transform_0(%arg0: i32, %arg1: i32) -> (i32, i32, i32, i32) {
    %c0_i32 = arith.constant 0 : i32
    %c0_i32_0 = arith.constant 0 : i32
    %c0_i32_1 = arith.constant 0 : i32
    return %arg0, %arg1, %c0_i32, %c0_i32_0 : i32, i32, i32, i32
  }
  func.func @transform_1(%arg0: i32, %arg1: i32) -> (i32, i32, i32, i32) {
    %c0_i32 = arith.constant 0 : i32
    %c0_i32_0 = arith.constant 0 : i32
    %c0_i32_1 = arith.constant 0 : i32
    return %arg0, %arg1, %c0_i32, %c0_i32_0 : i32, i32, i32, i32
  }
  func.func @transform_2(%arg0: i32, %arg1: i32) -> (i32, i32, i32, i32) {
    %c0_i32 = arith.constant 0 : i32
    %c0_i32_0 = arith.constant 0 : i32
    %c0_i32_1 = arith.constant 0 : i32
    %c0_i32_2 = arith.constant 0 : i32
    return %arg0, %c0_i32, %c0_i32_0, %c0_i32_1 : i32, i32, i32, i32
  }
  func.func @transform_3(%arg0: i32, %arg1: i32) -> (i32, i32, i32, i32) {
    %c0_i32 = arith.constant 0 : i32
    %c0_i32_0 = arith.constant 0 : i32
    %c0_i32_1 = arith.constant 0 : i32
    return %arg0, %arg1, %c0_i32, %c0_i32_0 : i32, i32, i32, i32
  }
}

module attributes {stable_mosaic.version = 11 : i64} {
  func.func @_kernel_se_head(%arg0: memref<2x4x4x32xf32, #tpu.memory_space<vmem>>, %arg1: memref<2x32xf32, #tpu.memory_space<vmem>>, %arg2: memref<32x2xbf16, #tpu.memory_space<vmem>>, %arg3: memref<2x32xbf16, #tpu.memory_space<vmem>>, %arg4: memref<27xf32, #tpu.memory_space<smem>>, %arg5: memref<9xf32, #tpu.memory_space<smem>>, %arg6: memref<2x32xf32, #tpu.memory_space<vmem>>, %arg7: memref<2x32xf32, #tpu.memory_space<vmem>>) attributes {dimension_semantics = [], scalar_prefetch = 0 : i64, scratch_operands = 0 : i64, tpu.core_type = #tpu.core_type<tc>} {
    %c0 = arith.constant 0 : index
    %c0_0 = arith.constant 0 : index
    %c0_1 = arith.constant 0 : index
    %c0_2 = arith.constant 0 : index
    %0 = vector.load %arg0[%c0, %c0_0, %c0_1, %c0_2] : memref<2x4x4x32xf32, #tpu.memory_space<vmem>>, vector<2x4x4x32xf32>
    %1 = vector.extract_strided_slice %0 {offsets = [0, 0, 0, 0], sizes = [2, 1, 1, 32], strides = [1, 1, 1, 1]} : vector<2x4x4x32xf32> to vector<2x1x1x32xf32>
    %2 = vector.shape_cast %1 : vector<2x1x1x32xf32> to vector<2x32xf32>
    %3 = vector.extract_strided_slice %0 {offsets = [0, 0, 1, 0], sizes = [2, 1, 1, 32], strides = [1, 1, 1, 1]} : vector<2x4x4x32xf32> to vector<2x1x1x32xf32>
    %4 = vector.shape_cast %3 : vector<2x1x1x32xf32> to vector<2x32xf32>
    %5 = vector.extract_strided_slice %0 {offsets = [0, 0, 2, 0], sizes = [2, 1, 1, 32], strides = [1, 1, 1, 1]} : vector<2x4x4x32xf32> to vector<2x1x1x32xf32>
    %6 = vector.shape_cast %5 : vector<2x1x1x32xf32> to vector<2x32xf32>
    %7 = vector.extract_strided_slice %0 {offsets = [0, 0, 3, 0], sizes = [2, 1, 1, 32], strides = [1, 1, 1, 1]} : vector<2x4x4x32xf32> to vector<2x1x1x32xf32>
    %8 = vector.shape_cast %7 : vector<2x1x1x32xf32> to vector<2x32xf32>
    %9 = vector.extract_strided_slice %0 {offsets = [0, 1, 0, 0], sizes = [2, 1, 1, 32], strides = [1, 1, 1, 1]} : vector<2x4x4x32xf32> to vector<2x1x1x32xf32>
    %10 = vector.shape_cast %9 : vector<2x1x1x32xf32> to vector<2x32xf32>
    %11 = vector.extract_strided_slice %0 {offsets = [0, 1, 1, 0], sizes = [2, 1, 1, 32], strides = [1, 1, 1, 1]} : vector<2x4x4x32xf32> to vector<2x1x1x32xf32>
    %12 = vector.shape_cast %11 : vector<2x1x1x32xf32> to vector<2x32xf32>
    %13 = vector.extract_strided_slice %0 {offsets = [0, 1, 2, 0], sizes = [2, 1, 1, 32], strides = [1, 1, 1, 1]} : vector<2x4x4x32xf32> to vector<2x1x1x32xf32>
    %14 = vector.shape_cast %13 : vector<2x1x1x32xf32> to vector<2x32xf32>
    %15 = vector.extract_strided_slice %0 {offsets = [0, 1, 3, 0], sizes = [2, 1, 1, 32], strides = [1, 1, 1, 1]} : vector<2x4x4x32xf32> to vector<2x1x1x32xf32>
    %16 = vector.shape_cast %15 : vector<2x1x1x32xf32> to vector<2x32xf32>
    %17 = vector.extract_strided_slice %0 {offsets = [0, 2, 0, 0], sizes = [2, 1, 1, 32], strides = [1, 1, 1, 1]} : vector<2x4x4x32xf32> to vector<2x1x1x32xf32>
    %18 = vector.shape_cast %17 : vector<2x1x1x32xf32> to vector<2x32xf32>
    %19 = vector.extract_strided_slice %0 {offsets = [0, 2, 1, 0], sizes = [2, 1, 1, 32], strides = [1, 1, 1, 1]} : vector<2x4x4x32xf32> to vector<2x1x1x32xf32>
    %20 = vector.shape_cast %19 : vector<2x1x1x32xf32> to vector<2x32xf32>
    %21 = vector.extract_strided_slice %0 {offsets = [0, 2, 2, 0], sizes = [2, 1, 1, 32], strides = [1, 1, 1, 1]} : vector<2x4x4x32xf32> to vector<2x1x1x32xf32>
    %22 = vector.shape_cast %21 : vector<2x1x1x32xf32> to vector<2x32xf32>
    %23 = vector.extract_strided_slice %0 {offsets = [0, 2, 3, 0], sizes = [2, 1, 1, 32], strides = [1, 1, 1, 1]} : vector<2x4x4x32xf32> to vector<2x1x1x32xf32>
    %24 = vector.shape_cast %23 : vector<2x1x1x32xf32> to vector<2x32xf32>
    %25 = vector.extract_strided_slice %0 {offsets = [0, 3, 0, 0], sizes = [2, 1, 1, 32], strides = [1, 1, 1, 1]} : vector<2x4x4x32xf32> to vector<2x1x1x32xf32>
    %26 = vector.shape_cast %25 : vector<2x1x1x32xf32> to vector<2x32xf32>
    %27 = vector.extract_strided_slice %0 {offsets = [0, 3, 1, 0], sizes = [2, 1, 1, 32], strides = [1, 1, 1, 1]} : vector<2x4x4x32xf32> to vector<2x1x1x32xf32>
    %28 = vector.shape_cast %27 : vector<2x1x1x32xf32> to vector<2x32xf32>
    %29 = vector.extract_strided_slice %0 {offsets = [0, 3, 2, 0], sizes = [2, 1, 1, 32], strides = [1, 1, 1, 1]} : vector<2x4x4x32xf32> to vector<2x1x1x32xf32>
    %30 = vector.shape_cast %29 : vector<2x1x1x32xf32> to vector<2x32xf32>
    %31 = vector.extract_strided_slice %0 {offsets = [0, 3, 3, 0], sizes = [2, 1, 1, 32], strides = [1, 1, 1, 1]} : vector<2x4x4x32xf32> to vector<2x1x1x32xf32>
    %32 = vector.shape_cast %31 : vector<2x1x1x32xf32> to vector<2x32xf32>
    %c0_3 = arith.constant 0 : index
    %c0_4 = arith.constant 0 : index
    %33 = vector.load %arg2[%c0_3, %c0_4] : memref<32x2xbf16, #tpu.memory_space<vmem>>, vector<32x2xbf16>
    %c0_5 = arith.constant 0 : index
    %c0_6 = arith.constant 0 : index
    %34 = vector.load %arg3[%c0_5, %c0_6] : memref<2x32xbf16, #tpu.memory_space<vmem>>, vector<2x32xbf16>
    %c0_7 = arith.constant 0 : index
    %c0_8 = arith.constant 0 : index
    %35 = vector.load %arg1[%c0_7, %c0_8] : memref<2x32xf32, #tpu.memory_space<vmem>>, vector<2x32xf32>
    %36 = arith.addf %2, %4 : vector<2x32xf32>
    %37 = arith.addf %36, %10 : vector<2x32xf32>
    %38 = arith.addf %37, %12 : vector<2x32xf32>
    %cst = arith.constant 2.500000e-01 : f32
    %39 = vector.broadcast %cst : f32 to vector<2x32xf32>
    %40 = arith.mulf %38, %39 : vector<2x32xf32>
    %41 = arith.addf %6, %8 : vector<2x32xf32>
    %42 = arith.addf %41, %14 : vector<2x32xf32>
    %43 = arith.addf %42, %16 : vector<2x32xf32>
    %cst_9 = arith.constant 2.500000e-01 : f32
    %44 = vector.broadcast %cst_9 : f32 to vector<2x32xf32>
    %45 = arith.mulf %43, %44 : vector<2x32xf32>
    %46 = arith.addf %18, %20 : vector<2x32xf32>
    %47 = arith.addf %46, %26 : vector<2x32xf32>
    %48 = arith.addf %47, %28 : vector<2x32xf32>
    %cst_10 = arith.constant 2.500000e-01 : f32
    %49 = vector.broadcast %cst_10 : f32 to vector<2x32xf32>
    %50 = arith.mulf %48, %49 : vector<2x32xf32>
    %51 = arith.addf %22, %24 : vector<2x32xf32>
    %52 = arith.addf %51, %30 : vector<2x32xf32>
    %53 = arith.addf %52, %32 : vector<2x32xf32>
    %cst_11 = arith.constant 2.500000e-01 : f32
    %54 = vector.broadcast %cst_11 : f32 to vector<2x32xf32>
    %55 = arith.mulf %53, %54 : vector<2x32xf32>
    %cst_12 = arith.constant 0.000000e+00 : f32
    %56 = vector.broadcast %cst_12 : f32 to vector<2x32xf32>
    %57 = arith.addf %56, %2 : vector<2x32xf32>
    %58 = arith.addf %57, %4 : vector<2x32xf32>
    %59 = arith.addf %58, %6 : vector<2x32xf32>
    %60 = arith.addf %59, %8 : vector<2x32xf32>
    %61 = arith.addf %60, %10 : vector<2x32xf32>
    %62 = arith.addf %61, %12 : vector<2x32xf32>
    %63 = arith.addf %62, %14 : vector<2x32xf32>
    %64 = arith.addf %63, %16 : vector<2x32xf32>
    %65 = arith.addf %64, %18 : vector<2x32xf32>
    %66 = arith.addf %65, %20 : vector<2x32xf32>
    %67 = arith.addf %66, %22 : vector<2x32xf32>
    %68 = arith.addf %67, %24 : vector<2x32xf32>
    %69 = arith.addf %68, %26 : vector<2x32xf32>
    %70 = arith.addf %69, %28 : vector<2x32xf32>
    %71 = arith.addf %70, %30 : vector<2x32xf32>
    %72 = arith.addf %71, %32 : vector<2x32xf32>
    %cst_13 = arith.constant 6.250000e-02 : f32
    %73 = vector.broadcast %cst_13 : f32 to vector<2x32xf32>
    %74 = arith.mulf %72, %73 : vector<2x32xf32>
    %cst_14 = arith.constant 0.000000e+00 : f32
    %75 = vector.broadcast %cst_14 : f32 to vector<2x32xf32>
    %c0_15 = arith.constant 0 : index
    %76 = memref.load %arg4[%c0_15] : memref<27xf32, #tpu.memory_space<smem>>
    %77 = vector.broadcast %76 : f32 to vector<2x32xf32>
    %78 = arith.mulf %77, %74 : vector<2x32xf32>
    %79 = arith.addf %75, %78 : vector<2x32xf32>
    %c9 = arith.constant 9 : index
    %80 = memref.load %arg4[%c9] : memref<27xf32, #tpu.memory_space<smem>>
    %81 = vector.broadcast %80 : f32 to vector<2x32xf32>
    %82 = arith.mulf %81, %40 : vector<2x32xf32>
    %83 = arith.addf %79, %82 : vector<2x32xf32>
    %c18 = arith.constant 18 : index
    %84 = memref.load %arg4[%c18] : memref<27xf32, #tpu.memory_space<smem>>
    %85 = vector.broadcast %84 : f32 to vector<2x32xf32>
    %86 = arith.mulf %85, %2 : vector<2x32xf32>
    %87 = arith.addf %83, %86 : vector<2x32xf32>
    %c1 = arith.constant 1 : index
    %88 = memref.load %arg4[%c1] : memref<27xf32, #tpu.memory_space<smem>>
    %89 = vector.broadcast %88 : f32 to vector<2x32xf32>
    %90 = arith.mulf %89, %74 : vector<2x32xf32>
    %91 = arith.addf %87, %90 : vector<2x32xf32>
    %c10 = arith.constant 10 : index
    %92 = memref.load %arg4[%c10] : memref<27xf32, #tpu.memory_space<smem>>
    %93 = vector.broadcast %92 : f32 to vector<2x32xf32>
    %94 = arith.mulf %93, %40 : vector<2x32xf32>
    %95 = arith.addf %91, %94 : vector<2x32xf32>
    %c19 = arith.constant 19 : index
    %96 = memref.load %arg4[%c19] : memref<27xf32, #tpu.memory_space<smem>>
    %97 = vector.broadcast %96 : f32 to vector<2x32xf32>
    %98 = arith.mulf %97, %4 : vector<2x32xf32>
    %99 = arith.addf %95, %98 : vector<2x32xf32>
    %c2 = arith.constant 2 : index
    %100 = memref.load %arg4[%c2] : memref<27xf32, #tpu.memory_space<smem>>
    %101 = vector.broadcast %100 : f32 to vector<2x32xf32>
    %102 = arith.mulf %101, %74 : vector<2x32xf32>
    %103 = arith.addf %99, %102 : vector<2x32xf32>
    %c11 = arith.constant 11 : index
    %104 = memref.load %arg4[%c11] : memref<27xf32, #tpu.memory_space<smem>>
    %105 = vector.broadcast %104 : f32 to vector<2x32xf32>
    %106 = arith.mulf %105, %45 : vector<2x32xf32>
    %107 = arith.addf %103, %106 : vector<2x32xf32>
    %c20 = arith.constant 20 : index
    %108 = memref.load %arg4[%c20] : memref<27xf32, #tpu.memory_space<smem>>
    %109 = vector.broadcast %108 : f32 to vector<2x32xf32>
    %110 = arith.mulf %109, %6 : vector<2x32xf32>
    %111 = arith.addf %107, %110 : vector<2x32xf32>
    %c3 = arith.constant 3 : index
    %112 = memref.load %arg4[%c3] : memref<27xf32, #tpu.memory_space<smem>>
    %113 = vector.broadcast %112 : f32 to vector<2x32xf32>
    %114 = arith.mulf %113, %74 : vector<2x32xf32>
    %115 = arith.addf %111, %114 : vector<2x32xf32>
    %c12 = arith.constant 12 : index
    %116 = memref.load %arg4[%c12] : memref<27xf32, #tpu.memory_space<smem>>
    %117 = vector.broadcast %116 : f32 to vector<2x32xf32>
    %118 = arith.mulf %117, %40 : vector<2x32xf32>
    %119 = arith.addf %115, %118 : vector<2x32xf32>
    %c21 = arith.constant 21 : index
    %120 = memref.load %arg4[%c21] : memref<27xf32, #tpu.memory_space<smem>>
    %121 = vector.broadcast %120 : f32 to vector<2x32xf32>
    %122 = arith.mulf %121, %10 : vector<2x32xf32>
    %123 = arith.addf %119, %122 : vector<2x32xf32>
    %c4 = arith.constant 4 : index
    %124 = memref.load %arg4[%c4] : memref<27xf32, #tpu.memory_space<smem>>
    %125 = vector.broadcast %124 : f32 to vector<2x32xf32>
    %126 = arith.mulf %125, %74 : vector<2x32xf32>
    %127 = arith.addf %123, %126 : vector<2x32xf32>
    %c13 = arith.constant 13 : index
    %128 = memref.load %arg4[%c13] : memref<27xf32, #tpu.memory_space<smem>>
    %129 = vector.broadcast %128 : f32 to vector<2x32xf32>
    %130 = arith.mulf %129, %40 : vector<2x32xf32>
    %131 = arith.addf %127, %130 : vector<2x32xf32>
    %c22 = arith.constant 22 : index
    %132 = memref.load %arg4[%c22] : memref<27xf32, #tpu.memory_space<smem>>
    %133 = vector.broadcast %132 : f32 to vector<2x32xf32>
    %134 = arith.mulf %133, %12 : vector<2x32xf32>
    %135 = arith.addf %131, %134 : vector<2x32xf32>
    %c5 = arith.constant 5 : index
    %136 = memref.load %arg4[%c5] : memref<27xf32, #tpu.memory_space<smem>>
    %137 = vector.broadcast %136 : f32 to vector<2x32xf32>
    %138 = arith.mulf %137, %74 : vector<2x32xf32>
    %139 = arith.addf %135, %138 : vector<2x32xf32>
    %c14 = arith.constant 14 : index
    %140 = memref.load %arg4[%c14] : memref<27xf32, #tpu.memory_space<smem>>
    %141 = vector.broadcast %140 : f32 to vector<2x32xf32>
    %142 = arith.mulf %141, %45 : vector<2x32xf32>
    %143 = arith.addf %139, %142 : vector<2x32xf32>
    %c23 = arith.constant 23 : index
    %144 = memref.load %arg4[%c23] : memref<27xf32, #tpu.memory_space<smem>>
    %145 = vector.broadcast %144 : f32 to vector<2x32xf32>
    %146 = arith.mulf %145, %14 : vector<2x32xf32>
    %147 = arith.addf %143, %146 : vector<2x32xf32>
    %c6 = arith.constant 6 : index
    %148 = memref.load %arg4[%c6] : memref<27xf32, #tpu.memory_space<smem>>
    %149 = vector.broadcast %148 : f32 to vector<2x32xf32>
    %150 = arith.mulf %149, %74 : vector<2x32xf32>
    %151 = arith.addf %147, %150 : vector<2x32xf32>
    %c15 = arith.constant 15 : index
    %152 = memref.load %arg4[%c15] : memref<27xf32, #tpu.memory_space<smem>>
    %153 = vector.broadcast %152 : f32 to vector<2x32xf32>
    %154 = arith.mulf %153, %50 : vector<2x32xf32>
    %155 = arith.addf %151, %154 : vector<2x32xf32>
    %c24 = arith.constant 24 : index
    %156 = memref.load %arg4[%c24] : memref<27xf32, #tpu.memory_space<smem>>
    %157 = vector.broadcast %156 : f32 to vector<2x32xf32>
    %158 = arith.mulf %157, %18 : vector<2x32xf32>
    %159 = arith.addf %155, %158 : vector<2x32xf32>
    %c7 = arith.constant 7 : index
    %160 = memref.load %arg4[%c7] : memref<27xf32, #tpu.memory_space<smem>>
    %161 = vector.broadcast %160 : f32 to vector<2x32xf32>
    %162 = arith.mulf %161, %74 : vector<2x32xf32>
    %163 = arith.addf %159, %162 : vector<2x32xf32>
    %c16 = arith.constant 16 : index
    %164 = memref.load %arg4[%c16] : memref<27xf32, #tpu.memory_space<smem>>
    %165 = vector.broadcast %164 : f32 to vector<2x32xf32>
    %166 = arith.mulf %165, %50 : vector<2x32xf32>
    %167 = arith.addf %163, %166 : vector<2x32xf32>
    %c25 = arith.constant 25 : index
    %168 = memref.load %arg4[%c25] : memref<27xf32, #tpu.memory_space<smem>>
    %169 = vector.broadcast %168 : f32 to vector<2x32xf32>
    %170 = arith.mulf %169, %20 : vector<2x32xf32>
    %171 = arith.addf %167, %170 : vector<2x32xf32>
    %c8 = arith.constant 8 : index
    %172 = memref.load %arg4[%c8] : memref<27xf32, #tpu.memory_space<smem>>
    %173 = vector.broadcast %172 : f32 to vector<2x32xf32>
    %174 = arith.mulf %173, %74 : vector<2x32xf32>
    %175 = arith.addf %171, %174 : vector<2x32xf32>
    %c17 = arith.constant 17 : index
    %176 = memref.load %arg4[%c17] : memref<27xf32, #tpu.memory_space<smem>>
    %177 = vector.broadcast %176 : f32 to vector<2x32xf32>
    %178 = arith.mulf %177, %55 : vector<2x32xf32>
    %179 = arith.addf %175, %178 : vector<2x32xf32>
    %c26 = arith.constant 26 : index
    %180 = memref.load %arg4[%c26] : memref<27xf32, #tpu.memory_space<smem>>
    %181 = vector.broadcast %180 : f32 to vector<2x32xf32>
    %182 = arith.mulf %181, %22 : vector<2x32xf32>
    %183 = arith.addf %179, %182 : vector<2x32xf32>
    %cst_16 = arith.constant 0.000000e+00 : f32
    %184 = vector.broadcast %cst_16 : f32 to vector<2x32xf32>
    %c0_17 = arith.constant 0 : index
    %185 = memref.load %arg4[%c0_17] : memref<27xf32, #tpu.memory_space<smem>>
    %186 = vector.broadcast %185 : f32 to vector<2x32xf32>
    %187 = arith.mulf %186, %74 : vector<2x32xf32>
    %188 = arith.addf %184, %187 : vector<2x32xf32>
    %c9_18 = arith.constant 9 : index
    %189 = memref.load %arg4[%c9_18] : memref<27xf32, #tpu.memory_space<smem>>
    %190 = vector.broadcast %189 : f32 to vector<2x32xf32>
    %191 = arith.mulf %190, %40 : vector<2x32xf32>
    %192 = arith.addf %188, %191 : vector<2x32xf32>
    %c18_19 = arith.constant 18 : index
    %193 = memref.load %arg4[%c18_19] : memref<27xf32, #tpu.memory_space<smem>>
    %194 = vector.broadcast %193 : f32 to vector<2x32xf32>
    %195 = arith.mulf %194, %4 : vector<2x32xf32>
    %196 = arith.addf %192, %195 : vector<2x32xf32>
    %c1_20 = arith.constant 1 : index
    %197 = memref.load %arg4[%c1_20] : memref<27xf32, #tpu.memory_space<smem>>
    %198 = vector.broadcast %197 : f32 to vector<2x32xf32>
    %199 = arith.mulf %198, %74 : vector<2x32xf32>
    %200 = arith.addf %196, %199 : vector<2x32xf32>
    %c10_21 = arith.constant 10 : index
    %201 = memref.load %arg4[%c10_21] : memref<27xf32, #tpu.memory_space<smem>>
    %202 = vector.broadcast %201 : f32 to vector<2x32xf32>
    %203 = arith.mulf %202, %45 : vector<2x32xf32>
    %204 = arith.addf %200, %203 : vector<2x32xf32>
    %c19_22 = arith.constant 19 : index
    %205 = memref.load %arg4[%c19_22] : memref<27xf32, #tpu.memory_space<smem>>
    %206 = vector.broadcast %205 : f32 to vector<2x32xf32>
    %207 = arith.mulf %206, %6 : vector<2x32xf32>
    %208 = arith.addf %204, %207 : vector<2x32xf32>
    %c2_23 = arith.constant 2 : index
    %209 = memref.load %arg4[%c2_23] : memref<27xf32, #tpu.memory_space<smem>>
    %210 = vector.broadcast %209 : f32 to vector<2x32xf32>
    %211 = arith.mulf %210, %74 : vector<2x32xf32>
    %212 = arith.addf %208, %211 : vector<2x32xf32>
    %c11_24 = arith.constant 11 : index
    %213 = memref.load %arg4[%c11_24] : memref<27xf32, #tpu.memory_space<smem>>
    %214 = vector.broadcast %213 : f32 to vector<2x32xf32>
    %215 = arith.mulf %214, %45 : vector<2x32xf32>
    %216 = arith.addf %212, %215 : vector<2x32xf32>
    %c20_25 = arith.constant 20 : index
    %217 = memref.load %arg4[%c20_25] : memref<27xf32, #tpu.memory_space<smem>>
    %218 = vector.broadcast %217 : f32 to vector<2x32xf32>
    %219 = arith.mulf %218, %8 : vector<2x32xf32>
    %220 = arith.addf %216, %219 : vector<2x32xf32>
    %c3_26 = arith.constant 3 : index
    %221 = memref.load %arg4[%c3_26] : memref<27xf32, #tpu.memory_space<smem>>
    %222 = vector.broadcast %221 : f32 to vector<2x32xf32>
    %223 = arith.mulf %222, %74 : vector<2x32xf32>
    %224 = arith.addf %220, %223 : vector<2x32xf32>
    %c12_27 = arith.constant 12 : index
    %225 = memref.load %arg4[%c12_27] : memref<27xf32, #tpu.memory_space<smem>>
    %226 = vector.broadcast %225 : f32 to vector<2x32xf32>
    %227 = arith.mulf %226, %40 : vector<2x32xf32>
    %228 = arith.addf %224, %227 : vector<2x32xf32>
    %c21_28 = arith.constant 21 : index
    %229 = memref.load %arg4[%c21_28] : memref<27xf32, #tpu.memory_space<smem>>
    %230 = vector.broadcast %229 : f32 to vector<2x32xf32>
    %231 = arith.mulf %230, %12 : vector<2x32xf32>
    %232 = arith.addf %228, %231 : vector<2x32xf32>
    %c4_29 = arith.constant 4 : index
    %233 = memref.load %arg4[%c4_29] : memref<27xf32, #tpu.memory_space<smem>>
    %234 = vector.broadcast %233 : f32 to vector<2x32xf32>
    %235 = arith.mulf %234, %74 : vector<2x32xf32>
    %236 = arith.addf %232, %235 : vector<2x32xf32>
    %c13_30 = arith.constant 13 : index
    %237 = memref.load %arg4[%c13_30] : memref<27xf32, #tpu.memory_space<smem>>
    %238 = vector.broadcast %237 : f32 to vector<2x32xf32>
    %239 = arith.mulf %238, %45 : vector<2x32xf32>
    %240 = arith.addf %236, %239 : vector<2x32xf32>
    %c22_31 = arith.constant 22 : index
    %241 = memref.load %arg4[%c22_31] : memref<27xf32, #tpu.memory_space<smem>>
    %242 = vector.broadcast %241 : f32 to vector<2x32xf32>
    %243 = arith.mulf %242, %14 : vector<2x32xf32>
    %244 = arith.addf %240, %243 : vector<2x32xf32>
    %c5_32 = arith.constant 5 : index
    %245 = memref.load %arg4[%c5_32] : memref<27xf32, #tpu.memory_space<smem>>
    %246 = vector.broadcast %245 : f32 to vector<2x32xf32>
    %247 = arith.mulf %246, %74 : vector<2x32xf32>
    %248 = arith.addf %244, %247 : vector<2x32xf32>
    %c14_33 = arith.constant 14 : index
    %249 = memref.load %arg4[%c14_33] : memref<27xf32, #tpu.memory_space<smem>>
    %250 = vector.broadcast %249 : f32 to vector<2x32xf32>
    %251 = arith.mulf %250, %45 : vector<2x32xf32>
    %252 = arith.addf %248, %251 : vector<2x32xf32>
    %c23_34 = arith.constant 23 : index
    %253 = memref.load %arg4[%c23_34] : memref<27xf32, #tpu.memory_space<smem>>
    %254 = vector.broadcast %253 : f32 to vector<2x32xf32>
    %255 = arith.mulf %254, %16 : vector<2x32xf32>
    %256 = arith.addf %252, %255 : vector<2x32xf32>
    %c6_35 = arith.constant 6 : index
    %257 = memref.load %arg4[%c6_35] : memref<27xf32, #tpu.memory_space<smem>>
    %258 = vector.broadcast %257 : f32 to vector<2x32xf32>
    %259 = arith.mulf %258, %74 : vector<2x32xf32>
    %260 = arith.addf %256, %259 : vector<2x32xf32>
    %c15_36 = arith.constant 15 : index
    %261 = memref.load %arg4[%c15_36] : memref<27xf32, #tpu.memory_space<smem>>
    %262 = vector.broadcast %261 : f32 to vector<2x32xf32>
    %263 = arith.mulf %262, %50 : vector<2x32xf32>
    %264 = arith.addf %260, %263 : vector<2x32xf32>
    %c24_37 = arith.constant 24 : index
    %265 = memref.load %arg4[%c24_37] : memref<27xf32, #tpu.memory_space<smem>>
    %266 = vector.broadcast %265 : f32 to vector<2x32xf32>
    %267 = arith.mulf %266, %20 : vector<2x32xf32>
    %268 = arith.addf %264, %267 : vector<2x32xf32>
    %c7_38 = arith.constant 7 : index
    %269 = memref.load %arg4[%c7_38] : memref<27xf32, #tpu.memory_space<smem>>
    %270 = vector.broadcast %269 : f32 to vector<2x32xf32>
    %271 = arith.mulf %270, %74 : vector<2x32xf32>
    %272 = arith.addf %268, %271 : vector<2x32xf32>
    %c16_39 = arith.constant 16 : index
    %273 = memref.load %arg4[%c16_39] : memref<27xf32, #tpu.memory_space<smem>>
    %274 = vector.broadcast %273 : f32 to vector<2x32xf32>
    %275 = arith.mulf %274, %55 : vector<2x32xf32>
    %276 = arith.addf %272, %275 : vector<2x32xf32>
    %c25_40 = arith.constant 25 : index
    %277 = memref.load %arg4[%c25_40] : memref<27xf32, #tpu.memory_space<smem>>
    %278 = vector.broadcast %277 : f32 to vector<2x32xf32>
    %279 = arith.mulf %278, %22 : vector<2x32xf32>
    %280 = arith.addf %276, %279 : vector<2x32xf32>
    %c8_41 = arith.constant 8 : index
    %281 = memref.load %arg4[%c8_41] : memref<27xf32, #tpu.memory_space<smem>>
    %282 = vector.broadcast %281 : f32 to vector<2x32xf32>
    %283 = arith.mulf %282, %74 : vector<2x32xf32>
    %284 = arith.addf %280, %283 : vector<2x32xf32>
    %c17_42 = arith.constant 17 : index
    %285 = memref.load %arg4[%c17_42] : memref<27xf32, #tpu.memory_space<smem>>
    %286 = vector.broadcast %285 : f32 to vector<2x32xf32>
    %287 = arith.mulf %286, %55 : vector<2x32xf32>
    %288 = arith.addf %284, %287 : vector<2x32xf32>
    %c26_43 = arith.constant 26 : index
    %289 = memref.load %arg4[%c26_43] : memref<27xf32, #tpu.memory_space<smem>>
    %290 = vector.broadcast %289 : f32 to vector<2x32xf32>
    %291 = arith.mulf %290, %24 : vector<2x32xf32>
    %292 = arith.addf %288, %291 : vector<2x32xf32>
    %cst_44 = arith.constant 0.000000e+00 : f32
    %293 = vector.broadcast %cst_44 : f32 to vector<2x32xf32>
    %c0_45 = arith.constant 0 : index
    %294 = memref.load %arg4[%c0_45] : memref<27xf32, #tpu.memory_space<smem>>
    %295 = vector.broadcast %294 : f32 to vector<2x32xf32>
    %296 = arith.mulf %295, %74 : vector<2x32xf32>
    %297 = arith.addf %293, %296 : vector<2x32xf32>
    %c9_46 = arith.constant 9 : index
    %298 = memref.load %arg4[%c9_46] : memref<27xf32, #tpu.memory_space<smem>>
    %299 = vector.broadcast %298 : f32 to vector<2x32xf32>
    %300 = arith.mulf %299, %40 : vector<2x32xf32>
    %301 = arith.addf %297, %300 : vector<2x32xf32>
    %c18_47 = arith.constant 18 : index
    %302 = memref.load %arg4[%c18_47] : memref<27xf32, #tpu.memory_space<smem>>
    %303 = vector.broadcast %302 : f32 to vector<2x32xf32>
    %304 = arith.mulf %303, %10 : vector<2x32xf32>
    %305 = arith.addf %301, %304 : vector<2x32xf32>
    %c1_48 = arith.constant 1 : index
    %306 = memref.load %arg4[%c1_48] : memref<27xf32, #tpu.memory_space<smem>>
    %307 = vector.broadcast %306 : f32 to vector<2x32xf32>
    %308 = arith.mulf %307, %74 : vector<2x32xf32>
    %309 = arith.addf %305, %308 : vector<2x32xf32>
    %c10_49 = arith.constant 10 : index
    %310 = memref.load %arg4[%c10_49] : memref<27xf32, #tpu.memory_space<smem>>
    %311 = vector.broadcast %310 : f32 to vector<2x32xf32>
    %312 = arith.mulf %311, %40 : vector<2x32xf32>
    %313 = arith.addf %309, %312 : vector<2x32xf32>
    %c19_50 = arith.constant 19 : index
    %314 = memref.load %arg4[%c19_50] : memref<27xf32, #tpu.memory_space<smem>>
    %315 = vector.broadcast %314 : f32 to vector<2x32xf32>
    %316 = arith.mulf %315, %12 : vector<2x32xf32>
    %317 = arith.addf %313, %316 : vector<2x32xf32>
    %c2_51 = arith.constant 2 : index
    %318 = memref.load %arg4[%c2_51] : memref<27xf32, #tpu.memory_space<smem>>
    %319 = vector.broadcast %318 : f32 to vector<2x32xf32>
    %320 = arith.mulf %319, %74 : vector<2x32xf32>
    %321 = arith.addf %317, %320 : vector<2x32xf32>
    %c11_52 = arith.constant 11 : index
    %322 = memref.load %arg4[%c11_52] : memref<27xf32, #tpu.memory_space<smem>>
    %323 = vector.broadcast %322 : f32 to vector<2x32xf32>
    %324 = arith.mulf %323, %45 : vector<2x32xf32>
    %325 = arith.addf %321, %324 : vector<2x32xf32>
    %c20_53 = arith.constant 20 : index
    %326 = memref.load %arg4[%c20_53] : memref<27xf32, #tpu.memory_space<smem>>
    %327 = vector.broadcast %326 : f32 to vector<2x32xf32>
    %328 = arith.mulf %327, %14 : vector<2x32xf32>
    %329 = arith.addf %325, %328 : vector<2x32xf32>
    %c3_54 = arith.constant 3 : index
    %330 = memref.load %arg4[%c3_54] : memref<27xf32, #tpu.memory_space<smem>>
    %331 = vector.broadcast %330 : f32 to vector<2x32xf32>
    %332 = arith.mulf %331, %74 : vector<2x32xf32>
    %333 = arith.addf %329, %332 : vector<2x32xf32>
    %c12_55 = arith.constant 12 : index
    %334 = memref.load %arg4[%c12_55] : memref<27xf32, #tpu.memory_space<smem>>
    %335 = vector.broadcast %334 : f32 to vector<2x32xf32>
    %336 = arith.mulf %335, %50 : vector<2x32xf32>
    %337 = arith.addf %333, %336 : vector<2x32xf32>
    %c21_56 = arith.constant 21 : index
    %338 = memref.load %arg4[%c21_56] : memref<27xf32, #tpu.memory_space<smem>>
    %339 = vector.broadcast %338 : f32 to vector<2x32xf32>
    %340 = arith.mulf %339, %18 : vector<2x32xf32>
    %341 = arith.addf %337, %340 : vector<2x32xf32>
    %c4_57 = arith.constant 4 : index
    %342 = memref.load %arg4[%c4_57] : memref<27xf32, #tpu.memory_space<smem>>
    %343 = vector.broadcast %342 : f32 to vector<2x32xf32>
    %344 = arith.mulf %343, %74 : vector<2x32xf32>
    %345 = arith.addf %341, %344 : vector<2x32xf32>
    %c13_58 = arith.constant 13 : index
    %346 = memref.load %arg4[%c13_58] : memref<27xf32, #tpu.memory_space<smem>>
    %347 = vector.broadcast %346 : f32 to vector<2x32xf32>
    %348 = arith.mulf %347, %50 : vector<2x32xf32>
    %349 = arith.addf %345, %348 : vector<2x32xf32>
    %c22_59 = arith.constant 22 : index
    %350 = memref.load %arg4[%c22_59] : memref<27xf32, #tpu.memory_space<smem>>
    %351 = vector.broadcast %350 : f32 to vector<2x32xf32>
    %352 = arith.mulf %351, %20 : vector<2x32xf32>
    %353 = arith.addf %349, %352 : vector<2x32xf32>
    %c5_60 = arith.constant 5 : index
    %354 = memref.load %arg4[%c5_60] : memref<27xf32, #tpu.memory_space<smem>>
    %355 = vector.broadcast %354 : f32 to vector<2x32xf32>
    %356 = arith.mulf %355, %74 : vector<2x32xf32>
    %357 = arith.addf %353, %356 : vector<2x32xf32>
    %c14_61 = arith.constant 14 : index
    %358 = memref.load %arg4[%c14_61] : memref<27xf32, #tpu.memory_space<smem>>
    %359 = vector.broadcast %358 : f32 to vector<2x32xf32>
    %360 = arith.mulf %359, %55 : vector<2x32xf32>
    %361 = arith.addf %357, %360 : vector<2x32xf32>
    %c23_62 = arith.constant 23 : index
    %362 = memref.load %arg4[%c23_62] : memref<27xf32, #tpu.memory_space<smem>>
    %363 = vector.broadcast %362 : f32 to vector<2x32xf32>
    %364 = arith.mulf %363, %22 : vector<2x32xf32>
    %365 = arith.addf %361, %364 : vector<2x32xf32>
    %c6_63 = arith.constant 6 : index
    %366 = memref.load %arg4[%c6_63] : memref<27xf32, #tpu.memory_space<smem>>
    %367 = vector.broadcast %366 : f32 to vector<2x32xf32>
    %368 = arith.mulf %367, %74 : vector<2x32xf32>
    %369 = arith.addf %365, %368 : vector<2x32xf32>
    %c15_64 = arith.constant 15 : index
    %370 = memref.load %arg4[%c15_64] : memref<27xf32, #tpu.memory_space<smem>>
    %371 = vector.broadcast %370 : f32 to vector<2x32xf32>
    %372 = arith.mulf %371, %50 : vector<2x32xf32>
    %373 = arith.addf %369, %372 : vector<2x32xf32>
    %c24_65 = arith.constant 24 : index
    %374 = memref.load %arg4[%c24_65] : memref<27xf32, #tpu.memory_space<smem>>
    %375 = vector.broadcast %374 : f32 to vector<2x32xf32>
    %376 = arith.mulf %375, %26 : vector<2x32xf32>
    %377 = arith.addf %373, %376 : vector<2x32xf32>
    %c7_66 = arith.constant 7 : index
    %378 = memref.load %arg4[%c7_66] : memref<27xf32, #tpu.memory_space<smem>>
    %379 = vector.broadcast %378 : f32 to vector<2x32xf32>
    %380 = arith.mulf %379, %74 : vector<2x32xf32>
    %381 = arith.addf %377, %380 : vector<2x32xf32>
    %c16_67 = arith.constant 16 : index
    %382 = memref.load %arg4[%c16_67] : memref<27xf32, #tpu.memory_space<smem>>
    %383 = vector.broadcast %382 : f32 to vector<2x32xf32>
    %384 = arith.mulf %383, %50 : vector<2x32xf32>
    %385 = arith.addf %381, %384 : vector<2x32xf32>
    %c25_68 = arith.constant 25 : index
    %386 = memref.load %arg4[%c25_68] : memref<27xf32, #tpu.memory_space<smem>>
    %387 = vector.broadcast %386 : f32 to vector<2x32xf32>
    %388 = arith.mulf %387, %28 : vector<2x32xf32>
    %389 = arith.addf %385, %388 : vector<2x32xf32>
    %c8_69 = arith.constant 8 : index
    %390 = memref.load %arg4[%c8_69] : memref<27xf32, #tpu.memory_space<smem>>
    %391 = vector.broadcast %390 : f32 to vector<2x32xf32>
    %392 = arith.mulf %391, %74 : vector<2x32xf32>
    %393 = arith.addf %389, %392 : vector<2x32xf32>
    %c17_70 = arith.constant 17 : index
    %394 = memref.load %arg4[%c17_70] : memref<27xf32, #tpu.memory_space<smem>>
    %395 = vector.broadcast %394 : f32 to vector<2x32xf32>
    %396 = arith.mulf %395, %55 : vector<2x32xf32>
    %397 = arith.addf %393, %396 : vector<2x32xf32>
    %c26_71 = arith.constant 26 : index
    %398 = memref.load %arg4[%c26_71] : memref<27xf32, #tpu.memory_space<smem>>
    %399 = vector.broadcast %398 : f32 to vector<2x32xf32>
    %400 = arith.mulf %399, %30 : vector<2x32xf32>
    %401 = arith.addf %397, %400 : vector<2x32xf32>
    %cst_72 = arith.constant 0.000000e+00 : f32
    %402 = vector.broadcast %cst_72 : f32 to vector<2x32xf32>
    %c0_73 = arith.constant 0 : index
    %403 = memref.load %arg4[%c0_73] : memref<27xf32, #tpu.memory_space<smem>>
    %404 = vector.broadcast %403 : f32 to vector<2x32xf32>
    %405 = arith.mulf %404, %74 : vector<2x32xf32>
    %406 = arith.addf %402, %405 : vector<2x32xf32>
    %c9_74 = arith.constant 9 : index
    %407 = memref.load %arg4[%c9_74] : memref<27xf32, #tpu.memory_space<smem>>
    %408 = vector.broadcast %407 : f32 to vector<2x32xf32>
    %409 = arith.mulf %408, %40 : vector<2x32xf32>
    %410 = arith.addf %406, %409 : vector<2x32xf32>
    %c18_75 = arith.constant 18 : index
    %411 = memref.load %arg4[%c18_75] : memref<27xf32, #tpu.memory_space<smem>>
    %412 = vector.broadcast %411 : f32 to vector<2x32xf32>
    %413 = arith.mulf %412, %12 : vector<2x32xf32>
    %414 = arith.addf %410, %413 : vector<2x32xf32>
    %c1_76 = arith.constant 1 : index
    %415 = memref.load %arg4[%c1_76] : memref<27xf32, #tpu.memory_space<smem>>
    %416 = vector.broadcast %415 : f32 to vector<2x32xf32>
    %417 = arith.mulf %416, %74 : vector<2x32xf32>
    %418 = arith.addf %414, %417 : vector<2x32xf32>
    %c10_77 = arith.constant 10 : index
    %419 = memref.load %arg4[%c10_77] : memref<27xf32, #tpu.memory_space<smem>>
    %420 = vector.broadcast %419 : f32 to vector<2x32xf32>
    %421 = arith.mulf %420, %45 : vector<2x32xf32>
    %422 = arith.addf %418, %421 : vector<2x32xf32>
    %c19_78 = arith.constant 19 : index
    %423 = memref.load %arg4[%c19_78] : memref<27xf32, #tpu.memory_space<smem>>
    %424 = vector.broadcast %423 : f32 to vector<2x32xf32>
    %425 = arith.mulf %424, %14 : vector<2x32xf32>
    %426 = arith.addf %422, %425 : vector<2x32xf32>
    %c2_79 = arith.constant 2 : index
    %427 = memref.load %arg4[%c2_79] : memref<27xf32, #tpu.memory_space<smem>>
    %428 = vector.broadcast %427 : f32 to vector<2x32xf32>
    %429 = arith.mulf %428, %74 : vector<2x32xf32>
    %430 = arith.addf %426, %429 : vector<2x32xf32>
    %c11_80 = arith.constant 11 : index
    %431 = memref.load %arg4[%c11_80] : memref<27xf32, #tpu.memory_space<smem>>
    %432 = vector.broadcast %431 : f32 to vector<2x32xf32>
    %433 = arith.mulf %432, %45 : vector<2x32xf32>
    %434 = arith.addf %430, %433 : vector<2x32xf32>
    %c20_81 = arith.constant 20 : index
    %435 = memref.load %arg4[%c20_81] : memref<27xf32, #tpu.memory_space<smem>>
    %436 = vector.broadcast %435 : f32 to vector<2x32xf32>
    %437 = arith.mulf %436, %16 : vector<2x32xf32>
    %438 = arith.addf %434, %437 : vector<2x32xf32>
    %c3_82 = arith.constant 3 : index
    %439 = memref.load %arg4[%c3_82] : memref<27xf32, #tpu.memory_space<smem>>
    %440 = vector.broadcast %439 : f32 to vector<2x32xf32>
    %441 = arith.mulf %440, %74 : vector<2x32xf32>
    %442 = arith.addf %438, %441 : vector<2x32xf32>
    %c12_83 = arith.constant 12 : index
    %443 = memref.load %arg4[%c12_83] : memref<27xf32, #tpu.memory_space<smem>>
    %444 = vector.broadcast %443 : f32 to vector<2x32xf32>
    %445 = arith.mulf %444, %50 : vector<2x32xf32>
    %446 = arith.addf %442, %445 : vector<2x32xf32>
    %c21_84 = arith.constant 21 : index
    %447 = memref.load %arg4[%c21_84] : memref<27xf32, #tpu.memory_space<smem>>
    %448 = vector.broadcast %447 : f32 to vector<2x32xf32>
    %449 = arith.mulf %448, %20 : vector<2x32xf32>
    %450 = arith.addf %446, %449 : vector<2x32xf32>
    %c4_85 = arith.constant 4 : index
    %451 = memref.load %arg4[%c4_85] : memref<27xf32, #tpu.memory_space<smem>>
    %452 = vector.broadcast %451 : f32 to vector<2x32xf32>
    %453 = arith.mulf %452, %74 : vector<2x32xf32>
    %454 = arith.addf %450, %453 : vector<2x32xf32>
    %c13_86 = arith.constant 13 : index
    %455 = memref.load %arg4[%c13_86] : memref<27xf32, #tpu.memory_space<smem>>
    %456 = vector.broadcast %455 : f32 to vector<2x32xf32>
    %457 = arith.mulf %456, %55 : vector<2x32xf32>
    %458 = arith.addf %454, %457 : vector<2x32xf32>
    %c22_87 = arith.constant 22 : index
    %459 = memref.load %arg4[%c22_87] : memref<27xf32, #tpu.memory_space<smem>>
    %460 = vector.broadcast %459 : f32 to vector<2x32xf32>
    %461 = arith.mulf %460, %22 : vector<2x32xf32>
    %462 = arith.addf %458, %461 : vector<2x32xf32>
    %c5_88 = arith.constant 5 : index
    %463 = memref.load %arg4[%c5_88] : memref<27xf32, #tpu.memory_space<smem>>
    %464 = vector.broadcast %463 : f32 to vector<2x32xf32>
    %465 = arith.mulf %464, %74 : vector<2x32xf32>
    %466 = arith.addf %462, %465 : vector<2x32xf32>
    %c14_89 = arith.constant 14 : index
    %467 = memref.load %arg4[%c14_89] : memref<27xf32, #tpu.memory_space<smem>>
    %468 = vector.broadcast %467 : f32 to vector<2x32xf32>
    %469 = arith.mulf %468, %55 : vector<2x32xf32>
    %470 = arith.addf %466, %469 : vector<2x32xf32>
    %c23_90 = arith.constant 23 : index
    %471 = memref.load %arg4[%c23_90] : memref<27xf32, #tpu.memory_space<smem>>
    %472 = vector.broadcast %471 : f32 to vector<2x32xf32>
    %473 = arith.mulf %472, %24 : vector<2x32xf32>
    %474 = arith.addf %470, %473 : vector<2x32xf32>
    %c6_91 = arith.constant 6 : index
    %475 = memref.load %arg4[%c6_91] : memref<27xf32, #tpu.memory_space<smem>>
    %476 = vector.broadcast %475 : f32 to vector<2x32xf32>
    %477 = arith.mulf %476, %74 : vector<2x32xf32>
    %478 = arith.addf %474, %477 : vector<2x32xf32>
    %c15_92 = arith.constant 15 : index
    %479 = memref.load %arg4[%c15_92] : memref<27xf32, #tpu.memory_space<smem>>
    %480 = vector.broadcast %479 : f32 to vector<2x32xf32>
    %481 = arith.mulf %480, %50 : vector<2x32xf32>
    %482 = arith.addf %478, %481 : vector<2x32xf32>
    %c24_93 = arith.constant 24 : index
    %483 = memref.load %arg4[%c24_93] : memref<27xf32, #tpu.memory_space<smem>>
    %484 = vector.broadcast %483 : f32 to vector<2x32xf32>
    %485 = arith.mulf %484, %28 : vector<2x32xf32>
    %486 = arith.addf %482, %485 : vector<2x32xf32>
    %c7_94 = arith.constant 7 : index
    %487 = memref.load %arg4[%c7_94] : memref<27xf32, #tpu.memory_space<smem>>
    %488 = vector.broadcast %487 : f32 to vector<2x32xf32>
    %489 = arith.mulf %488, %74 : vector<2x32xf32>
    %490 = arith.addf %486, %489 : vector<2x32xf32>
    %c16_95 = arith.constant 16 : index
    %491 = memref.load %arg4[%c16_95] : memref<27xf32, #tpu.memory_space<smem>>
    %492 = vector.broadcast %491 : f32 to vector<2x32xf32>
    %493 = arith.mulf %492, %55 : vector<2x32xf32>
    %494 = arith.addf %490, %493 : vector<2x32xf32>
    %c25_96 = arith.constant 25 : index
    %495 = memref.load %arg4[%c25_96] : memref<27xf32, #tpu.memory_space<smem>>
    %496 = vector.broadcast %495 : f32 to vector<2x32xf32>
    %497 = arith.mulf %496, %30 : vector<2x32xf32>
    %498 = arith.addf %494, %497 : vector<2x32xf32>
    %c8_97 = arith.constant 8 : index
    %499 = memref.load %arg4[%c8_97] : memref<27xf32, #tpu.memory_space<smem>>
    %500 = vector.broadcast %499 : f32 to vector<2x32xf32>
    %501 = arith.mulf %500, %74 : vector<2x32xf32>
    %502 = arith.addf %498, %501 : vector<2x32xf32>
    %c17_98 = arith.constant 17 : index
    %503 = memref.load %arg4[%c17_98] : memref<27xf32, #tpu.memory_space<smem>>
    %504 = vector.broadcast %503 : f32 to vector<2x32xf32>
    %505 = arith.mulf %504, %55 : vector<2x32xf32>
    %506 = arith.addf %502, %505 : vector<2x32xf32>
    %c26_99 = arith.constant 26 : index
    %507 = memref.load %arg4[%c26_99] : memref<27xf32, #tpu.memory_space<smem>>
    %508 = vector.broadcast %507 : f32 to vector<2x32xf32>
    %509 = arith.mulf %508, %32 : vector<2x32xf32>
    %510 = arith.addf %506, %509 : vector<2x32xf32>
    %c4_100 = arith.constant 4 : index
    %511 = memref.load %arg5[%c4_100] : memref<9xf32, #tpu.memory_space<smem>>
    %512 = vector.broadcast %511 : f32 to vector<2x32xf32>
    %513 = arith.mulf %512, %183 : vector<2x32xf32>
    %c5_101 = arith.constant 5 : index
    %514 = memref.load %arg5[%c5_101] : memref<9xf32, #tpu.memory_space<smem>>
    %515 = vector.broadcast %514 : f32 to vector<2x32xf32>
    %516 = arith.mulf %515, %292 : vector<2x32xf32>
    %517 = arith.addf %513, %516 : vector<2x32xf32>
    %c7_102 = arith.constant 7 : index
    %518 = memref.load %arg5[%c7_102] : memref<9xf32, #tpu.memory_space<smem>>
    %519 = vector.broadcast %518 : f32 to vector<2x32xf32>
    %520 = arith.mulf %519, %401 : vector<2x32xf32>
    %521 = arith.addf %517, %520 : vector<2x32xf32>
    %c8_103 = arith.constant 8 : index
    %522 = memref.load %arg5[%c8_103] : memref<9xf32, #tpu.memory_space<smem>>
    %523 = vector.broadcast %522 : f32 to vector<2x32xf32>
    %524 = arith.mulf %523, %510 : vector<2x32xf32>
    %525 = arith.addf %521, %524 : vector<2x32xf32>
    %526 = arith.truncf %525 : vector<2x32xf32> to vector<2x32xbf16>
    %cst_104 = arith.constant dense<0.000000e+00> : vector<2x2xf32>
    %527 = tpu.matmul %526, %33, %cst_104 {dimension_numbers = #tpu.dot_dimension_numbers<[1], [0], [0], [1], [0, 0, 1, 1], [], []>} : vector<2x32xbf16>, vector<32x2xbf16>, vector<2x2xf32> -> vector<2x2xf32>
    %cst_105 = arith.constant 0.000000e+00 : f32
    %528 = vector.broadcast %cst_105 : f32 to vector<2x2xf32>
    %529 = arith.maximumf %527, %528 : vector<2x2xf32>
    %530 = arith.truncf %529 : vector<2x2xf32> to vector<2x2xbf16>
    %cst_106 = arith.constant dense<0.000000e+00> : vector<2x32xf32>
    %531 = tpu.matmul %530, %34, %cst_106 {dimension_numbers = #tpu.dot_dimension_numbers<[1], [0], [0], [1], [0, 0, 1, 1], [], []>} : vector<2x2xbf16>, vector<2x32xbf16>, vector<2x32xf32> -> vector<2x32xf32>
    %532 = arith.addf %531, %35 : vector<2x32xf32>
    %c0_107 = arith.constant 0 : index
    %c0_108 = arith.constant 0 : index
    %533 = vector.load %arg6[%c0_107, %c0_108] : memref<2x32xf32, #tpu.memory_space<vmem>>, vector<2x32xf32>
    tpu.vector_store %arg6[%c0_107, %c0_108], %532 {strides = array<i32>} : memref<2x32xf32, #tpu.memory_space<vmem>>, vector<2x32xf32>,
    %cst_109 = arith.constant 0.000000e+00 : f32
    %534 = vector.broadcast %cst_109 : f32 to vector<2x32xf32>
    %535 = arith.subf %534, %532 : vector<2x32xf32>
    %536 = math.exp %535 : vector<2x32xf32>
    %cst_110 = arith.constant 1.000000e+00 : f32
    %537 = vector.broadcast %cst_110 : f32 to vector<2x32xf32>
    %538 = arith.addf %537, %536 : vector<2x32xf32>
    %539 = tpu.reciprocal %538 {approx = true} : vector<2x32xf32> -> vector<2x32xf32>
    %c0_111 = arith.constant 0 : index
    %c0_112 = arith.constant 0 : index
    %540 = vector.load %arg7[%c0_111, %c0_112] : memref<2x32xf32, #tpu.memory_space<vmem>>, vector<2x32xf32>
    tpu.vector_store %arg7[%c0_111, %c0_112], %539 {strides = array<i32>} : memref<2x32xf32, #tpu.memory_space<vmem>>, vector<2x32xf32>,
    return
  }
}

</mosaic_0001>

<llo_original>
// kernel: preact_bottleneck_forward.7
$region0: #{preact_bottleneck_forward.7}
  #allocation0 [shape = 'u32[]', space=smem, size = 0x4, offset = 0x4, fixed_abs, tag = 'smem constant byte address 0x4 - core index']
  #allocation1 [shape = 'u32[144,128]{1,0:T(1,128)}', space=vmem, size = 0x12000, scoped, tag = 'internal scratch']
  %s0 = inlined_call_operand.vmem [shape: f32[2,16,16,32], index: 0, kind: input, shape index: {}]
  %s1 = inlined_call_operand.vmem [shape: f32[2,16,16,32], index: 1, kind: input, shape index: {}]
  %s2 = inlined_call_operand.vmem [shape: f32[2,1,1,32], index: 2, kind: input, shape index: {}]
  %s3 = inlined_call_operand.hbm [shape: f32[2,16,16,32], index: 3, kind: output, shape index: {}]
  %s4 = sld [smem:[#allocation0]]
  $region45: #{preact_bottleneck_forward.7} parent=0
    _
  %s6 = ssub.s32 1, %s4
  %s7 = scalar_select 0, %s6, %s4
  $region1: #{preact_bottleneck_forward.7} parent=0
    #allocation2 [shape = 'u8[65536]{0}', space=vmem, size = 0x10000, scoped, tag = 'output window, operand 0']
    #allocation3 [shape = 's32[2]{0}', space=sflag, size = 0x8, scoped, tag = 'scoped memory for preact_bottleneck_forward.7']
    %8 = vsyncpa [#allocation3], 0
    %s9 = scalar_lea.sflag [#allocation3], 1
    %10 = vsyncpa %s9, 0
    loop: start=0, step=1, limit=10
    $region2: #{preact_bottleneck_forward.7} parent=1 // loop_pre_header
      _
    $region3: #{preact_bottleneck_forward.7} parent=1 // loop_header
      %s12 = sphi 0, %s16
      %p13 = scmp.ge.s32.totalorder %s12, 10
      %s19 = sphi 0, %s31
      %s20 = sphi 0, %s27
      %s21 = sphi 0, %s19
      %s22 = sphi 0, %s20
      %s23 = sphi 0, %s21
      %s24 = sphi 0, %s22
      %s36 = sphi 0, %s38
      %s39 = sphi 0, %s36
      %s40 = sphi 0, %s39
      %s56 = sphi 0, %s40
      %s64 = sphi 0, %s66
      %s67 = sphi 0, %s64
      %s68 = sphi 0, %s67
      %s84 = sphi 0, %s68
      %s90 = sphi 0, %s92
      %s93 = sphi 0, %s90
      %s94 = sphi 0, %s93
      %s110 = sphi 0, %s94
      %s118 = sphi 0, %s120
      %s121 = sphi 0, %s118
      %s122 = sphi 0, %s121
      %s138 = sphi 0, %s122
    $region4: #{preact_bottleneck_forward.7} parent=1 // loop_header_branch
      %15 = sbr.rel (%p13) target = $region8
    $region5: #{preact_bottleneck_forward.7} parent=1 // loop_body
      %s17 = ssub.s32 %s12, 1
      %s18 = ssub.s32 %s12, 2
      %s25 = sadd.s32 1, %s20
      %p26 = scmp.ge.s32.totalorder %s25, 4
      %s27 = scalar_select %p26, 0, %s25
      %s28 = sadd.s32 1, %s19
      %s29 = scalar_select %p26, %s28, %s19
      %p30 = scmp.ge.s32.totalorder %s29, 2
      %s31 = scalar_select %p30, 0, %s29
      %s32 = ssub.s32 %s19, %s31
      %s33 = ssub.s32 %s20, %s27
      %s34 = sor.u32 %s32, %s33
      %p35 = scmp.eq.s32.totalorder %s34, 0
      %s37 = sadd.s32 %s36, 1
      %s38 = scalar_select %p35, %s36, %s37
      %p41 = pneg %p35
      %p42 = scmp.eq.s32.totalorder %s12, 7
      %p43 = por %p41, %p42
      %p44 = scmp.ne.s32.totalorder %s36, %s39
      %p45 = scmp.eq.s32.totalorder %s12, 0
      %p46 = por %p44, %p45
      %p47 = scmp.ne.s32.totalorder %s36, %s39
      %p48 = scmp.eq.s32.totalorder %s17, 7
      %p49 = por %p47, %p48
      %p50 = scmp.ne.s32.totalorder %s39, %s40
      %p51 = scmp.eq.s32.totalorder %s17, 0
      %p52 = por %p50, %p51
      %p53 = scmp.ne.s32.totalorder %s39, %s40
      %p54 = scmp.eq.s32.totalorder %s18, 7
      %p55 = por %p53, %p54
      %p57 = scmp.ne.s32.totalorder %s40, %s56
      %p58 = scmp.eq.s32.totalorder %s18, 0
      %p59 = por %p57, %p58
      %s60 = ssub.s32 %s19, %s31
      %s61 = ssub.s32 %s20, %s27
      %s62 = sor.u32 %s60, %s61
      %p63 = scmp.eq.s32.totalorder %s62, 0
      %s65 = sadd.s32 %s64, 1
      %s66 = scalar_select %p63, %s64, %s65
      %p69 = pneg %p63
      %p70 = scmp.eq.s32.totalorder %s12, 7
      %p71 = por %p69, %p70
      %p72 = scmp.ne.s32.totalorder %s64, %s67
      %p73 = scmp.eq.s32.totalorder %s12, 0
      %p74 = por %p72, %p73
      %p75 = scmp.ne.s32.totalorder %s64, %s67
      %p76 = scmp.eq.s32.totalorder %s17, 7
      %p77 = por %p75, %p76
      %p78 = scmp.ne.s32.totalorder %s67, %s68
      %p79 = scmp.eq.s32.totalorder %s17, 0
      %p80 = por %p78, %p79
      %p81 = scmp.ne.s32.totalorder %s67, %s68
      %p82 = scmp.eq.s32.totalorder %s18, 7
      %p83 = por %p81, %p82
      %p85 = scmp.ne.s32.totalorder %s68, %s84
      %p86 = scmp.eq.s32.totalorder %s18, 0
      %p87 = por %p85, %p86
      %s88 = ssub.s32 %s19, %s31
      %p89 = scmp.eq.s32.totalorder %s88, 0
      %s91 = sadd.s32 %s90, 1
      %s92 = scalar_select %p89, %s90, %s91
      %p95 = pneg %p89
      %p96 = scmp.eq.s32.totalorder %s12, 7
      %p97 = por %p95, %p96
      %p98 = scmp.ne.s32.totalorder %s90, %s93
      %p99 = scmp.eq.s32.totalorder %s12, 0
      %p100 = por %p98, %p99
      %p101 = scmp.ne.s32.totalorder %s90, %s93
      %p102 = scmp.eq.s32.totalorder %s17, 7
      %p103 = por %p101, %p102
      %p104 = scmp.ne.s32.totalorder %s93, %s94
      %p105 = scmp.eq.s32.totalorder %s17, 0
      %p106 = por %p104, %p105
      %p107 = scmp.ne.s32.totalorder %s93, %s94
      %p108 = scmp.eq.s32.totalorder %s18, 7
      %p109 = por %p107, %p108
      %p111 = scmp.ne.s32.totalorder %s94, %s110
      %p112 = scmp.eq.s32.totalorder %s18, 0
      %p113 = por %p111, %p112
      %s114 = ssub.s32 %s19, %s31
      %s115 = ssub.s32 %s20, %s27
      %s116 = sor.u32 %s114, %s115
      %p117 = scmp.eq.s32.totalorder %s116, 0
      %s119 = sadd.s32 %s118, 1
      %s120 = scalar_select %p117, %s118, %s119
      %p123 = pneg %p117
      %p124 = scmp.eq.s32.totalorder %s12, 7
      %p125 = por %p123, %p124
      %p126 = scmp.ne.s32.totalorder %s118, %s121
      %p127 = scmp.eq.s32.totalorder %s12, 0
      %p128 = por %p126, %p127
      %p129 = scmp.ne.s32.totalorder %s118, %s121
      %p130 = scmp.eq.s32.totalorder %s17, 7
      %p131 = por %p129, %p130
      %p132 = scmp.ne.s32.totalorder %s121, %s122
      %p133 = scmp.eq.s32.totalorder %s17, 0
      %p134 = por %p132, %p133
      %p135 = scmp.ne.s32.totalorder %s121, %s122
      %p136 = scmp.eq.s32.totalorder %s18, 7
      %p137 = por %p135, %p136
      %p139 = scmp.ne.s32.totalorder %s122, %s138
      %p140 = scmp.eq.s32.totalorder %s18, 0
      %p141 = por %p139, %p140
      %p142 = scmp.le.s32.totalorder 1, %s12
      %p143 = scmp.lt.s32.totalorder %s12, 9
      %p144 = pnand %p142, %p143
      %p145 = pneg %p144
      // Predicated region
      $region9: #{preact_bottleneck_forward.7} parent=5 // pred_check
        _
      $region10: #{preact_bottleneck_forward.7} parent=5 // pred_check_branch
        %147 = sbr.rel (%p144) target = $region12
      $region11: #{preact_bottleneck_forward.7} parent=5 // pred_region
        %s148 = ssub.s32 %s12, 1
      $region12: #{preact_bottleneck_forward.7} parent=5 // pred_fallthru
        _
      %p149 = scmp.lt.s32.totalorder %s12, 8
      // Predicated region
      $region13: #{preact_bottleneck_forward.7} parent=5 // pred_check
        %p150 = pneg %p149
      $region14: #{preact_bottleneck_forward.7} parent=5 // pred_check_branch
        %152 = sbr.rel (%p150) target = $region16
      $region15: #{preact_bottleneck_forward.7} parent=5 // pred_region
        // Predicated region
        $region17: #{preact_bottleneck_forward.7} parent=15 // pred_check
          %p153 = pneg %p46
        $region18: #{preact_bottleneck_forward.7} parent=15 // pred_check_branch
          %155 = sbr.rel (%p153) target = $region20
        $region19: #{preact_bottleneck_forward.7} parent=15 // pred_region
          %s156 = smul.u32 4, %s20
          %p157 = scmp.lt.s32.totalorder %s19, 1
          %s158 = scalar_select %p157, %s19, 1
          %p159 = scmp.lt.s32.totalorder %s156, 15
          %s160 = scalar_select %p159, %s156, 15
          %s161 = smul.addr %s160, 2
          %s162 = smul.addr %s158, 32
          %s163 = sadd.s32 %s161, %s162
          %s164 = smul.addr %s163, 8
          %s165 = scalar_lea.vmem %s0, %s164
          %s166 = smul.u32 4, %s20
        $region20: #{preact_bottleneck_forward.7} parent=15 // pred_fallthru
          _
        // Predicated region
        $region21: #{preact_bottleneck_forward.7} parent=15 // pred_check
          %p167 = pneg %p74
        $region22: #{preact_bottleneck_forward.7} parent=15 // pred_check_branch
          %169 = sbr.rel (%p167) target = $region24
        $region23: #{preact_bottleneck_forward.7} parent=15 // pred_region
          %s170 = smul.u32 4, %s20
          %p171 = scmp.lt.s32.totalorder %s19, 1
          %s172 = scalar_select %p171, %s19, 1
          %p173 = scmp.lt.s32.totalorder %s170, 15
          %s174 = scalar_select %p173, %s170, 15
          %s175 = smul.addr %s174, 2
          %s176 = smul.addr %s172, 32
          %s177 = sadd.s32 %s175, %s176
          %s178 = smul.addr %s177, 8
          %s179 = scalar_lea.vmem %s1, %s178
          %s180 = smul.u32 4, %s20
        $region24: #{preact_bottleneck_forward.7} parent=15 // pred_fallthru
          _
        // Predicated region
        $region25: #{preact_bottleneck_forward.7} parent=15 // pred_check
          %p181 = pneg %p100
        $region26: #{preact_bottleneck_forward.7} parent=15 // pred_check_branch
          %183 = sbr.rel (%p181) target = $region28
        $region27: #{preact_bottleneck_forward.7} parent=15 // pred_region
          %p184 = scmp.lt.s32.totalorder %s19, 1
          %s185 = scalar_select %p184, %s19, 1
          %s186 = scalar_lea.vmem %s2, %s185
        $region28: #{preact_bottleneck_forward.7} parent=15 // pred_fallthru
          _
      $region16: #{preact_bottleneck_forward.7} parent=5 // pred_fallthru
        _
      %p187 = scmp.le.s32.totalorder 1, %s12
      %p188 = scmp.lt.s32.totalorder %s12, 9
      %p189 = pnand %p187, %p188
      %p190 = pneg %p189
      // Predicated region
      $region29: #{preact_bottleneck_forward.7} parent=5 // pred_check
        _
      $region30: #{preact_bottleneck_forward.7} parent=5 // pred_check_branch
        %192 = sbr.rel (%p189) target = $region32
      $region31: #{preact_bottleneck_forward.7} parent=5 // pred_region
        %s193 = ssub.s32 %s12, 1
        %s194 = smul.u32 4, %s22
        %p195 = scmp.lt.s32.totalorder %s21, 1
        %s196 = scalar_select %p195, %s21, 1
        %p197 = scmp.lt.s32.totalorder %s194, 15
        %s198 = scalar_select %p197, %s194, 15
        %s199 = smul.addr %s198, 2
        %s200 = smul.addr %s196, 32
        %s201 = sadd.s32 %s199, %s200
        %s202 = smul.addr %s201, 8
        %s203 = scalar_lea.vmem %s0, %s202
        %p204 = pneg %p52
        %p205 = pneg %p49
        %s206 = smul.u32 4, %s22
        %p207 = scmp.lt.s32.totalorder %s21, 1
        %s208 = scalar_select %p207, %s21, 1
        %p209 = scmp.lt.s32.totalorder %s206, 15
        %s210 = scalar_select %p209, %s206, 15
        %s211 = smul.addr %s210, 2
        %s212 = smul.addr %s208, 32
        %s213 = sadd.s32 %s211, %s212
        %s214 = smul.addr %s213, 8
        %s215 = scalar_lea.vmem %s1, %s214
        %p216 = pneg %p80
        %p217 = pneg %p77
        %p218 = scmp.lt.s32.totalorder %s21, 1
        %s219 = scalar_select %p218, %s21, 1
        %s220 = scalar_lea.vmem %s2, %s219
        %p221 = pneg %p106
        %p222 = pneg %p103
        %p223 = pneg %p134
        %p224 = pneg %p131
        %s225 = sand.u32 %s121, 1
        %s226 = scalar_lea.sflag [#allocation3], %s225
        %s227 = sand.u32 %s121, 1
        %s228 = smul.addr %s227, 64
        %s229 = scalar_lea.vmem [#allocation2], %s228
        %s230 = smul.u32 4, %s22
        %p231 = scmp.lt.s32.totalorder %s21, 1
        %s232 = scalar_select %p231, %s21, 1
        %p233 = scmp.lt.s32.totalorder %s230, 15
        %s234 = scalar_select %p233, %s230, 15
        %s235 = smul.addr %s234, 2
        %s236 = smul.addr %s232, 32
        %s237 = sadd.s32 %s235, %s236
        %s238 = smul.addr %s237, 8
        %s239 = scalar_lea.vmem %s0, %s238
        %s240 = smul.u32 4, %s22
        %s241 = smul.u32 4, %s22
        %p242 = scmp.lt.s32.totalorder %s21, 1
        %s243 = scalar_select %p242, %s21, 1
        %p244 = scmp.lt.s32.totalorder %s241, 15
        %s245 = scalar_select %p244, %s241, 15
        %s246 = smul.addr %s245, 2
        %s247 = smul.addr %s243, 32
        %s248 = sadd.s32 %s246, %s247
        %s249 = smul.addr %s248, 8
        %s250 = scalar_lea.vmem %s1, %s249
        %s251 = smul.u32 4, %s22
        %p252 = scmp.lt.s32.totalorder %s21, 1
        %s253 = scalar_select %p252, %s21, 1
        %s254 = scalar_lea.vmem %s2, %s253
        %s255 = smul.u32 4, %s22
        %v256 = vld [vmem:[%s239] sm:$0xff]
        %v257 = vld [vmem:[%s239 + $0x8] sm:$0xff]
        %v258 = vld [vmem:[%s239 + $0x10] sm:$0xff]
        %v259 = vld [vmem:[%s239 + $0x18] sm:$0xff]
        %v260 = vld [vmem:[%s239 + $0x20] sm:$0xff]
        %v261 = vld [vmem:[%s239 + $0x28] sm:$0xff]
        %v262 = vld [vmem:[%s239 + $0x30] sm:$0xff]
        %v263 = vld [vmem:[%s239 + $0x38] sm:$0xff]
        %v264 = vld [vmem:[%s254] sm:$0x1]
        %v266 = vlaneseq
        %v267 = vshrl.u32 %v266, 7
        %v268 = vsub.s32 0, %v267
        %v269 = vrot.slane %v264, %v268
        %v271 = vmul.f32 %v256, %v269
        %v272 = vmul.f32 %v257, %v269
        %v273 = vmul.f32 %v258, %v269
        %v274 = vmul.f32 %v259, %v269
        %v275 = vmul.f32 %v260, %v269
        %v276 = vmul.f32 %v261, %v269
        %v277 = vmul.f32 %v262, %v269
        %v278 = vmul.f32 %v263, %v269
        %v279 = vld [vmem:[%s250] sm:$0xff]
        %v280 = vld [vmem:[%s250 + $0x8] sm:$0xff]
        %v281 = vld [vmem:[%s250 + $0x10] sm:$0xff]
        %v282 = vld [vmem:[%s250 + $0x18] sm:$0xff]
        %v283 = vld [vmem:[%s250 + $0x20] sm:$0xff]
        %v284 = vld [vmem:[%s250 + $0x28] sm:$0xff]
        %v285 = vld [vmem:[%s250 + $0x30] sm:$0xff]
        %v286 = vld [vmem:[%s250 + $0x38] sm:$0xff]
        %v287 = vadd.f32 %v271, %v279
        %v288 = vadd.f32 %v272, %v280
        %v289 = vadd.f32 %v273, %v281
        %v290 = vadd.f32 %v274, %v282
        %v291 = vadd.f32 %v275, %v283
        %v292 = vadd.f32 %v276, %v284
        %v293 = vadd.f32 %v277, %v285
        %v294 = vadd.f32 %v278, %v286
        %vm295 = vcmask 261120
        %296 = vst.msk [vmem:[%s229] sm:$0xff] %vm295, %v287
        %297 = vst.msk [vmem:[%s229 + $0x8] sm:$0xff] %vm295, %v288
        %298 = vst.msk [vmem:[%s229 + $0x10] sm:$0xff] %vm295, %v289
        %299 = vst.msk [vmem:[%s229 + $0x18] sm:$0xff] %vm295, %v290
        %300 = vst.msk [vmem:[%s229 + $0x20] sm:$0xff] %vm295, %v291
        %301 = vst.msk [vmem:[%s229 + $0x28] sm:$0xff] %vm295, %v292
        %302 = vst.msk [vmem:[%s229 + $0x30] sm:$0xff] %vm295, %v293
        %303 = vst.msk [vmem:[%s229 + $0x38] sm:$0xff] %vm295, %v294
        %s304 = sand.u32 %s121, 1
        %s305 = scalar_lea.sflag [#allocation3], %s304
        %s306 = sand.u32 %s121, 1
        %s307 = smul.addr %s306, 64
        %s308 = scalar_lea.vmem [#allocation2], %s307
        // Predicated region
        $region33: #{preact_bottleneck_forward.7} parent=31 // pred_check
          %p309 = pneg %p131
        $region34: #{preact_bottleneck_forward.7} parent=31 // pred_check_branch
          %311 = sbr.rel (%p309) target = $region36
        $region35: #{preact_bottleneck_forward.7} parent=31 // pred_region
          %s312 = smul.u32 4, %s22
          %s314 = ssub.s32 1024, 1024
          %315 = vsyncadd %s305, %s314
          %s316 = smul.addr %s312, 2
          %s317 = smul.addr %s21, 32
          %s318 = sadd.s32 %s316, %s317
          %s319 = smul.addr %s318, 128
          %s320 = scalar_lea.hbm %s3, %s319
          %s321 = sshll.u32 %s308, 4
          %s322 = int_to_ptr.vmem [resolvable:$true] %s321
          %327 = dma.vmem_to_hbm [thread:$0]  %s322, 1024, %s320, %s305, 128, 128, 8
        $region36: #{preact_bottleneck_forward.7} parent=31 // pred_fallthru
          _
      $region32: #{preact_bottleneck_forward.7} parent=5 // pred_fallthru
        _
      %p328 = scmp.le.s32.totalorder 2, %s12
      // Predicated region
      $region37: #{preact_bottleneck_forward.7} parent=5 // pred_check
        %p329 = pneg %p328
      $region38: #{preact_bottleneck_forward.7} parent=5 // pred_check_branch
        %331 = sbr.rel (%p329) target = $region40
      $region39: #{preact_bottleneck_forward.7} parent=5 // pred_region
        %s332 = ssub.s32 %s12, 2
        // Predicated region
        $region41: #{preact_bottleneck_forward.7} parent=39 // pred_check
          %p333 = pneg %p137
        $region42: #{preact_bottleneck_forward.7} parent=39 // pred_check_branch
          %335 = sbr.rel (%p333) target = $region44
        $region43: #{preact_bottleneck_forward.7} parent=39 // pred_region
          %s336 = sand.u32 %s122, 1
          %s337 = scalar_lea.sflag [#allocation3], %s336
          %s338 = sand.u32 %s122, 1
          %s339 = smul.addr %s338, 64
          %s340 = scalar_lea.vmem [#allocation2], %s339
          %341 = dma.done %s337, 1024
        $region44: #{preact_bottleneck_forward.7} parent=39 // pred_fallthru
          _
      $region40: #{preact_bottleneck_forward.7} parent=5 // pred_fallthru
        _
    $region6: #{preact_bottleneck_forward.7} parent=1 // loop_footer
      %s16 = sadd.s32 1, %s12
    $region7: #{preact_bottleneck_forward.7} parent=1 // loop_footer_branch
      %11 = sbr.rel target = $region3
    $region8: #{preact_bottleneck_forward.7} parent=1 // loop_exit
      _
    %342 = vsyncpa [#allocation3], 1
    %s343 = scalar_lea.sflag [#allocation3], 1
    %344 = vsyncpa %s343, 1

// kernel: preact_bottleneck_forward.4
$region0: #{preact_bottleneck_forward.4}
  #allocation0 [shape = 'u32[]', space=smem, size = 0x4, offset = 0x4, fixed_abs, tag = 'smem constant byte address 0x4 - core index']
  #allocation1 [shape = 'u32[144,128]{1,0:T(1,128)}', space=vmem, size = 0x12000, scoped, tag = 'internal scratch']
  %s0 = inlined_call_operand.vmem [shape: f32[512,8], index: 0, kind: input, shape index: {}]
  %s1 = inlined_call_operand.vmem [shape: f32[1,8], index: 1, kind: input, shape index: {}]
  %s2 = inlined_call_operand.vmem [shape: f32[1,8], index: 2, kind: input, shape index: {}]
  %s3 = inlined_call_operand.vmem [shape: bf16[8,40], index: 3, kind: input, shape index: {}]
  %s4 = inlined_call_operand.vmem [shape: f32[1,8], index: 4, kind: input, shape index: {}]
  %s5 = inlined_call_operand.vmem [shape: f32[1,8], index: 5, kind: input, shape index: {}]
  %s6 = inlined_call_operand.vmem [shape: bf16[512,8], index: 6, kind: output, shape index: {0}]
  %s7 = inlined_call_operand.vmem [shape: f32[512,32], index: 7, kind: output, shape index: {1}]
  %8 = xla_tuple %s6, %s7
  %s9 = sld [smem:[#allocation0]]
  $region42: #{preact_bottleneck_forward.4} parent=0
    _
  %s11 = ssub.s32 1, %s9
  %s12 = scalar_select 0, %s11, %s9
  // Predicated region
  $region2: #{preact_bottleneck_forward.4} parent=0 // pred_check
    _
  $region3: #{preact_bottleneck_forward.4} parent=0 // pred_check_branch
    %14 = sbr.rel (0) target = $region5
  $region4: #{preact_bottleneck_forward.4} parent=0 // pred_region
    _
  $region5: #{preact_bottleneck_forward.4} parent=0 // pred_fallthru
    _
  // Predicated region
  $region6: #{preact_bottleneck_forward.4} parent=0 // pred_check
    _
  $region7: #{preact_bottleneck_forward.4} parent=0 // pred_check_branch
    %16 = sbr.rel (0) target = $region9
  $region8: #{preact_bottleneck_forward.4} parent=0 // pred_region
    _
  $region9: #{preact_bottleneck_forward.4} parent=0 // pred_fallthru
    _
  // Predicated region
  $region10: #{preact_bottleneck_forward.4} parent=0 // pred_check
    _
  $region11: #{preact_bottleneck_forward.4} parent=0 // pred_check_branch
    %18 = sbr.rel (0) target = $region13
  $region12: #{preact_bottleneck_forward.4} parent=0 // pred_region
    _
  $region13: #{preact_bottleneck_forward.4} parent=0 // pred_fallthru
    _
  // Predicated region
  $region14: #{preact_bottleneck_forward.4} parent=0 // pred_check
    _
  $region15: #{preact_bottleneck_forward.4} parent=0 // pred_check_branch
    %20 = sbr.rel (0) target = $region17
  $region16: #{preact_bottleneck_forward.4} parent=0 // pred_region
    _
  $region17: #{preact_bottleneck_forward.4} parent=0 // pred_fallthru
    _
  // Predicated region
  $region18: #{preact_bottleneck_forward.4} parent=0 // pred_check
    _
  $region19: #{preact_bottleneck_forward.4} parent=0 // pred_check_branch
    %22 = sbr.rel (0) target = $region21
  $region20: #{preact_bottleneck_forward.4} parent=0 // pred_region
    _
  $region21: #{preact_bottleneck_forward.4} parent=0 // pred_fallthru
    _
  // Predicated region
  $region22: #{preact_bottleneck_forward.4} parent=0 // pred_check
    _
  $region23: #{preact_bottleneck_forward.4} parent=0 // pred_check_branch
    %24 = sbr.rel (0) target = $region25
  $region24: #{preact_bottleneck_forward.4} parent=0 // pred_region
    _
  $region25: #{preact_bottleneck_forward.4} parent=0 // pred_fallthru
    _
  %v26 = vld [vmem:[%s0] sm:$0xff]
  %v27 = vld [vmem:[%s0 + $0x8] sm:$0xff]
  %v28 = vld [vmem:[%s0 + $0x10] sm:$0xff]
  %v29 = vld [vmem:[%s0 + $0x18] sm:$0xff]
  %v30 = vld [vmem:[%s0 + $0x20] sm:$0xff]
  %v31 = vld [vmem:[%s0 + $0x28] sm:$0xff]
  %v32 = vld [vmem:[%s0 + $0x30] sm:$0xff]
  %v33 = vld [vmem:[%s0 + $0x38] sm:$0xff]
  %v34 = vld [vmem:[%s0 + $0x40] sm:$0xff]
  %v35 = vld [vmem:[%s0 + $0x48] sm:$0xff]
  %v36 = vld [vmem:[%s0 + $0x50] sm:$0xff]
  %v37 = vld [vmem:[%s0 + $0x58] sm:$0xff]
  %v38 = vld [vmem:[%s0 + $0x60] sm:$0xff]
  %v39 = vld [vmem:[%s0 + $0x68] sm:$0xff]
  %v40 = vld [vmem:[%s0 + $0x70] sm:$0xff]
  %v41 = vld [vmem:[%s0 + $0x78] sm:$0xff]
  %v42 = vld [vmem:[%s0 + $0x80] sm:$0xff]
  %v43 = vld [vmem:[%s0 + $0x88] sm:$0xff]
  %v44 = vld [vmem:[%s0 + $0x90] sm:$0xff]
  %v45 = vld [vmem:[%s0 + $0x98] sm:$0xff]
  %v46 = vld [vmem:[%s0 + $0xa0] sm:$0xff]
  %v47 = vld [vmem:[%s0 + $0xa8] sm:$0xff]
  %v48 = vld [vmem:[%s0 + $0xb0] sm:$0xff]
  %v49 = vld [vmem:[%s0 + $0xb8] sm:$0xff]
  %v50 = vld [vmem:[%s0 + $0xc0] sm:$0xff]
  %v51 = vld [vmem:[%s0 + $0xc8] sm:$0xff]
  %v52 = vld [vmem:[%s0 + $0xd0] sm:$0xff]
  %v53 = vld [vmem:[%s0 + $0xd8] sm:$0xff]
  %v54 = vld [vmem:[%s0 + $0xe0] sm:$0xff]
  %v55 = vld [vmem:[%s0 + $0xe8] sm:$0xff]
  %v56 = vld [vmem:[%s0 + $0xf0] sm:$0xff]
  %v57 = vld [vmem:[%s0 + $0xf8] sm:$0xff]
  %v58 = vld [vmem:[%s0 + $0x100] sm:$0xff]
  %v59 = vld [vmem:[%s0 + $0x108] sm:$0xff]
  %v60 = vld [vmem:[%s0 + $0x110] sm:$0xff]
  %v61 = vld [vmem:[%s0 + $0x118] sm:$0xff]
  %v62 = vld [vmem:[%s0 + $0x120] sm:$0xff]
  %v63 = vld [vmem:[%s0 + $0x128] sm:$0xff]
  %v64 = vld [vmem:[%s0 + $0x130] sm:$0xff]
  %v65 = vld [vmem:[%s0 + $0x138] sm:$0xff]
  %v66 = vld [vmem:[%s0 + $0x140] sm:$0xff]
  %v67 = vld [vmem:[%s0 + $0x148] sm:$0xff]
  %v68 = vld [vmem:[%s0 + $0x150] sm:$0xff]
  %v69 = vld [vmem:[%s0 + $0x158] sm:$0xff]
  %v70 = vld [vmem:[%s0 + $0x160] sm:$0xff]
  %v71 = vld [vmem:[%s0 + $0x168] sm:$0xff]
  %v72 = vld [vmem:[%s0 + $0x170] sm:$0xff]
  %v73 = vld [vmem:[%s0 + $0x178] sm:$0xff]
  %v74 = vld [vmem:[%s0 + $0x180] sm:$0xff]
  %v75 = vld [vmem:[%s0 + $0x188] sm:$0xff]
  %v76 = vld [vmem:[%s0 + $0x190] sm:$0xff]
  %v77 = vld [vmem:[%s0 + $0x198] sm:$0xff]
  %v78 = vld [vmem:[%s0 + $0x1a0] sm:$0xff]
  %v79 = vld [vmem:[%s0 + $0x1a8] sm:$0xff]
  %v80 = vld [vmem:[%s0 + $0x1b0] sm:$0xff]
  %v81 = vld [vmem:[%s0 + $0x1b8] sm:$0xff]
  %v82 = vld [vmem:[%s0 + $0x1c0] sm:$0xff]
  %v83 = vld [vmem:[%s0 + $0x1c8] sm:$0xff]
  %v84 = vld [vmem:[%s0 + $0x1d0] sm:$0xff]
  %v85 = vld [vmem:[%s0 + $0x1d8] sm:$0xff]
  %v86 = vld [vmem:[%s0 + $0x1e0] sm:$0xff]
  %v87 = vld [vmem:[%s0 + $0x1e8] sm:$0xff]
  %v88 = vld [vmem:[%s0 + $0x1f0] sm:$0xff]
  %v89 = vld [vmem:[%s0 + $0x1f8] sm:$0xff]
  %v90 = vld [vmem:[%s1] sm:$0x1]
  %v92 = vlaneseq
  %v93 = vshrl.u32 %v92, 7
  %v94 = vsub.s32 0, %v93
  %v95 = vrot.slane %v90, %v94
  %v97 = vmul.f32 %v26, %v95
  %v98 = vmul.f32 %v27, %v95
  %v99 = vmul.f32 %v28, %v95
  %v100 = vmul.f32 %v29, %v95
  %v101 = vmul.f32 %v30, %v95
  %v102 = vmul.f32 %v31, %v95
  %v103 = vmul.f32 %v32, %v95
  %v104 = vmul.f32 %v33, %v95
  %v105 = vmul.f32 %v34, %v95
  %v106 = vmul.f32 %v35, %v95
  %v107 = vmul.f32 %v36, %v95
  %v108 = vmul.f32 %v37, %v95
  %v109 = vmul.f32 %v38, %v95
  %v110 = vmul.f32 %v39, %v95
  %v111 = vmul.f32 %v40, %v95
  %v112 = vmul.f32 %v41, %v95
  %v113 = vmul.f32 %v42, %v95
  %v114 = vmul.f32 %v43, %v95
  %v115 = vmul.f32 %v44, %v95
  %v116 = vmul.f32 %v45, %v95
  %v117 = vmul.f32 %v46, %v95
  %v118 = vmul.f32 %v47, %v95
  %v119 = vmul.f32 %v48, %v95
  %v120 = vmul.f32 %v49, %v95
  %v121 = vmul.f32 %v50, %v95
  %v122 = vmul.f32 %v51, %v95
  %v123 = vmul.f32 %v52, %v95
  %v124 = vmul.f32 %v53, %v95
  %v125 = vmul.f32 %v54, %v95
  %v126 = vmul.f32 %v55, %v95
  %v127 = vmul.f32 %v56, %v95
  %v128 = vmul.f32 %v57, %v95
  %v129 = vmul.f32 %v58, %v95
  %v130 = vmul.f32 %v59, %v95
  %v131 = vmul.f32 %v60, %v95
  %v132 = vmul.f32 %v61, %v95
  %v133 = vmul.f32 %v62, %v95
  %v134 = vmul.f32 %v63, %v95
  %v135 = vmul.f32 %v64, %v95
  %v136 = vmul.f32 %v65, %v95
  %v137 = vmul.f32 %v66, %v95
  %v138 = vmul.f32 %v67, %v95
  %v139 = vmul.f32 %v68, %v95
  %v140 = vmul.f32 %v69, %v95
  %v141 = vmul.f32 %v70, %v95
  %v142 = vmul.f32 %v71, %v95
  %v143 = vmul.f32 %v72, %v95
  %v144 = vmul.f32 %v73, %v95
  %v145 = vmul.f32 %v74, %v95
  %v146 = vmul.f32 %v75, %v95
  %v147 = vmul.f32 %v76, %v95
  %v148 = vmul.f32 %v77, %v95
  %v149 = vmul.f32 %v78, %v95
  %v150 = vmul.f32 %v79, %v95
  %v151 = vmul.f32 %v80, %v95
  %v152 = vmul.f32 %v81, %v95
  %v153 = vmul.f32 %v82, %v95
  %v154 = vmul.f32 %v83, %v95
  %v155 = vmul.f32 %v84, %v95
  %v156 = vmul.f32 %v85, %v95
  %v157 = vmul.f32 %v86, %v95
  %v158 = vmul.f32 %v87, %v95
  %v159 = vmul.f32 %v88, %v95
  %v160 = vmul.f32 %v89, %v95
  %v161 = vld [vmem:[%s2] sm:$0x1]
  %v163 = vlaneseq
  %v164 = vshrl.u32 %v163, 7
  %v165 = vsub.s32 0, %v164
  %v166 = vrot.slane %v161, %v165
  %v168 = vadd.f32 %v97, %v166
  %v169 = vadd.f32 %v98, %v166
  %v170 = vadd.f32 %v99, %v166
  %v171 = vadd.f32 %v100, %v166
  %v172 = vadd.f32 %v101, %v166
  %v173 = vadd.f32 %v102, %v166
  %v174 = vadd.f32 %v103, %v166
  %v175 = vadd.f32 %v104, %v166
  %v176 = vadd.f32 %v105, %v166
  %v177 = vadd.f32 %v106, %v166
  %v178 = vadd.f32 %v107, %v166
  %v179 = vadd.f32 %v108, %v166
  %v180 = vadd.f32 %v109, %v166
  %v181 = vadd.f32 %v110, %v166
  %v182 = vadd.f32 %v111, %v166
  %v183 = vadd.f32 %v112, %v166
  %v184 = vadd.f32 %v113, %v166
  %v185 = vadd.f32 %v114, %v166
  %v186 = vadd.f32 %v115, %v166
  %v187 = vadd.f32 %v116, %v166
  %v188 = vadd.f32 %v117, %v166
  %v189 = vadd.f32 %v118, %v166
  %v190 = vadd.f32 %v119, %v166
  %v191 = vadd.f32 %v120, %v166
  %v192 = vadd.f32 %v121, %v166
  %v193 = vadd.f32 %v122, %v166
  %v194 = vadd.f32 %v123, %v166
  %v195 = vadd.f32 %v124, %v166
  %v196 = vadd.f32 %v125, %v166
  %v197 = vadd.f32 %v126, %v166
  %v198 = vadd.f32 %v127, %v166
  %v199 = vadd.f32 %v128, %v166
  %v200 = vadd.f32 %v129, %v166
  %v201 = vadd.f32 %v130, %v166
  %v202 = vadd.f32 %v131, %v166
  %v203 = vadd.f32 %v132, %v166
  %v204 = vadd.f32 %v133, %v166
  %v205 = vadd.f32 %v134, %v166
  %v206 = vadd.f32 %v135, %v166
  %v207 = vadd.f32 %v136, %v166
  %v208 = vadd.f32 %v137, %v166
  %v209 = vadd.f32 %v138, %v166
  %v210 = vadd.f32 %v139, %v166
  %v211 = vadd.f32 %v140, %v166
  %v212 = vadd.f32 %v141, %v166
  %v213 = vadd.f32 %v142, %v166
  %v214 = vadd.f32 %v143, %v166
  %v215 = vadd.f32 %v144, %v166
  %v216 = vadd.f32 %v145, %v166
  %v217 = vadd.f32 %v146, %v166
  %v218 = vadd.f32 %v147, %v166
  %v219 = vadd.f32 %v148, %v166
  %v220 = vadd.f32 %v149, %v166
  %v221 = vadd.f32 %v150, %v166
  %v222 = vadd.f32 %v151, %v166
  %v223 = vadd.f32 %v152, %v166
  %v224 = vadd.f32 %v153, %v166
  %v225 = vadd.f32 %v154, %v166
  %v226 = vadd.f32 %v155, %v166
  %v227 = vadd.f32 %v156, %v166
  %v228 = vadd.f32 %v157, %v166
  %v229 = vadd.f32 %v158, %v166
  %v230 = vadd.f32 %v159, %v166
  %v231 = vadd.f32 %v160, %v166
  %v232 = vmax.f32 %v168, 0.0
  %v233 = vmax.f32 %v169, 0.0
  %v234 = vmax.f32 %v170, 0.0
  %v235 = vmax.f32 %v171, 0.0
  %v236 = vmax.f32 %v172, 0.0
  %v237 = vmax.f32 %v173, 0.0
  %v238 = vmax.f32 %v174, 0.0
  %v239 = vmax.f32 %v175, 0.0
  %v240 = vmax.f32 %v176, 0.0
  %v241 = vmax.f32 %v177, 0.0
  %v242 = vmax.f32 %v178, 0.0
  %v243 = vmax.f32 %v179, 0.0
  %v244 = vmax.f32 %v180, 0.0
  %v245 = vmax.f32 %v181, 0.0
  %v246 = vmax.f32 %v182, 0.0
  %v247 = vmax.f32 %v183, 0.0
  %v248 = vmax.f32 %v184, 0.0
  %v249 = vmax.f32 %v185, 0.0
  %v250 = vmax.f32 %v186, 0.0
  %v251 = vmax.f32 %v187, 0.0
  %v252 = vmax.f32 %v188, 0.0
  %v253 = vmax.f32 %v189, 0.0
  %v254 = vmax.f32 %v190, 0.0
  %v255 = vmax.f32 %v191, 0.0
  %v256 = vmax.f32 %v192, 0.0
  %v257 = vmax.f32 %v193, 0.0
  %v258 = vmax.f32 %v194, 0.0
  %v259 = vmax.f32 %v195, 0.0
  %v260 = vmax.f32 %v196, 0.0
  %v261 = vmax.f32 %v197, 0.0
  %v262 = vmax.f32 %v198, 0.0
  %v263 = vmax.f32 %v199, 0.0
  %v264 = vmax.f32 %v200, 0.0
  %v265 = vmax.f32 %v201, 0.0
  %v266 = vmax.f32 %v202, 0.0
  %v267 = vmax.f32 %v203, 0.0
  %v268 = vmax.f32 %v204, 0.0
  %v269 = vmax.f32 %v205, 0.0
  %v270 = vmax.f32 %v206, 0.0
  %v271 = vmax.f32 %v207, 0.0
  %v272 = vmax.f32 %v208, 0.0
  %v273 = vmax.f32 %v209, 0.0
  %v274 = vmax.f32 %v210, 0.0
  %v275 = vmax.f32 %v211, 0.0
  %v276 = vmax.f32 %v212, 0.0
  %v277 = vmax.f32 %v213, 0.0
  %v278 = vmax.f32 %v214, 0.0
  %v279 = vmax.f32 %v215, 0.0
  %v280 = vmax.f32 %v216, 0.0
  %v281 = vmax.f32 %v217, 0.0
  %v282 = vmax.f32 %v218, 0.0
  %v283 = vmax.f32 %v219, 0.0
  %v284 = vmax.f32 %v220, 0.0
  %v285 = vmax.f32 %v221, 0.0
  %v286 = vmax.f32 %v222, 0.0
  %v287 = vmax.f32 %v223, 0.0
  %v288 = vmax.f32 %v224, 0.0
  %v289 = vmax.f32 %v225, 0.0
  %v290 = vmax.f32 %v226, 0.0
  %v291 = vmax.f32 %v227, 0.0
  %v292 = vmax.f32 %v228, 0.0
  %v293 = vmax.f32 %v229, 0.0
  %v294 = vmax.f32 %v230, 0.0
  %v295 = vmax.f32 %v231, 0.0
  %v296 = vpack.c.bf16 %v233, %v232
  %v297 = vpack.c.bf16 %v235, %v234
  %v298 = vpack.c.bf16 %v237, %v236
  %v299 = vpack.c.bf16 %v239, %v238
  %v300 = vpack.c.bf16 %v241, %v240
  %v301 = vpack.c.bf16 %v243, %v242
  %v302 = vpack.c.bf16 %v245, %v244
  %v303 = vpack.c.bf16 %v247, %v246
  %v304 = vpack.c.bf16 %v249, %v248
  %v305 = vpack.c.bf16 %v251, %v250
  %v306 = vpack.c.bf16 %v253, %v252
  %v307 = vpack.c.bf16 %v255, %v254
  %v308 = vpack.c.bf16 %v257, %v256
  %v309 = vpack.c.bf16 %v259, %v258
  %v310 = vpack.c.bf16 %v261, %v260
  %v311 = vpack.c.bf16 %v263, %v262
  %v312 = vpack.c.bf16 %v265, %v264
  %v313 = vpack.c.bf16 %v267, %v266
  %v314 = vpack.c.bf16 %v269, %v268
  %v315 = vpack.c.bf16 %v271, %v270
  %v316 = vpack.c.bf16 %v273, %v272
  %v317 = vpack.c.bf16 %v275, %v274
  %v318 = vpack.c.bf16 %v277, %v276
  %v319 = vpack.c.bf16 %v279, %v278
  %v320 = vpack.c.bf16 %v281, %v280
  %v321 = vpack.c.bf16 %v283, %v282
  %v322 = vpack.c.bf16 %v285, %v284
  %v323 = vpack.c.bf16 %v287, %v286
  %v324 = vpack.c.bf16 %v289, %v288
  %v325 = vpack.c.bf16 %v291, %v290
  %v326 = vpack.c.bf16 %v293, %v292
  %v327 = vpack.c.bf16 %v295, %v294
  %v328 = vld [vmem:[%s3] sm:$0xf]
  %vm329 = vcmask 64512
  %v331 = vsel %vm329, %v296, 0
  %v334 = vsel %vm329, %v297, 0
  %v337 = vsel %vm329, %v298, 0
  %v340 = vsel %vm329, %v299, 0
  %v343 = vsel %vm329, %v300, 0
  %v346 = vsel %vm329, %v301, 0
  %v349 = vsel %vm329, %v302, 0
  %v352 = vsel %vm329, %v303, 0
  %v355 = vsel %vm329, %v304, 0
  %v358 = vsel %vm329, %v305, 0
  %v361 = vsel %vm329, %v306, 0
  %v364 = vsel %vm329, %v307, 0
  %v367 = vsel %vm329, %v308, 0
  %v370 = vsel %vm329, %v309, 0
  %v373 = vsel %vm329, %v310, 0
  %v376 = vsel %vm329, %v311, 0
  %v379 = vsel %vm329, %v312, 0
  %v382 = vsel %vm329, %v313, 0
  %v385 = vsel %vm329, %v314, 0
  %v388 = vsel %vm329, %v315, 0
  %v391 = vsel %vm329, %v316, 0
  %v394 = vsel %vm329, %v317, 0
  %v397 = vsel %vm329, %v318, 0
  %v400 = vsel %vm329, %v319, 0
  %v403 = vsel %vm329, %v320, 0
  %v406 = vsel %vm329, %v321, 0
  %v409 = vsel %vm329, %v322, 0
  %v412 = vsel %vm329, %v323, 0
  %v415 = vsel %vm329, %v324, 0
  %v418 = vsel %vm329, %v325, 0
  %v421 = vsel %vm329, %v326, 0
  %v424 = vsel %vm329, %v327, 0
  %vm426 = vcmask 1043456
  %v428 = vsel %vm426, %v328, 0
  %430 = vmatprep.subr.bf16.mxu0 0
  %431 = vmatpush1.bf16.msra.mxu0 %v428
  %432 = vmatprep.subr.bf16.mxu0 0
  %433 = vmatpush1.bf16.msra.mxu0 0
  %434 = vmatprep.subr.bf16.mxu0 0
  %435 = vmatpush1.bf16.msra.mxu0 0
  %436 = vmatprep.subr.bf16.mxu0 0
  %437 = vmatpush1.bf16.msra.mxu0 0
  %438 = vmatprep.subr.bf16.mxu0 0
  %439 = vmatpush1.bf16.msra.mxu0 0
  %440 = vmatprep.subr.bf16.mxu0 0
  %441 = vmatpush1.bf16.msra.mxu0 0
  %442 = vmatprep.subr.bf16.mxu0 0
  %443 = vmatpush1.bf16.msra.mxu0 0
  %444 = vmatprep.subr.bf16.mxu0 0
  %445 = vmatpush1.bf16.msra.mxu0 0
  %446 = vmatprep.subr.bf16.mxu0 0
  %447 = vmatpush1.bf16.msra.mxu0 0
  %448 = vmatprep.subr.bf16.mxu0 0
  %449 = vmatpush1.bf16.msra.mxu0 0
  %450 = vmatprep.subr.bf16.mxu0 0
  %451 = vmatpush1.bf16.msra.mxu0 0
  %452 = vmatprep.subr.bf16.mxu0 0
  %453 = vmatpush1.bf16.msra.mxu0 0
  %454 = vmatprep.subr.bf16.mxu0 0
  %455 = vmatpush1.bf16.msra.mxu0 0
  %456 = vmatprep.subr.bf16.mxu0 0
  %457 = vmatpush1.bf16.msra.mxu0 0
  %458 = vmatprep.subr.bf16.mxu0 0
  %459 = vmatpush1.bf16.msra.mxu0 0
  %460 = vmatprep.subr.bf16.mxu0 0
  %461 = vmatpush1.bf16.msra.mxu0 0
  %462 = vmatprep.mubr.bf16.mxu0 0
  %463 = vmatmul.mubr.bf16.gmra.mrb[0].mxu0 %v331
  %v464 = vpop.f32.mrb[0].mxu0
  %v465 = vadd.f32 0.0, %v464
  %v466 = vpop.f32.mrb[0].mxu0
  %v467 = vpop.f32.mrb[0].mxu0
  %v468 = vadd.f32 0.0, %v467
  %v469 = vpop.f32.mrb[0].mxu0
  %470 = vmatprep.mubr.bf16.mxu0 0
  %471 = vmatmul.mubr.bf16.gmra.mrb[0].mxu0 %v334
  %v472 = vpop.f32.mrb[0].mxu0
  %v473 = vadd.f32 0.0, %v472
  %v474 = vpop.f32.mrb[0].mxu0
  %v475 = vpop.f32.mrb[0].mxu0
  %v476 = vadd.f32 0.0, %v475
  %v477 = vpop.f32.mrb[0].mxu0
  %478 = vmatprep.mubr.bf16.mxu0 0
  %479 = vmatmul.mubr.bf16.gmra.mrb[0].mxu0 %v337
  %v480 = vpop.f32.mrb[0].mxu0
  %v481 = vadd.f32 0.0, %v480
  %v482 = vpop.f32.mrb[0].mxu0
  %v483 = vpop.f32.mrb[0].mxu0
  %v484 = vadd.f32 0.0, %v483
  %v485 = vpop.f32.mrb[0].mxu0
  %486 = vmatprep.mubr.bf16.mxu0 0
  %487 = vmatmul.mubr.bf16.gmra.mrb[0].mxu0 %v340
  %v488 = vpop.f32.mrb[0].mxu0
  %v489 = vadd.f32 0.0, %v488
  %v490 = vpop.f32.mrb[0].mxu0
  %v491 = vpop.f32.mrb[0].mxu0
  %v492 = vadd.f32 0.0, %v491
  %v493 = vpop.f32.mrb[0].mxu0
  %494 = vmatprep.mubr.bf16.mxu0 0
  %495 = vmatmul.mubr.bf16.gmra.mrb[0].mxu0 %v343
  %v496 = vpop.f32.mrb[0].mxu0
  %v497 = vadd.f32 0.0, %v496
  %v498 = vpop.f32.mrb[0].mxu0
  %v499 = vpop.f32.mrb[0].mxu0
  %v500 = vadd.f32 0.0, %v499
  %v501 = vpop.f32.mrb[0].mxu0
  %502 = vmatprep.mubr.bf16.mxu0 0
  %503 = vmatmul.mubr.bf16.gmra.mrb[0].mxu0 %v346
  %v504 = vpop.f32.mrb[0].mxu0
  %v505 = vadd.f32 0.0, %v504
  %v506 = vpop.f32.mrb[0].mxu0
  %v507 = vpop.f32.mrb[0].mxu0
  %v508 = vadd.f32 0.0, %v507
  %v509 = vpop.f32.mrb[0].mxu0
  %510 = vmatprep.mubr.bf16.mxu0 0
  %511 = vmatmul.mubr.bf16.gmra.mrb[0].mxu0 %v349
  %v512 = vpop.f32.mrb[0].mxu0
  %v513 = vadd.f32 0.0, %v512
  %v514 = vpop.f32.mrb[0].mxu0
  %v515 = vpop.f32.mrb[0].mxu0
  %v516 = vadd.f32 0.0, %v515
  %v517 = vpop.f32.mrb[0].mxu0
  %518 = vmatprep.mubr.bf16.mxu0 0
  %519 = vmatmul.mubr.bf16.gmra.mrb[0].mxu0 %v352
  %v520 = vpop.f32.mrb[0].mxu0
  %v521 = vadd.f32 0.0, %v520
  %v522 = vpop.f32.mrb[0].mxu0
  %v523 = vpop.f32.mrb[0].mxu0
  %v524 = vadd.f32 0.0, %v523
  %v525 = vpop.f32.mrb[0].mxu0
  %526 = vmatprep.mubr.bf16.mxu0 0
  %527 = vmatmul.mubr.bf16.gmra.mrb[0].mxu0 %v355
  %v528 = vpop.f32.mrb[0].mxu0
  %v529 = vadd.f32 0.0, %v528
  %v530 = vpop.f32.mrb[0].mxu0
  %v531 = vpop.f32.mrb[0].mxu0
  %v532 = vadd.f32 0.0, %v531
  %v533 = vpop.f32.mrb[0].mxu0
  %534 = vmatprep.mubr.bf16.mxu0 0
  %535 = vmatmul.mubr.bf16.gmra.mrb[0].mxu0 %v358
  %v536 = vpop.f32.mrb[0].mxu0
  %v537 = vadd.f32 0.0, %v536
  %v538 = vpop.f32.mrb[0].mxu0
  %v539 = vpop.f32.mrb[0].mxu0
  %v540 = vadd.f32 0.0, %v539
  %v541 = vpop.f32.mrb[0].mxu0
  %542 = vmatprep.mubr.bf16.mxu0 0
  %543 = vmatmul.mubr.bf16.gmra.mrb[0].mxu0 %v361
  %v544 = vpop.f32.mrb[0].mxu0
  %v545 = vadd.f32 0.0, %v544
  %v546 = vpop.f32.mrb[0].mxu0
  %v547 = vpop.f32.mrb[0].mxu0
  %v548 = vadd.f32 0.0, %v547
  %v549 = vpop.f32.mrb[0].mxu0
  %550 = vmatprep.mubr.bf16.mxu0 0
  %551 = vmatmul.mubr.bf16.gmra.mrb[0].mxu0 %v364
  %v552 = vpop.f32.mrb[0].mxu0
  %v553 = vadd.f32 0.0, %v552
  %v554 = vpop.f32.mrb[0].mxu0
  %v555 = vpop.f32.mrb[0].mxu0
  %v556 = vadd.f32 0.0, %v555
  %v557 = vpop.f32.mrb[0].mxu0
  %558 = vmatprep.mubr.bf16.mxu0 0
  %559 = vmatmul.mubr.bf16.gmra.mrb[0].mxu0 %v367
  %v560 = vpop.f32.mrb[0].mxu0
  %v561 = vadd.f32 0.0, %v560
  %v562 = vpop.f32.mrb[0].mxu0
  %v563 = vpop.f32.mrb[0].mxu0
  %v564 = vadd.f32 0.0, %v563
  %v565 = vpop.f32.mrb[0].mxu0
  %566 = vmatprep.mubr.bf16.mxu0 0
  %567 = vmatmul.mubr.bf16.gmra.mrb[0].mxu0 %v370
  %v568 = vpop.f32.mrb[0].mxu0
  %v569 = vadd.f32 0.0, %v568
  %v570 = vpop.f32.mrb[0].mxu0
  %v571 = vpop.f32.mrb[0].mxu0
  %v572 = vadd.f32 0.0, %v571
  %v573 = vpop.f32.mrb[0].mxu0
  %574 = vmatprep.mubr.bf16.mxu0 0
  %575 = vmatmul.mubr.bf16.gmra.mrb[0].mxu0 %v373
  %v576 = vpop.f32.mrb[0].mxu0
  %v577 = vadd.f32 0.0, %v576
  %v578 = vpop.f32.mrb[0].mxu0
  %v579 = vpop.f32.mrb[0].mxu0
  %v580 = vadd.f32 0.0, %v579
  %v581 = vpop.f32.mrb[0].mxu0
  %582 = vmatprep.mubr.bf16.mxu0 0
  %583 = vmatmul.mubr.bf16.gmra.mrb[0].mxu0 %v376
  %v584 = vpop.f32.mrb[0].mxu0
  %v585 = vadd.f32 0.0, %v584
  %v586 = vpop.f32.mrb[0].mxu0
  %v587 = vpop.f32.mrb[0].mxu0
  %v588 = vadd.f32 0.0, %v587
  %v589 = vpop.f32.mrb[0].mxu0
  %590 = vmatprep.mubr.bf16.mxu0 0
  %591 = vmatmul.mubr.bf16.gmra.mrb[0].mxu0 %v379
  %v592 = vpop.f32.mrb[0].mxu0
  %v593 = vadd.f32 0.0, %v592
  %v594 = vpop.f32.mrb[0].mxu0
  %v595 = vpop.f32.mrb[0].mxu0
  %v596 = vadd.f32 0.0, %v595
  %v597 = vpop.f32.mrb[0].mxu0
  %598 = vmatprep.mubr.bf16.mxu0 0
  %599 = vmatmul.mubr.bf16.gmra.mrb[0].mxu0 %v382
  %v600 = vpop.f32.mrb[0].mxu0
  %v601 = vadd.f32 0.0, %v600
  %v602 = vpop.f32.mrb[0].mxu0
  %v603 = vpop.f32.mrb[0].mxu0
  %v604 = vadd.f32 0.0, %v603
  %v605 = vpop.f32.mrb[0].mxu0
  %606 = vmatprep.mubr.bf16.mxu0 0
  %607 = vmatmul.mubr.bf16.gmra.mrb[0].mxu0 %v385
  %v608 = vpop.f32.mrb[0].mxu0
  %v609 = vadd.f32 0.0, %v608
  %v610 = vpop.f32.mrb[0].mxu0
  %v611 = vpop.f32.mrb[0].mxu0
  %v612 = vadd.f32 0.0, %v611
  %v613 = vpop.f32.mrb[0].mxu0
  %614 = vmatprep.mubr.bf16.mxu0 0
  %615 = vmatmul.mubr.bf16.gmra.mrb[0].mxu0 %v388
  %v616 = vpop.f32.mrb[0].mxu0
  %v617 = vadd.f32 0.0, %v616
  %v618 = vpop.f32.mrb[0].mxu0
  %v619 = vpop.f32.mrb[0].mxu0
  %v620 = vadd.f32 0.0, %v619
  %v621 = vpop.f32.mrb[0].mxu0
  %622 = vmatprep.mubr.bf16.mxu0 0
  %623 = vmatmul.mubr.bf16.gmra.mrb[0].mxu0 %v391
  %v624 = vpop.f32.mrb[0].mxu0
  %v625 = vadd.f32 0.0, %v624
  %v626 = vpop.f32.mrb[0].mxu0
  %v627 = vpop.f32.mrb[0].mxu0
  %v628 = vadd.f32 0.0, %v627
  %v629 = vpop.f32.mrb[0].mxu0
  %630 = vmatprep.mubr.bf16.mxu0 0
  %631 = vmatmul.mubr.bf16.gmra.mrb[0].mxu0 %v394
  %v632 = vpop.f32.mrb[0].mxu0
  %v633 = vadd.f32 0.0, %v632
  %v634 = vpop.f32.mrb[0].mxu0
  %v635 = vpop.f32.mrb[0].mxu0
  %v636 = vadd.f32 0.0, %v635
  %v637 = vpop.f32.mrb[0].mxu0
  %638 = vmatprep.mubr.bf16.mxu0 0
  %639 = vmatmul.mubr.bf16.gmra.mrb[0].mxu0 %v397
  %v640 = vpop.f32.mrb[0].mxu0
  %v641 = vadd.f32 0.0, %v640
  %v642 = vpop.f32.mrb[0].mxu0
  %v643 = vpop.f32.mrb[0].mxu0
  %v644 = vadd.f32 0.0, %v643
  %v645 = vpop.f32.mrb[0].mxu0
  %646 = vmatprep.mubr.bf16.mxu0 0
  %647 = vmatmul.mubr.bf16.gmra.mrb[0].mxu0 %v400
  %v648 = vpop.f32.mrb[0].mxu0
  %v649 = vadd.f32 0.0, %v648
  %v650 = vpop.f32.mrb[0].mxu0
  %v651 = vpop.f32.mrb[0].mxu0
  %v652 = vadd.f32 0.0, %v651
  %v653 = vpop.f32.mrb[0].mxu0
  %654 = vmatprep.mubr.bf16.mxu0 0
  %655 = vmatmul.mubr.bf16.gmra.mrb[0].mxu0 %v403
  %v656 = vpop.f32.mrb[0].mxu0
  %v657 = vadd.f32 0.0, %v656
  %v658 = vpop.f32.mrb[0].mxu0
  %v659 = vpop.f32.mrb[0].mxu0
  %v660 = vadd.f32 0.0, %v659
  %v661 = vpop.f32.mrb[0].mxu0
  %662 = vmatprep.mubr.bf16.mxu0 0
  %663 = vmatmul.mubr.bf16.gmra.mrb[0].mxu0 %v406
  %v664 = vpop.f32.mrb[0].mxu0
  %v665 = vadd.f32 0.0, %v664
  %v666 = vpop.f32.mrb[0].mxu0
  %v667 = vpop.f32.mrb[0].mxu0
  %v668 = vadd.f32 0.0, %v667
  %v669 = vpop.f32.mrb[0].mxu0
  %670 = vmatprep.mubr.bf16.mxu0 0
  %671 = vmatmul.mubr.bf16.gmra.mrb[0].mxu0 %v409
  %v672 = vpop.f32.mrb[0].mxu0
  %v673 = vadd.f32 0.0, %v672
  %v674 = vpop.f32.mrb[0].mxu0
  %v675 = vpop.f32.mrb[0].mxu0
  %v676 = vadd.f32 0.0, %v675
  %v677 = vpop.f32.mrb[0].mxu0
  %678 = vmatprep.mubr.bf16.mxu0 0
  %679 = vmatmul.mubr.bf16.gmra.mrb[0].mxu0 %v412
  %v680 = vpop.f32.mrb[0].mxu0
  %v681 = vadd.f32 0.0, %v680
  %v682 = vpop.f32.mrb[0].mxu0
  %v683 = vpop.f32.mrb[0].mxu0
  %v684 = vadd.f32 0.0, %v683
  %v685 = vpop.f32.mrb[0].mxu0
  %686 = vmatprep.mubr.bf16.mxu0 0
  %687 = vmatmul.mubr.bf16.gmra.mrb[0].mxu0 %v415
  %v688 = vpop.f32.mrb[0].mxu0
  %v689 = vadd.f32 0.0, %v688
  %v690 = vpop.f32.mrb[0].mxu0
  %v691 = vpop.f32.mrb[0].mxu0
  %v692 = vadd.f32 0.0, %v691
  %v693 = vpop.f32.mrb[0].mxu0
  %694 = vmatprep.mubr.bf16.mxu0 0
  %695 = vmatmul.mubr.bf16.gmra.mrb[0].mxu0 %v418
  %v696 = vpop.f32.mrb[0].mxu0
  %v697 = vadd.f32 0.0, %v696
  %v698 = vpop.f32.mrb[0].mxu0
  %v699 = vpop.f32.mrb[0].mxu0
  %v700 = vadd.f32 0.0, %v699
  %v701 = vpop.f32.mrb[0].mxu0
  %702 = vmatprep.mubr.bf16.mxu0 0
  %703 = vmatmul.mubr.bf16.gmra.mrb[0].mxu0 %v421
  %v704 = vpop.f32.mrb[0].mxu0
  %v705 = vadd.f32 0.0, %v704
  %v706 = vpop.f32.mrb[0].mxu0
  %v707 = vpop.f32.mrb[0].mxu0
  %v708 = vadd.f32 0.0, %v707
  %v709 = vpop.f32.mrb[0].mxu0
  %710 = vmatprep.mubr.bf16.mxu0 0
  %711 = vmatmul.mubr.bf16.gmra.mrb[0].mxu0 %v424
  %v712 = vpop.f32.mrb[0].mxu0
  %v713 = vadd.f32 0.0, %v712
  %v714 = vpop.f32.mrb[0].mxu0
  %v715 = vpop.f32.mrb[0].mxu0
  %v716 = vadd.f32 0.0, %v715
  %v717 = vpop.f32.mrb[0].mxu0
  %718 = vdwg.mxu0
  %vm719 = vcmask 261120
  %720 = vst.msk [vmem:[%s7] sm:$0xff] %vm719, %v465
  %721 = vst.msk [vmem:[%s7 + $0x8] sm:$0xff] %vm719, %v468
  %722 = vst.msk [vmem:[%s7 + $0x10] sm:$0xff] %vm719, %v473
  %723 = vst.msk [vmem:[%s7 + $0x18] sm:$0xff] %vm719, %v476
  %724 = vst.msk [vmem:[%s7 + $0x20] sm:$0xff] %vm719, %v481
  %725 = vst.msk [vmem:[%s7 + $0x28] sm:$0xff] %vm719, %v484
  %726 = vst.msk [vmem:[%s7 + $0x30] sm:$0xff] %vm719, %v489
  %727 = vst.msk [vmem:[%s7 + $0x38] sm:$0xff] %vm719, %v492
  %728 = vst.msk [vmem:[%s7 + $0x40] sm:$0xff] %vm719, %v497
  %729 = vst.msk [vmem:[%s7 + $0x48] sm:$0xff] %vm719, %v500
  %730 = vst.msk [vmem:[%s7 + $0x50] sm:$0xff] %vm719, %v505
  %731 = vst.msk [vmem:[%s7 + $0x58] sm:$0xff] %vm719, %v508
  %732 = vst.msk [vmem:[%s7 + $0x60] sm:$0xff] %vm719, %v513
  %733 = vst.msk [vmem:[%s7 + $0x68] sm:$0xff] %vm719, %v516
  %734 = vst.msk [vmem:[%s7 + $0x70] sm:$0xff] %vm719, %v521
  %735 = vst.msk [vmem:[%s7 + $0x78] sm:$0xff] %vm719, %v524
  %736 = vst.msk [vmem:[%s7 + $0x80] sm:$0xff] %vm719, %v529
  %737 = vst.msk [vmem:[%s7 + $0x88] sm:$0xff] %vm719, %v532
  %738 = vst.msk [vmem:[%s7 + $0x90] sm:$0xff] %vm719, %v537
  %739 = vst.msk [vmem:[%s7 + $0x98] sm:$0xff] %vm719, %v540
  %740 = vst.msk [vmem:[%s7 + $0xa0] sm:$0xff] %vm719, %v545
  %741 = vst.msk [vmem:[%s7 + $0xa8] sm:$0xff] %vm719, %v548
  %742 = vst.msk [vmem:[%s7 + $0xb0] sm:$0xff] %vm719, %v553
  %743 = vst.msk [vmem:[%s7 + $0xb8] sm:$0xff] %vm719, %v556
  %744 = vst.msk [vmem:[%s7 + $0xc0] sm:$0xff] %vm719, %v561
  %745 = vst.msk [vmem:[%s7 + $0xc8] sm:$0xff] %vm719, %v564
  %746 = vst.msk [vmem:[%s7 + $0xd0] sm:$0xff] %vm719, %v569
  %747 = vst.msk [vmem:[%s7 + $0xd8] sm:$0xff] %vm719, %v572
  %748 = vst.msk [vmem:[%s7 + $0xe0] sm:$0xff] %vm719, %v577
  %749 = vst.msk [vmem:[%s7 + $0xe8] sm:$0xff] %vm719, %v580
  %750 = vst.msk [vmem:[%s7 + $0xf0] sm:$0xff] %vm719, %v585
  %751 = vst.msk [vmem:[%s7 + $0xf8] sm:$0xff] %vm719, %v588
  %752 = vst.msk [vmem:[%s7 + $0x100] sm:$0xff] %vm719, %v593
  %753 = vst.msk [vmem:[%s7 + $0x108] sm:$0xff] %vm719, %v596
  %754 = vst.msk [vmem:[%s7 + $0x110] sm:$0xff] %vm719, %v601
  %755 = vst.msk [vmem:[%s7 + $0x118] sm:$0xff] %vm719, %v604
  %756 = vst.msk [vmem:[%s7 + $0x120] sm:$0xff] %vm719, %v609
  %757 = vst.msk [vmem:[%s7 + $0x128] sm:$0xff] %vm719, %v612
  %758 = vst.msk [vmem:[%s7 + $0x130] sm:$0xff] %vm719, %v617
  %759 = vst.msk [vmem:[%s7 + $0x138] sm:$0xff] %vm719, %v620
  %760 = vst.msk [vmem:[%s7 + $0x140] sm:$0xff] %vm719, %v625
  %761 = vst.msk [vmem:[%s7 + $0x148] sm:$0xff] %vm719, %v628
  %762 = vst.msk [vmem:[%s7 + $0x150] sm:$0xff] %vm719, %v633
  %763 = vst.msk [vmem:[%s7 + $0x158] sm:$0xff] %vm719, %v636
  %764 = vst.msk [vmem:[%s7 + $0x160] sm:$0xff] %vm719, %v641
  %765 = vst.msk [vmem:[%s7 + $0x168] sm:$0xff] %vm719, %v644
  %766 = vst.msk [vmem:[%s7 + $0x170] sm:$0xff] %vm719, %v649
  %767 = vst.msk [vmem:[%s7 + $0x178] sm:$0xff] %vm719, %v652
  %768 = vst.msk [vmem:[%s7 + $0x180] sm:$0xff] %vm719, %v657
  %769 = vst.msk [vmem:[%s7 + $0x188] sm:$0xff] %vm719, %v660
  %770 = vst.msk [vmem:[%s7 + $0x190] sm:$0xff] %vm719, %v665
  %771 = vst.msk [vmem:[%s7 + $0x198] sm:$0xff] %vm719, %v668
  %772 = vst.msk [vmem:[%s7 + $0x1a0] sm:$0xff] %vm719, %v673
  %773 = vst.msk [vmem:[%s7 + $0x1a8] sm:$0xff] %vm719, %v676
  %774 = vst.msk [vmem:[%s7 + $0x1b0] sm:$0xff] %vm719, %v681
  %775 = vst.msk [vmem:[%s7 + $0x1b8] sm:$0xff] %vm719, %v684
  %776 = vst.msk [vmem:[%s7 + $0x1c0] sm:$0xff] %vm719, %v689
  %777 = vst.msk [vmem:[%s7 + $0x1c8] sm:$0xff] %vm719, %v692
  %778 = vst.msk [vmem:[%s7 + $0x1d0] sm:$0xff] %vm719, %v697
  %779 = vst.msk [vmem:[%s7 + $0x1d8] sm:$0xff] %vm719, %v700
  %780 = vst.msk [vmem:[%s7 + $0x1e0] sm:$0xff] %vm719, %v705
  %781 = vst.msk [vmem:[%s7 + $0x1e8] sm:$0xff] %vm719, %v708
  %782 = vst.msk [vmem:[%s7 + $0x1f0] sm:$0xff] %vm719, %v713
  %783 = vst.msk [vmem:[%s7 + $0x1f8] sm:$0xff] %vm719, %v716
  %v784 = vld [vmem:[%s4] sm:$0x1]
  %v786 = vlaneseq
  %v787 = vshrl.u32 %v786, 7
  %v788 = vsub.s32 0, %v787
  %v789 = vrot.slane %v784, %v788
  %790 = vrot.lane.b32.xlu0 %v789, 32
  %v791 = vpop.permute.xlu0 %790
  %v793 = vmul.f32 %v465, %v791
  %v794 = vmul.f32 %v468, %v791
  %v795 = vmul.f32 %v473, %v791
  %v796 = vmul.f32 %v476, %v791
  %v797 = vmul.f32 %v481, %v791
  %v798 = vmul.f32 %v484, %v791
  %v799 = vmul.f32 %v489, %v791
  %v800 = vmul.f32 %v492, %v791
  %v801 = vmul.f32 %v497, %v791
  %v802 = vmul.f32 %v500, %v791
  %v803 = vmul.f32 %v505, %v791
  %v804 = vmul.f32 %v508, %v791
  %v805 = vmul.f32 %v513, %v791
  %v806 = vmul.f32 %v516, %v791
  %v807 = vmul.f32 %v521, %v791
  %v808 = vmul.f32 %v524, %v791
  %v809 = vmul.f32 %v529, %v791
  %v810 = vmul.f32 %v532, %v791
  %v811 = vmul.f32 %v537, %v791
  %v812 = vmul.f32 %v540, %v791
  %v813 = vmul.f32 %v545, %v791
  %v814 = vmul.f32 %v548, %v791
  %v815 = vmul.f32 %v553, %v791
  %v816 = vmul.f32 %v556, %v791
  %v817 = vmul.f32 %v561, %v791
  %v818 = vmul.f32 %v564, %v791
  %v819 = vmul.f32 %v569, %v791
  %v820 = vmul.f32 %v572, %v791
  %v821 = vmul.f32 %v577, %v791
  %v822 = vmul.f32 %v580, %v791
  %v823 = vmul.f32 %v585, %v791
  %v824 = vmul.f32 %v588, %v791
  %v825 = vmul.f32 %v593, %v791
  %v826 = vmul.f32 %v596, %v791
  %v827 = vmul.f32 %v601, %v791
  %v828 = vmul.f32 %v604, %v791
  %v829 = vmul.f32 %v609, %v791
  %v830 = vmul.f32 %v612, %v791
  %v831 = vmul.f32 %v617, %v791
  %v832 = vmul.f32 %v620, %v791
  %v833 = vmul.f32 %v625, %v791
  %v834 = vmul.f32 %v628, %v791
  %v835 = vmul.f32 %v633, %v791
  %v836 = vmul.f32 %v636, %v791
  %v837 = vmul.f32 %v641, %v791
  %v838 = vmul.f32 %v644, %v791
  %v839 = vmul.f32 %v649, %v791
  %v840 = vmul.f32 %v652, %v791
  %v841 = vmul.f32 %v657, %v791
  %v842 = vmul.f32 %v660, %v791
  %v843 = vmul.f32 %v665, %v791
  %v844 = vmul.f32 %v668, %v791
  %v845 = vmul.f32 %v673, %v791
  %v846 = vmul.f32 %v676, %v791
  %v847 = vmul.f32 %v681, %v791
  %v848 = vmul.f32 %v684, %v791
  %v849 = vmul.f32 %v689, %v791
  %v850 = vmul.f32 %v692, %v791
  %v851 = vmul.f32 %v697, %v791
  %v852 = vmul.f32 %v700, %v791
  %v853 = vmul.f32 %v705, %v791
  %v854 = vmul.f32 %v708, %v791
  %v855 = vmul.f32 %v713, %v791
  %v856 = vmul.f32 %v716, %v791
  %v857 = vld [vmem:[%s5] sm:$0x1]
  %v859 = vlaneseq
  %v860 = vshrl.u32 %v859, 7
  %v861 = vsub.s32 0, %v860
  %v862 = vrot.slane %v857, %v861
  %863 = vrot.lane.b32.xlu0 %v862, 32
  %v864 = vpop.permute.xlu0 %863
  %v866 = vadd.f32 %v793, %v864
  %v867 = vadd.f32 %v794, %v864
  %v868 = vadd.f32 %v795, %v864
  %v869 = vadd.f32 %v796, %v864
  %v870 = vadd.f32 %v797, %v864
  %v871 = vadd.f32 %v798, %v864
  %v872 = vadd.f32 %v799, %v864
  %v873 = vadd.f32 %v800, %v864
  %v874 = vadd.f32 %v801, %v864
  %v875 = vadd.f32 %v802, %v864
  %v876 = vadd.f32 %v803, %v864
  %v877 = vadd.f32 %v804, %v864
  %v878 = vadd.f32 %v805, %v864
  %v879 = vadd.f32 %v806, %v864
  %v880 = vadd.f32 %v807, %v864
  %v881 = vadd.f32 %v808, %v864
  %v882 = vadd.f32 %v809, %v864
  %v883 = vadd.f32 %v810, %v864
  %v884 = vadd.f32 %v811, %v864
  %v885 = vadd.f32 %v812, %v864
  %v886 = vadd.f32 %v813, %v864
  %v887 = vadd.f32 %v814, %v864
  %v888 = vadd.f32 %v815, %v864
  %v889 = vadd.f32 %v816, %v864
  %v890 = vadd.f32 %v817, %v864
  %v891 = vadd.f32 %v818, %v864
  %v892 = vadd.f32 %v819, %v864
  %v893 = vadd.f32 %v820, %v864
  %v894 = vadd.f32 %v821, %v864
  %v895 = vadd.f32 %v822, %v864
  %v896 = vadd.f32 %v823, %v864
  %v897 = vadd.f32 %v824, %v864
  %v898 = vadd.f32 %v825, %v864
  %v899 = vadd.f32 %v826, %v864
  %v900 = vadd.f32 %v827, %v864
  %v901 = vadd.f32 %v828, %v864
  %v902 = vadd.f32 %v829, %v864
  %v903 = vadd.f32 %v830, %v864
  %v904 = vadd.f32 %v831, %v864
  %v905 = vadd.f32 %v832, %v864
  %v906 = vadd.f32 %v833, %v864
  %v907 = vadd.f32 %v834, %v864
  %v908 = vadd.f32 %v835, %v864
  %v909 = vadd.f32 %v836, %v864
  %v910 = vadd.f32 %v837, %v864
  %v911 = vadd.f32 %v838, %v864
  %v912 = vadd.f32 %v839, %v864
  %v913 = vadd.f32 %v840, %v864
  %v914 = vadd.f32 %v841, %v864
  %v915 = vadd.f32 %v842, %v864
  %v916 = vadd.f32 %v843, %v864
  %v917 = vadd.f32 %v844, %v864
  %v918 = vadd.f32 %v845, %v864
  %v919 = vadd.f32 %v846, %v864
  %v920 = vadd.f32 %v847, %v864
  %v921 = vadd.f32 %v848, %v864
  %v922 = vadd.f32 %v849, %v864
  %v923 = vadd.f32 %v850, %v864
  %v924 = vadd.f32 %v851, %v864
  %v925 = vadd.f32 %v852, %v864
  %v926 = vadd.f32 %v853, %v864
  %v927 = vadd.f32 %v854, %v864
  %v928 = vadd.f32 %v855, %v864
  %v929 = vadd.f32 %v856, %v864
  %v930 = vmax.f32 %v866, 0.0
  %v931 = vmax.f32 %v867, 0.0
  %v932 = vmax.f32 %v868, 0.0
  %v933 = vmax.f32 %v869, 0.0
  %v934 = vmax.f32 %v870, 0.0
  %v935 = vmax.f32 %v871, 0.0
  %v936 = vmax.f32 %v872, 0.0
  %v937 = vmax.f32 %v873, 0.0
  %v938 = vmax.f32 %v874, 0.0
  %v939 = vmax.f32 %v875, 0.0
  %v940 = vmax.f32 %v876, 0.0
  %v941 = vmax.f32 %v877, 0.0
  %v942 = vmax.f32 %v878, 0.0
  %v943 = vmax.f32 %v879, 0.0
  %v944 = vmax.f32 %v880, 0.0
  %v945 = vmax.f32 %v881, 0.0
  %v946 = vmax.f32 %v882, 0.0
  %v947 = vmax.f32 %v883, 0.0
  %v948 = vmax.f32 %v884, 0.0
  %v949 = vmax.f32 %v885, 0.0
  %v950 = vmax.f32 %v886, 0.0
  %v951 = vmax.f32 %v887, 0.0
  %v952 = vmax.f32 %v888, 0.0
  %v953 = vmax.f32 %v889, 0.0
  %v954 = vmax.f32 %v890, 0.0
  %v955 = vmax.f32 %v891, 0.0
  %v956 = vmax.f32 %v892, 0.0
  %v957 = vmax.f32 %v893, 0.0
  %v958 = vmax.f32 %v894, 0.0
  %v959 = vmax.f32 %v895, 0.0
  %v960 = vmax.f32 %v896, 0.0
  %v961 = vmax.f32 %v897, 0.0
  %v962 = vmax.f32 %v898, 0.0
  %v963 = vmax.f32 %v899, 0.0
  %v964 = vmax.f32 %v900, 0.0
  %v965 = vmax.f32 %v901, 0.0
  %v966 = vmax.f32 %v902, 0.0
  %v967 = vmax.f32 %v903, 0.0
  %v968 = vmax.f32 %v904, 0.0
  %v969 = vmax.f32 %v905, 0.0
  %v970 = vmax.f32 %v906, 0.0
  %v971 = vmax.f32 %v907, 0.0
  %v972 = vmax.f32 %v908, 0.0
  %v973 = vmax.f32 %v909, 0.0
  %v974 = vmax.f32 %v910, 0.0
  %v975 = vmax.f32 %v911, 0.0
  %v976 = vmax.f32 %v912, 0.0
  %v977 = vmax.f32 %v913, 0.0
  %v978 = vmax.f32 %v914, 0.0
  %v979 = vmax.f32 %v915, 0.0
  %v980 = vmax.f32 %v916, 0.0
  %v981 = vmax.f32 %v917, 0.0
  %v982 = vmax.f32 %v918, 0.0
  %v983 = vmax.f32 %v919, 0.0
  %v984 = vmax.f32 %v920, 0.0
  %v985 = vmax.f32 %v921, 0.0
  %v986 = vmax.f32 %v922, 0.0
  %v987 = vmax.f32 %v923, 0.0
  %v988 = vmax.f32 %v924, 0.0
  %v989 = vmax.f32 %v925, 0.0
  %v990 = vmax.f32 %v926, 0.0
  %v991 = vmax.f32 %v927, 0.0
  %v992 = vmax.f32 %v928, 0.0
  %v993 = vmax.f32 %v929, 0.0
  %v994 = vpack.c.bf16 %v931, %v930
  %v995 = vpack.c.bf16 %v933, %v932
  %v996 = vpack.c.bf16 %v935, %v934
  %v997 = vpack.c.bf16 %v937, %v936
  %v998 = vpack.c.bf16 %v939, %v938
  %v999 = vpack.c.bf16 %v941, %v940
  %v1000 = vpack.c.bf16 %v943, %v942
  %v1001 = vpack.c.bf16 %v945, %v944
  %v1002 = vpack.c.bf16 %v947, %v946
  %v1003 = vpack.c.bf16 %v949, %v948
  %v1004 = vpack.c.bf16 %v951, %v950
  %v1005 = vpack.c.bf16 %v953, %v952
  %v1006 = vpack.c.bf16 %v955, %v954
  %v1007 = vpack.c.bf16 %v957, %v956
  %v1008 = vpack.c.bf16 %v959, %v958
  %v1009 = vpack.c.bf16 %v961, %v960
  %v1010 = vpack.c.bf16 %v963, %v962
  %v1011 = vpack.c.bf16 %v965, %v964
  %v1012 = vpack.c.bf16 %v967, %v966
  %v1013 = vpack.c.bf16 %v969, %v968
  %v1014 = vpack.c.bf16 %v971, %v970
  %v1015 = vpack.c.bf16 %v973, %v972
  %v1016 = vpack.c.bf16 %v975, %v974
  %v1017 = vpack.c.bf16 %v977, %v976
  %v1018 = vpack.c.bf16 %v979, %v978
  %v1019 = vpack.c.bf16 %v981, %v980
  %v1020 = vpack.c.bf16 %v983, %v982
  %v1021 = vpack.c.bf16 %v985, %v984
  %v1022 = vpack.c.bf16 %v987, %v986
  %v1023 = vpack.c.bf16 %v989, %v988
  %v1024 = vpack.c.bf16 %v991, %v990
  %v1025 = vpack.c.bf16 %v993, %v992
  %v1058 = vunpack.c.l.b16 %v994
  %v1059 = vunpack.c.h.b16 %v994
  %v1060 = vunpack.c.l.b16 %v995
  %v1061 = vunpack.c.h.b16 %v995
  %v1062 = vunpack.c.l.b16 %v996
  %v1063 = vunpack.c.h.b16 %v996
  %v1064 = vunpack.c.l.b16 %v997
  %v1065 = vunpack.c.h.b16 %v997
  %v1066 = vunpack.c.l.b16 %v998
  %v1067 = vunpack.c.h.b16 %v998
  %v1068 = vunpack.c.l.b16 %v999
  %v1069 = vunpack.c.h.b16 %v999
  %v1070 = vunpack.c.l.b16 %v1000
  %v1071 = vunpack.c.h.b16 %v1000
  %v1072 = vunpack.c.l.b16 %v1001
  %v1073 = vunpack.c.h.b16 %v1001
  %v1074 = vunpack.c.l.b16 %v1002
  %v1075 = vunpack.c.h.b16 %v1002
  %v1076 = vunpack.c.l.b16 %v1003
  %v1077 = vunpack.c.h.b16 %v1003
  %v1078 = vunpack.c.l.b16 %v1004
  %v1079 = vunpack.c.h.b16 %v1004
  %v1080 = vunpack.c.l.b16 %v1005
  %v1081 = vunpack.c.h.b16 %v1005
  %v1082 = vunpack.c.l.b16 %v1006
  %v1083 = vunpack.c.h.b16 %v1006
  %v1084 = vunpack.c.l.b16 %v1007
  %v1085 = vunpack.c.h.b16 %v1007
  %v1086 = vunpack.c.l.b16 %v1008
  %v1087 = vunpack.c.h.b16 %v1008
  %v1088 = vunpack.c.l.b16 %v1009
  %v1089 = vunpack.c.h.b16 %v1009
  %v1090 = vunpack.c.l.b16 %v1010
  %v1091 = vunpack.c.h.b16 %v1010
  %v1092 = vunpack.c.l.b16 %v1011
  %v1093 = vunpack.c.h.b16 %v1011
  %v1094 = vunpack.c.l.b16 %v1012
  %v1095 = vunpack.c.h.b16 %v1012
  %v1096 = vunpack.c.l.b16 %v1013
  %v1097 = vunpack.c.h.b16 %v1013
  %v1098 = vunpack.c.l.b16 %v1014
  %v1099 = vunpack.c.h.b16 %v1014
  %v1100 = vunpack.c.l.b16 %v1015
  %v1101 = vunpack.c.h.b16 %v1015
  %v1102 = vunpack.c.l.b16 %v1016
  %v1103 = vunpack.c.h.b16 %v1016
  %v1104 = vunpack.c.l.b16 %v1017
  %v1105 = vunpack.c.h.b16 %v1017
  %v1106 = vunpack.c.l.b16 %v1018
  %v1107 = vunpack.c.h.b16 %v1018
  %v1108 = vunpack.c.l.b16 %v1019
  %v1109 = vunpack.c.h.b16 %v1019
  %v1110 = vunpack.c.l.b16 %v1020
  %v1111 = vunpack.c.h.b16 %v1020
  %v1112 = vunpack.c.l.b16 %v1021
  %v1113 = vunpack.c.h.b16 %v1021
  %v1114 = vunpack.c.l.b16 %v1022
  %v1115 = vunpack.c.h.b16 %v1022
  %v1116 = vunpack.c.l.b16 %v1023
  %v1117 = vunpack.c.h.b16 %v1023
  %v1118 = vunpack.c.l.b16 %v1024
  %v1119 = vunpack.c.h.b16 %v1024
  %v1120 = vunpack.c.l.b16 %v1025
  %v1121 = vunpack.c.h.b16 %v1025
  %v1122 = vpack.c.b16 %v1058, %v1058
  %v1123 = vpack.c.b16 %v1059, %v1059
  %v1124 = vpack.c.b16 %v1060, %v1060
  %v1125 = vpack.c.b16 %v1061, %v1061
  %v1126 = vpack.c.b16 %v1062, %v1062
  %v1127 = vpack.c.b16 %v1063, %v1063
  %v1128 = vpack.c.b16 %v1064, %v1064
  %v1129 = vpack.c.b16 %v1065, %v1065
  %v1130 = vpack.c.b16 %v1066, %v1066
  %v1131 = vpack.c.b16 %v1067, %v1067
  %v1132 = vpack.c.b16 %v1068, %v1068
  %v1133 = vpack.c.b16 %v1069, %v1069
  %v1134 = vpack.c.b16 %v1070, %v1070
  %v1135 = vpack.c.b16 %v1071, %v1071
  %v1136 = vpack.c.b16 %v1072, %v1072
  %v1137 = vpack.c.b16 %v1073, %v1073
  %v1138 = vpack.c.b16 %v1074, %v1074
  %v1139 = vpack.c.b16 %v1075, %v1075
  %v1140 = vpack.c.b16 %v1076, %v1076
  %v1141 = vpack.c.b16 %v1077, %v1077
  %v1142 = vpack.c.b16 %v1078, %v1078
  %v1143 = vpack.c.b16 %v1079, %v1079
  %v1144 = vpack.c.b16 %v1080, %v1080
  %v1145 = vpack.c.b16 %v1081, %v1081
  %v1146 = vpack.c.b16 %v1082, %v1082
  %v1147 = vpack.c.b16 %v1083, %v1083
  %v1148 = vpack.c.b16 %v1084, %v1084
  %v1149 = vpack.c.b16 %v1085, %v1085
  %v1150 = vpack.c.b16 %v1086, %v1086
  %v1151 = vpack.c.b16 %v1087, %v1087
  %v1152 = vpack.c.b16 %v1088, %v1088
  %v1153 = vpack.c.b16 %v1089, %v1089
  %v1154 = vpack.c.b16 %v1090, %v1090
  %v1155 = vpack.c.b16 %v1091, %v1091
  %v1156 = vpack.c.b16 %v1092, %v1092
  %v1157 = vpack.c.b16 %v1093, %v1093
  %v1158 = vpack.c.b16 %v1094, %v1094
  %v1159 = vpack.c.b16 %v1095, %v1095
  %v1160 = vpack.c.b16 %v1096, %v1096
  %v1161 = vpack.c.b16 %v1097, %v1097
  %v1162 = vpack.c.b16 %v1098, %v1098
  %v1163 = vpack.c.b16 %v1099, %v1099
  %v1164 = vpack.c.b16 %v1100, %v1100
  %v1165 = vpack.c.b16 %v1101, %v1101
  %v1166 = vpack.c.b16 %v1102, %v1102
  %v1167 = vpack.c.b16 %v1103, %v1103
  %v1168 = vpack.c.b16 %v1104, %v1104
  %v1169 = vpack.c.b16 %v1105, %v1105
  %v1170 = vpack.c.b16 %v1106, %v1106
  %v1171 = vpack.c.b16 %v1107, %v1107
  %v1172 = vpack.c.b16 %v1108, %v1108
  %v1173 = vpack.c.b16 %v1109, %v1109
  %v1174 = vpack.c.b16 %v1110, %v1110
  %v1175 = vpack.c.b16 %v1111, %v1111
  %v1176 = vpack.c.b16 %v1112, %v1112
  %v1177 = vpack.c.b16 %v1113, %v1113
  %v1178 = vpack.c.b16 %v1114, %v1114
  %v1179 = vpack.c.b16 %v1115, %v1115
  %v1180 = vpack.c.b16 %v1116, %v1116
  %v1181 = vpack.c.b16 %v1117, %v1117
  %v1182 = vpack.c.b16 %v1118, %v1118
  %v1183 = vpack.c.b16 %v1119, %v1119
  %v1184 = vpack.c.b16 %v1120, %v1120
  %v1185 = vpack.c.b16 %v1121, %v1121
  %1186 = vrot.lane.b32.xlu0 %v1122, 96
  %v1187 = vpop.permute.xlu0 %1186
  %1188 = vrot.lane.b32.xlu0 %v1123, 96
  %v1189 = vpop.permute.xlu0 %1188
  %1190 = vrot.lane.b32.xlu0 %v1124, 96
  %v1191 = vpop.permute.xlu0 %1190
  %1192 = vrot.lane.b32.xlu0 %v1125, 96
  %v1193 = vpop.permute.xlu0 %1192
  %1194 = vrot.lane.b32.xlu0 %v1126, 96
  %v1195 = vpop.permute.xlu0 %1194
  %1196 = vrot.lane.b32.xlu0 %v1127, 96
  %v1197 = vpop.permute.xlu0 %1196
  %1198 = vrot.lane.b32.xlu0 %v1128, 96
  %v1199 = vpop.permute.xlu0 %1198
  %1200 = vrot.lane.b32.xlu0 %v1129, 96
  %v1201 = vpop.permute.xlu0 %1200
  %1202 = vrot.lane.b32.xlu0 %v1130, 96
  %v1203 = vpop.permute.xlu0 %1202
  %1204 = vrot.lane.b32.xlu0 %v1131, 96
  %v1205 = vpop.permute.xlu0 %1204
  %1206 = vrot.lane.b32.xlu0 %v1132, 96
  %v1207 = vpop.permute.xlu0 %1206
  %1208 = vrot.lane.b32.xlu0 %v1133, 96
  %v1209 = vpop.permute.xlu0 %1208
  %1210 = vrot.lane.b32.xlu0 %v1134, 96
  %v1211 = vpop.permute.xlu0 %1210
  %1212 = vrot.lane.b32.xlu0 %v1135, 96
  %v1213 = vpop.permute.xlu0 %1212
  %1214 = vrot.lane.b32.xlu0 %v1136, 96
  %v1215 = vpop.permute.xlu0 %1214
  %1216 = vrot.lane.b32.xlu0 %v1137, 96
  %v1217 = vpop.permute.xlu0 %1216
  %1218 = vrot.lane.b32.xlu0 %v1138, 96
  %v1219 = vpop.permute.xlu0 %1218
  %1220 = vrot.lane.b32.xlu0 %v1139, 96
  %v1221 = vpop.permute.xlu0 %1220
  %1222 = vrot.lane.b32.xlu0 %v1140, 96
  %v1223 = vpop.permute.xlu0 %1222
  %1224 = vrot.lane.b32.xlu0 %v1141, 96
  %v1225 = vpop.permute.xlu0 %1224
  %1226 = vrot.lane.b32.xlu0 %v1142, 96
  %v1227 = vpop.permute.xlu0 %1226
  %1228 = vrot.lane.b32.xlu0 %v1143, 96
  %v1229 = vpop.permute.xlu0 %1228
  %1230 = vrot.lane.b32.xlu0 %v1144, 96
  %v1231 = vpop.permute.xlu0 %1230
  %1232 = vrot.lane.b32.xlu0 %v1145, 96
  %v1233 = vpop.permute.xlu0 %1232
  %1234 = vrot.lane.b32.xlu0 %v1146, 96
  %v1235 = vpop.permute.xlu0 %1234
  %1236 = vrot.lane.b32.xlu0 %v1147, 96
  %v1237 = vpop.permute.xlu0 %1236
  %1238 = vrot.lane.b32.xlu0 %v1148, 96
  %v1239 = vpop.permute.xlu0 %1238
  %1240 = vrot.lane.b32.xlu0 %v1149, 96
  %v1241 = vpop.permute.xlu0 %1240
  %1242 = vrot.lane.b32.xlu0 %v1150, 96
  %v1243 = vpop.permute.xlu0 %1242
  %1244 = vrot.lane.b32.xlu0 %v1151, 96
  %v1245 = vpop.permute.xlu0 %1244
  %1246 = vrot.lane.b32.xlu0 %v1152, 96
  %v1247 = vpop.permute.xlu0 %1246
  %1248 = vrot.lane.b32.xlu0 %v1153, 96
  %v1249 = vpop.permute.xlu0 %1248
  %1250 = vrot.lane.b32.xlu0 %v1154, 96
  %v1251 = vpop.permute.xlu0 %1250
  %1252 = vrot.lane.b32.xlu0 %v1155, 96
  %v1253 = vpop.permute.xlu0 %1252
  %1254 = vrot.lane.b32.xlu0 %v1156, 96
  %v1255 = vpop.permute.xlu0 %1254
  %1256 = vrot.lane.b32.xlu0 %v1157, 96
  %v1257 = vpop.permute.xlu0 %1256
  %1258 = vrot.lane.b32.xlu0 %v1158, 96
  %v1259 = vpop.permute.xlu0 %1258
  %1260 = vrot.lane.b32.xlu0 %v1159, 96
  %v1261 = vpop.permute.xlu0 %1260
  %1262 = vrot.lane.b32.xlu0 %v1160, 96
  %v1263 = vpop.permute.xlu0 %1262
  %1264 = vrot.lane.b32.xlu0 %v1161, 96
  %v1265 = vpop.permute.xlu0 %1264
  %1266 = vrot.lane.b32.xlu0 %v1162, 96
  %v1267 = vpop.permute.xlu0 %1266
  %1268 = vrot.lane.b32.xlu0 %v1163, 96
  %v1269 = vpop.permute.xlu0 %1268
  %1270 = vrot.lane.b32.xlu0 %v1164, 96
  %v1271 = vpop.permute.xlu0 %1270
  %1272 = vrot.lane.b32.xlu0 %v1165, 96
  %v1273 = vpop.permute.xlu0 %1272
  %1274 = vrot.lane.b32.xlu0 %v1166, 96
  %v1275 = vpop.permute.xlu0 %1274
  %1276 = vrot.lane.b32.xlu0 %v1167, 96
  %v1277 = vpop.permute.xlu0 %1276
  %1278 = vrot.lane.b32.xlu0 %v1168, 96
  %v1279 = vpop.permute.xlu0 %1278
  %1280 = vrot.lane.b32.xlu0 %v1169, 96
  %v1281 = vpop.permute.xlu0 %1280
  %1282 = vrot.lane.b32.xlu0 %v1170, 96
  %v1283 = vpop.permute.xlu0 %1282
  %1284 = vrot.lane.b32.xlu0 %v1171, 96
  %v1285 = vpop.permute.xlu0 %1284
  %1286 = vrot.lane.b32.xlu0 %v1172, 96
  %v1287 = vpop.permute.xlu0 %1286
  %1288 = vrot.lane.b32.xlu0 %v1173, 96
  %v1289 = vpop.permute.xlu0 %1288
  %1290 = vrot.lane.b32.xlu0 %v1174, 96
  %v1291 = vpop.permute.xlu0 %1290
  %1292 = vrot.lane.b32.xlu0 %v1175, 96
  %v1293 = vpop.permute.xlu0 %1292
  %1294 = vrot.lane.b32.xlu0 %v1176, 96
  %v1295 = vpop.permute.xlu0 %1294
  %1296 = vrot.lane.b32.xlu0 %v1177, 96
  %v1297 = vpop.permute.xlu0 %1296
  %1298 = vrot.lane.b32.xlu0 %v1178, 96
  %v1299 = vpop.permute.xlu0 %1298
  %1300 = vrot.lane.b32.xlu0 %v1179, 96
  %v1301 = vpop.permute.xlu0 %1300
  %1302 = vrot.lane.b32.xlu0 %v1180, 96
  %v1303 = vpop.permute.xlu0 %1302
  %1304 = vrot.lane.b32.xlu0 %v1181, 96
  %v1305 = vpop.permute.xlu0 %1304
  %1306 = vrot.lane.b32.xlu0 %v1182, 96
  %v1307 = vpop.permute.xlu0 %1306
  %1308 = vrot.lane.b32.xlu0 %v1183, 96
  %v1309 = vpop.permute.xlu0 %1308
  %1310 = vrot.lane.b32.xlu0 %v1184, 96
  %v1311 = vpop.permute.xlu0 %1310
  %1312 = vrot.lane.b32.xlu0 %v1185, 96
  %v1313 = vpop.permute.xlu0 %1312
  %vm1378 = vcmask 60416
  %1379 = vst.msk [vmem:[%s6] sm:$0xf] %vm1378, %v1187
  %1380 = vst.msk [vmem:[%s6 + $0x4] sm:$0xf] %vm1378, %v1189
  %1381 = vst.msk [vmem:[%s6 + $0x8] sm:$0xf] %vm1378, %v1191
  %1382 = vst.msk [vmem:[%s6 + $0xc] sm:$0xf] %vm1378, %v1193
  %1383 = vst.msk [vmem:[%s6 + $0x10] sm:$0xf] %vm1378, %v1195
  %1384 = vst.msk [vmem:[%s6 + $0x14] sm:$0xf] %vm1378, %v1197
  %1385 = vst.msk [vmem:[%s6 + $0x18] sm:$0xf] %vm1378, %v1199
  %1386 = vst.msk [vmem:[%s6 + $0x1c] sm:$0xf] %vm1378, %v1201
  %1387 = vst.msk [vmem:[%s6 + $0x20] sm:$0xf] %vm1378, %v1203
  %1388 = vst.msk [vmem:[%s6 + $0x24] sm:$0xf] %vm1378, %v1205
  %1389 = vst.msk [vmem:[%s6 + $0x28] sm:$0xf] %vm1378, %v1207
  %1390 = vst.msk [vmem:[%s6 + $0x2c] sm:$0xf] %vm1378, %v1209
  %1391 = vst.msk [vmem:[%s6 + $0x30] sm:$0xf] %vm1378, %v1211
  %1392 = vst.msk [vmem:[%s6 + $0x34] sm:$0xf] %vm1378, %v1213
  %1393 = vst.msk [vmem:[%s6 + $0x38] sm:$0xf] %vm1378, %v1215
  %1394 = vst.msk [vmem:[%s6 + $0x3c] sm:$0xf] %vm1378, %v1217
  %1395 = vst.msk [vmem:[%s6 + $0x40] sm:$0xf] %vm1378, %v1219
  %1396 = vst.msk [vmem:[%s6 + $0x44] sm:$0xf] %vm1378, %v1221
  %1397 = vst.msk [vmem:[%s6 + $0x48] sm:$0xf] %vm1378, %v1223
  %1398 = vst.msk [vmem:[%s6 + $0x4c] sm:$0xf] %vm1378, %v1225
  %1399 = vst.msk [vmem:[%s6 + $0x50] sm:$0xf] %vm1378, %v1227
  %1400 = vst.msk [vmem:[%s6 + $0x54] sm:$0xf] %vm1378, %v1229
  %1401 = vst.msk [vmem:[%s6 + $0x58] sm:$0xf] %vm1378, %v1231
  %1402 = vst.msk [vmem:[%s6 + $0x5c] sm:$0xf] %vm1378, %v1233
  %1403 = vst.msk [vmem:[%s6 + $0x60] sm:$0xf] %vm1378, %v1235
  %1404 = vst.msk [vmem:[%s6 + $0x64] sm:$0xf] %vm1378, %v1237
  %1405 = vst.msk [vmem:[%s6 + $0x68] sm:$0xf] %vm1378, %v1239
  %1406 = vst.msk [vmem:[%s6 + $0x6c] sm:$0xf] %vm1378, %v1241
  %1407 = vst.msk [vmem:[%s6 + $0x70] sm:$0xf] %vm1378, %v1243
  %1408 = vst.msk [vmem:[%s6 + $0x74] sm:$0xf] %vm1378, %v1245
  %1409 = vst.msk [vmem:[%s6 + $0x78] sm:$0xf] %vm1378, %v1247
  %1410 = vst.msk [vmem:[%s6 + $0x7c] sm:$0xf] %vm1378, %v1249
  %1411 = vst.msk [vmem:[%s6 + $0x80] sm:$0xf] %vm1378, %v1251
  %1412 = vst.msk [vmem:[%s6 + $0x84] sm:$0xf] %vm1378, %v1253
  %1413 = vst.msk [vmem:[%s6 + $0x88] sm:$0xf] %vm1378, %v1255
  %1414 = vst.msk [vmem:[%s6 + $0x8c] sm:$0xf] %vm1378, %v1257
  %1415 = vst.msk [vmem:[%s6 + $0x90] sm:$0xf] %vm1378, %v1259
  %1416 = vst.msk [vmem:[%s6 + $0x94] sm:$0xf] %vm1378, %v1261
  %1417 = vst.msk [vmem:[%s6 + $0x98] sm:$0xf] %vm1378, %v1263
  %1418 = vst.msk [vmem:[%s6 + $0x9c] sm:$0xf] %vm1378, %v1265
  %1419 = vst.msk [vmem:[%s6 + $0xa0] sm:$0xf] %vm1378, %v1267
  %1420 = vst.msk [vmem:[%s6 + $0xa4] sm:$0xf] %vm1378, %v1269
  %1421 = vst.msk [vmem:[%s6 + $0xa8] sm:$0xf] %vm1378, %v1271
  %1422 = vst.msk [vmem:[%s6 + $0xac] sm:$0xf] %vm1378, %v1273
  %1423 = vst.msk [vmem:[%s6 + $0xb0] sm:$0xf] %vm1378, %v1275
  %1424 = vst.msk [vmem:[%s6 + $0xb4] sm:$0xf] %vm1378, %v1277
  %1425 = vst.msk [vmem:[%s6 + $0xb8] sm:$0xf] %vm1378, %v1279
  %1426 = vst.msk [vmem:[%s6 + $0xbc] sm:$0xf] %vm1378, %v1281
  %1427 = vst.msk [vmem:[%s6 + $0xc0] sm:$0xf] %vm1378, %v1283
  %1428 = vst.msk [vmem:[%s6 + $0xc4] sm:$0xf] %vm1378, %v1285
  %1429 = vst.msk [vmem:[%s6 + $0xc8] sm:$0xf] %vm1378, %v1287
  %1430 = vst.msk [vmem:[%s6 + $0xcc] sm:$0xf] %vm1378, %v1289
  %1431 = vst.msk [vmem:[%s6 + $0xd0] sm:$0xf] %vm1378, %v1291
  %1432 = vst.msk [vmem:[%s6 + $0xd4] sm:$0xf] %vm1378, %v1293
  %1433 = vst.msk [vmem:[%s6 + $0xd8] sm:$0xf] %vm1378, %v1295
  %1434 = vst.msk [vmem:[%s6 + $0xdc] sm:$0xf] %vm1378, %v1297
  %1435 = vst.msk [vmem:[%s6 + $0xe0] sm:$0xf] %vm1378, %v1299
  %1436 = vst.msk [vmem:[%s6 + $0xe4] sm:$0xf] %vm1378, %v1301
  %1437 = vst.msk [vmem:[%s6 + $0xe8] sm:$0xf] %vm1378, %v1303
  %1438 = vst.msk [vmem:[%s6 + $0xec] sm:$0xf] %vm1378, %v1305
  %1439 = vst.msk [vmem:[%s6 + $0xf0] sm:$0xf] %vm1378, %v1307
  %1440 = vst.msk [vmem:[%s6 + $0xf4] sm:$0xf] %vm1378, %v1309
  %1441 = vst.msk [vmem:[%s6 + $0xf8] sm:$0xf] %vm1378, %v1311
  %1442 = vst.msk [vmem:[%s6 + $0xfc] sm:$0xf] %vm1378, %v1313
  // Predicated region
  $region26: #{preact_bottleneck_forward.4} parent=0 // pred_check
    _
  $region27: #{preact_bottleneck_forward.4} parent=0 // pred_check_branch
    %1444 = sbr.rel (0) target = $region29
  $region28: #{preact_bottleneck_forward.4} parent=0 // pred_region
    _
  $region29: #{preact_bottleneck_forward.4} parent=0 // pred_fallthru
    _
  // Predicated region
  $region30: #{preact_bottleneck_forward.4} parent=0 // pred_check
    _
  $region31: #{preact_bottleneck_forward.4} parent=0 // pred_check_branch
    %1446 = sbr.rel (0) target = $region33
  $region32: #{preact_bottleneck_forward.4} parent=0 // pred_region
    _
  $region33: #{preact_bottleneck_forward.4} parent=0 // pred_fallthru
    _
  // Predicated region
  $region34: #{preact_bottleneck_forward.4} parent=0 // pred_check
    _
  $region35: #{preact_bottleneck_forward.4} parent=0 // pred_check_branch
    %1448 = sbr.rel (0) target = $region37
  $region36: #{preact_bottleneck_forward.4} parent=0 // pred_region
    _
  $region37: #{preact_bottleneck_forward.4} parent=0 // pred_fallthru
    _
  // Predicated region
  $region38: #{preact_bottleneck_forward.4} parent=0 // pred_check
    _
  $region39: #{preact_bottleneck_forward.4} parent=0 // pred_check_branch
    %1450 = sbr.rel (0) target = $region41
  $region40: #{preact_bottleneck_forward.4} parent=0 // pred_region
    _
  $region41: #{preact_bottleneck_forward.4} parent=0 // pred_fallthru
    _

// kernel: preact_bottleneck_forward.5
$region0: #{preact_bottleneck_forward.5}
  #allocation0 [shape = 'u32[]', space=smem, size = 0x4, offset = 0x4, fixed_abs, tag = 'smem constant byte address 0x4 - core index']
  #allocation1 [shape = 'u32[144,128]{1,0:T(1,128)}', space=vmem, size = 0x12000, scoped, tag = 'internal scratch']
  %s0 = inlined_call_operand.vmem [shape: bf16[2,18,18,8], index: 0, kind: input, shape index: {}]
  %s1 = inlined_call_operand.vmem [shape: bf16[9,8,8], index: 1, kind: input, shape index: {}]
  %s2 = inlined_call_operand.vmem [shape: f32[1,8], index: 2, kind: input, shape index: {}]
  %s3 = inlined_call_operand.vmem [shape: f32[1,8], index: 3, kind: input, shape index: {}]
  %s4 = inlined_call_operand.vmem [shape: bf16[8,32], index: 4, kind: input, shape index: {}]
  %s5 = inlined_call_operand.vmem [shape: f32[2,16,16,32], index: 5, kind: output, shape index: {0}]
  %s6 = inlined_call_operand.vmem [shape: f32[2,4,4,32], index: 6, kind: output, shape index: {1}]
  %7 = xla_tuple %s5, %s6
  %s8 = sld [smem:[#allocation0]]
  $region61: #{preact_bottleneck_forward.5} parent=0
    _
  %s10 = ssub.s32 1, %s8
  %s11 = scalar_select 0, %s10, %s8
  loop: start=0, step=1, limit=10
  $region2: #{preact_bottleneck_forward.5} parent=0 // loop_pre_header
    _
  $region3: #{preact_bottleneck_forward.5} parent=0 // loop_header
    %s13 = sphi 0, %s17
    %p14 = scmp.ge.s32.totalorder %s13, 10
    %s20 = sphi 0, %s32
    %s21 = sphi 0, %s28
    %s22 = sphi 0, %s20
    %s23 = sphi 0, %s21
    %s24 = sphi 0, %s22
    %s25 = sphi 0, %s23
    %s35 = sphi 0, %s37
    %s38 = sphi 0, %s35
    %s39 = sphi 0, %s38
    %s55 = sphi 0, %s39
    %s59 = sphi 0, %s59
    %s61 = sphi 0, %s59
    %s62 = sphi 0, %s61
    %s76 = sphi 0, %s62
    %s80 = sphi 0, %s80
    %s82 = sphi 0, %s80
    %s83 = sphi 0, %s82
    %s97 = sphi 0, %s83
    %s101 = sphi 0, %s101
    %s103 = sphi 0, %s101
    %s104 = sphi 0, %s103
    %s118 = sphi 0, %s104
    %s122 = sphi 0, %s122
    %s124 = sphi 0, %s122
    %s125 = sphi 0, %s124
    %s139 = sphi 0, %s125
    %s147 = sphi 0, %s149
    %s150 = sphi 0, %s147
    %s151 = sphi 0, %s150
    %s167 = sphi 0, %s151
    %s175 = sphi 0, %s177
    %s178 = sphi 0, %s175
    %s179 = sphi 0, %s178
    %s195 = sphi 0, %s179
  $region4: #{preact_bottleneck_forward.5} parent=0 // loop_header_branch
    %16 = sbr.rel (%p14) target = $region8
  $region5: #{preact_bottleneck_forward.5} parent=0 // loop_body
    %s18 = ssub.s32 %s13, 1
    %s19 = ssub.s32 %s13, 2
    %s26 = sadd.s32 1, %s21
    %p27 = scmp.ge.s32.totalorder %s26, 4
    %s28 = scalar_select %p27, 0, %s26
    %s29 = sadd.s32 1, %s20
    %s30 = scalar_select %p27, %s29, %s20
    %p31 = scmp.ge.s32.totalorder %s30, 2
    %s32 = scalar_select %p31, 0, %s30
    %s33 = ssub.s32 %s20, %s32
    %p34 = scmp.eq.s32.totalorder %s33, 0
    %s36 = sadd.s32 %s35, 1
    %s37 = scalar_select %p34, %s35, %s36
    %p40 = pneg %p34
    %p41 = scmp.eq.s32.totalorder %s13, 7
    %p42 = por %p40, %p41
    %p43 = scmp.ne.s32.totalorder %s35, %s38
    %p44 = scmp.eq.s32.totalorder %s13, 0
    %p45 = por %p43, %p44
    %p46 = scmp.ne.s32.totalorder %s35, %s38
    %p47 = scmp.eq.s32.totalorder %s18, 7
    %p48 = por %p46, %p47
    %p49 = scmp.ne.s32.totalorder %s38, %s39
    %p50 = scmp.eq.s32.totalorder %s18, 0
    %p51 = por %p49, %p50
    %p52 = scmp.ne.s32.totalorder %s38, %s39
    %p53 = scmp.eq.s32.totalorder %s19, 7
    %p54 = por %p52, %p53
    %p56 = scmp.ne.s32.totalorder %s39, %s55
    %p57 = scmp.eq.s32.totalorder %s19, 0
    %p58 = por %p56, %p57
    %s60 = sadd.s32 %s59, 1
    %p63 = scmp.eq.s32.totalorder %s13, 7
    %p64 = scmp.ne.s32.totalorder %s59, %s61
    %p65 = scmp.eq.s32.totalorder %s13, 0
    %p66 = por %p64, %p65
    %p67 = scmp.ne.s32.totalorder %s59, %s61
    %p68 = scmp.eq.s32.totalorder %s18, 7
    %p69 = por %p67, %p68
    %p70 = scmp.ne.s32.totalorder %s61, %s62
    %p71 = scmp.eq.s32.totalorder %s18, 0
    %p72 = por %p70, %p71
    %p73 = scmp.ne.s32.totalorder %s61, %s62
    %p74 = scmp.eq.s32.totalorder %s19, 7
    %p75 = por %p73, %p74
    %p77 = scmp.ne.s32.totalorder %s62, %s76
    %p78 = scmp.eq.s32.totalorder %s19, 0
    %p79 = por %p77, %p78
    %s81 = sadd.s32 %s80, 1
    %p84 = scmp.eq.s32.totalorder %s13, 7
    %p85 = scmp.ne.s32.totalorder %s80, %s82
    %p86 = scmp.eq.s32.totalorder %s13, 0
    %p87 = por %p85, %p86
    %p88 = scmp.ne.s32.totalorder %s80, %s82
    %p89 = scmp.eq.s32.totalorder %s18, 7
    %p90 = por %p88, %p89
    %p91 = scmp.ne.s32.totalorder %s82, %s83
    %p92 = scmp.eq.s32.totalorder %s18, 0
    %p93 = por %p91, %p92
    %p94 = scmp.ne.s32.totalorder %s82, %s83
    %p95 = scmp.eq.s32.totalorder %s19, 7
    %p96 = por %p94, %p95
    %p98 = scmp.ne.s32.totalorder %s83, %s97
    %p99 = scmp.eq.s32.totalorder %s19, 0
    %p100 = por %p98, %p99
    %s102 = sadd.s32 %s101, 1
    %p105 = scmp.eq.s32.totalorder %s13, 7
    %p106 = scmp.ne.s32.totalorder %s101, %s103
    %p107 = scmp.eq.s32.totalorder %s13, 0
    %p108 = por %p106, %p107
    %p109 = scmp.ne.s32.totalorder %s101, %s103
    %p110 = scmp.eq.s32.totalorder %s18, 7
    %p111 = por %p109, %p110
    %p112 = scmp.ne.s32.totalorder %s103, %s104
    %p113 = scmp.eq.s32.totalorder %s18, 0
    %p114 = por %p112, %p113
    %p115 = scmp.ne.s32.totalorder %s103, %s104
    %p116 = scmp.eq.s32.totalorder %s19, 7
    %p117 = por %p115, %p116
    %p119 = scmp.ne.s32.totalorder %s104, %s118
    %p120 = scmp.eq.s32.totalorder %s19, 0
    %p121 = por %p119, %p120
    %s123 = sadd.s32 %s122, 1
    %p126 = scmp.eq.s32.totalorder %s13, 7
    %p127 = scmp.ne.s32.totalorder %s122, %s124
    %p128 = scmp.eq.s32.totalorder %s13, 0
    %p129 = por %p127, %p128
    %p130 = scmp.ne.s32.totalorder %s122, %s124
    %p131 = scmp.eq.s32.totalorder %s18, 7
    %p132 = por %p130, %p131
    %p133 = scmp.ne.s32.totalorder %s124, %s125
    %p134 = scmp.eq.s32.totalorder %s18, 0
    %p135 = por %p133, %p134
    %p136 = scmp.ne.s32.totalorder %s124, %s125
    %p137 = scmp.eq.s32.totalorder %s19, 7
    %p138 = por %p136, %p137
    %p140 = scmp.ne.s32.totalorder %s125, %s139
    %p141 = scmp.eq.s32.totalorder %s19, 0
    %p142 = por %p140, %p141
    %s143 = ssub.s32 %s20, %s32
    %s144 = ssub.s32 %s21, %s28
    %s145 = sor.u32 %s143, %s144
    %p146 = scmp.eq.s32.totalorder %s145, 0
    %s148 = sadd.s32 %s147, 1
    %s149 = scalar_select %p146, %s147, %s148
    %p152 = pneg %p146
    %p153 = scmp.eq.s32.totalorder %s13, 7
    %p154 = por %p152, %p153
    %p155 = scmp.ne.s32.totalorder %s147, %s150
    %p156 = scmp.eq.s32.totalorder %s13, 0
    %p157 = por %p155, %p156
    %p158 = scmp.ne.s32.totalorder %s147, %s150
    %p159 = scmp.eq.s32.totalorder %s18, 7
    %p160 = por %p158, %p159
    %p161 = scmp.ne.s32.totalorder %s150, %s151
    %p162 = scmp.eq.s32.totalorder %s18, 0
    %p163 = por %p161, %p162
    %p164 = scmp.ne.s32.totalorder %s150, %s151
    %p165 = scmp.eq.s32.totalorder %s19, 7
    %p166 = por %p164, %p165
    %p168 = scmp.ne.s32.totalorder %s151, %s167
    %p169 = scmp.eq.s32.totalorder %s19, 0
    %p170 = por %p168, %p169
    %s171 = ssub.s32 %s20, %s32
    %s172 = ssub.s32 %s21, %s28
    %s173 = sor.u32 %s171, %s172
    %p174 = scmp.eq.s32.totalorder %s173, 0
    %s176 = sadd.s32 %s175, 1
    %s177 = scalar_select %p174, %s175, %s176
    %p180 = pneg %p174
    %p181 = scmp.eq.s32.totalorder %s13, 7
    %p182 = por %p180, %p181
    %p183 = scmp.ne.s32.totalorder %s175, %s178
    %p184 = scmp.eq.s32.totalorder %s13, 0
    %p185 = por %p183, %p184
    %p186 = scmp.ne.s32.totalorder %s175, %s178
    %p187 = scmp.eq.s32.totalorder %s18, 7
    %p188 = por %p186, %p187
    %p189 = scmp.ne.s32.totalorder %s178, %s179
    %p190 = scmp.eq.s32.totalorder %s18, 0
    %p191 = por %p189, %p190
    %p192 = scmp.ne.s32.totalorder %s178, %s179
    %p193 = scmp.eq.s32.totalorder %s19, 7
    %p194 = por %p192, %p193
    %p196 = scmp.ne.s32.totalorder %s179, %s195
    %p197 = scmp.eq.s32.totalorder %s19, 0
    %p198 = por %p196, %p197
    %p199 = scmp.le.s32.totalorder 1, %s13
    %p200 = scmp.lt.s32.totalorder %s13, 9
    %p201 = pnand %p199, %p200
    %p202 = pneg %p201
    // Predicated region
    $region9: #{preact_bottleneck_forward.5} parent=5 // pred_check
      _
    $region10: #{preact_bottleneck_forward.5} parent=5 // pred_check_branch
      %204 = sbr.rel (%p201) target = $region12
    $region11: #{preact_bottleneck_forward.5} parent=5 // pred_region
      %s205 = ssub.s32 %s13, 1
      // Predicated region
      $region13: #{preact_bottleneck_forward.5} parent=11 // pred_check
        %p206 = pneg %p72
      $region14: #{preact_bottleneck_forward.5} parent=11 // pred_check_branch
        %208 = sbr.rel (%p206) target = $region16
      $region15: #{preact_bottleneck_forward.5} parent=11 // pred_region
        _
      $region16: #{preact_bottleneck_forward.5} parent=11 // pred_fallthru
        _
      // Predicated region
      $region17: #{preact_bottleneck_forward.5} parent=11 // pred_check
        %p209 = pneg %p93
      $region18: #{preact_bottleneck_forward.5} parent=11 // pred_check_branch
        %211 = sbr.rel (%p209) target = $region20
      $region19: #{preact_bottleneck_forward.5} parent=11 // pred_region
        _
      $region20: #{preact_bottleneck_forward.5} parent=11 // pred_fallthru
        _
      // Predicated region
      $region21: #{preact_bottleneck_forward.5} parent=11 // pred_check
        %p212 = pneg %p114
      $region22: #{preact_bottleneck_forward.5} parent=11 // pred_check_branch
        %214 = sbr.rel (%p212) target = $region24
      $region23: #{preact_bottleneck_forward.5} parent=11 // pred_region
        _
      $region24: #{preact_bottleneck_forward.5} parent=11 // pred_fallthru
        _
      // Predicated region
      $region25: #{preact_bottleneck_forward.5} parent=11 // pred_check
        %p215 = pneg %p135
      $region26: #{preact_bottleneck_forward.5} parent=11 // pred_check_branch
        %217 = sbr.rel (%p215) target = $region28
      $region27: #{preact_bottleneck_forward.5} parent=11 // pred_region
        _
      $region28: #{preact_bottleneck_forward.5} parent=11 // pred_fallthru
        _
    $region12: #{preact_bottleneck_forward.5} parent=5 // pred_fallthru
      _
    %p218 = scmp.lt.s32.totalorder %s13, 8
    // Predicated region
    $region29: #{preact_bottleneck_forward.5} parent=5 // pred_check
      %p219 = pneg %p218
    $region30: #{preact_bottleneck_forward.5} parent=5 // pred_check_branch
      %221 = sbr.rel (%p219) target = $region32
    $region31: #{preact_bottleneck_forward.5} parent=5 // pred_region
      // Predicated region
      $region33: #{preact_bottleneck_forward.5} parent=31 // pred_check
        %p222 = pneg %p45
      $region34: #{preact_bottleneck_forward.5} parent=31 // pred_check_branch
        %224 = sbr.rel (%p222) target = $region36
      $region35: #{preact_bottleneck_forward.5} parent=31 // pred_region
        %p225 = scmp.lt.s32.totalorder %s20, 1
        %s226 = scalar_select %p225, %s20, 1
        %s227 = smul.addr %s226, 54
        %s228 = smul.addr %s227, 4
        %s229 = scalar_lea.vmem %s0, %s228
      $region36: #{preact_bottleneck_forward.5} parent=31 // pred_fallthru
        _
    $region32: #{preact_bottleneck_forward.5} parent=5 // pred_fallthru
      _
    %p230 = scmp.le.s32.totalorder 1, %s13
    %p231 = scmp.lt.s32.totalorder %s13, 9
    %p232 = pnand %p230, %p231
    %p233 = pneg %p232
    // Predicated region
    $region37: #{preact_bottleneck_forward.5} parent=5 // pred_check
      _
    $region38: #{preact_bottleneck_forward.5} parent=5 // pred_check_branch
      %235 = sbr.rel (%p232) target = $region40
    $region39: #{preact_bottleneck_forward.5} parent=5 // pred_region
      %s236 = ssub.s32 %s13, 1
      %p237 = scmp.lt.s32.totalorder %s22, 1
      %s238 = scalar_select %p237, %s22, 1
      %s239 = smul.addr %s238, 54
      %s240 = smul.addr %s239, 4
      %s241 = scalar_lea.vmem %s0, %s240
      %p242 = pneg %p51
      %p243 = pneg %p48
      %p244 = pneg %p72
      %p245 = pneg %p69
      %p246 = pneg %p93
      %p247 = pneg %p90
      %p248 = pneg %p114
      %p249 = pneg %p111
      %p250 = pneg %p135
      %p251 = pneg %p132
      %p252 = pneg %p163
      %p253 = pneg %p160
      %s254 = smul.u32 4, %s23
      %p255 = scmp.lt.s32.totalorder %s22, 1
      %s256 = scalar_select %p255, %s22, 1
      %p257 = scmp.lt.s32.totalorder %s254, 15
      %s258 = scalar_select %p257, %s254, 15
      %s259 = smul.addr %s258, 2
      %s260 = smul.addr %s256, 32
      %s261 = sadd.s32 %s259, %s260
      %s262 = smul.addr %s261, 8
      %s263 = scalar_lea.vmem %s5, %s262
      %p264 = pneg %p191
      %p265 = pneg %p188
      %p266 = scmp.lt.s32.totalorder %s22, 1
      %s267 = scalar_select %p266, %s22, 1
      %p268 = scmp.lt.s32.totalorder %s23, 3
      %s269 = scalar_select %p268, %s23, 3
      %s270 = smul.addr %s267, 4
      %s271 = sadd.s32 %s269, %s270
      %s272 = smul.addr %s271, 4
      %s273 = scalar_lea.vmem %s6, %s272
      %p274 = scmp.lt.s32.totalorder %s22, 1
      %s275 = scalar_select %p274, %s22, 1
      %s276 = smul.addr %s275, 54
      %s277 = smul.addr %s276, 4
      %s278 = scalar_lea.vmem %s0, %s277
      %s279 = smul.u32 4, %s23
      %p280 = scmp.lt.s32.totalorder %s22, 1
      %s281 = scalar_select %p280, %s22, 1
      %p282 = scmp.lt.s32.totalorder %s279, 15
      %s283 = scalar_select %p282, %s279, 15
      %s284 = smul.addr %s283, 2
      %s285 = smul.addr %s281, 32
      %s286 = sadd.s32 %s284, %s285
      %s287 = smul.addr %s286, 8
      %s288 = scalar_lea.vmem %s5, %s287
      %s289 = smul.u32 4, %s23
      %p290 = scmp.lt.s32.totalorder %s22, 1
      %s291 = scalar_select %p290, %s22, 1
      %p292 = scmp.lt.s32.totalorder %s23, 3
      %s293 = scalar_select %p292, %s23, 3
      %s294 = smul.addr %s291, 4
      %s295 = sadd.s32 %s293, %s294
      %s296 = smul.addr %s295, 4
      %s297 = scalar_lea.vmem %s6, %s296
      %s299 = smul.u32 %s23, 4
      %s300 = smul.u32 %s299, 3
      %s301 = smul.addr %s300, 4
      %s302 = scalar_lea.vmem %s278, %s301
      %v303 = vld [vmem:[%s302] sm:$0xf]
      %v304 = vld [vmem:[%s302 + $0x4] sm:$0xf]
      %v305 = vld [vmem:[%s302 + $0xc] sm:$0xf]
      %v306 = vld [vmem:[%s302 + $0x10] sm:$0xf]
      %v307 = vld [vmem:[%s302 + $0x18] sm:$0xf]
      %v308 = vld [vmem:[%s302 + $0x1c] sm:$0xf]
      %v309 = vld [vmem:[%s302 + $0x24] sm:$0xf]
      %v310 = vld [vmem:[%s302 + $0x28] sm:$0xf]
      %v311 = vld [vmem:[%s1] sm:$0xf]
      %v312 = vld [vmem:[%s302 + $0x8] sm:$0x1]
      %v313 = vld [vmem:[%s302 + $0x14] sm:$0x1]
      %v314 = vld [vmem:[%s302 + $0x20] sm:$0x1]
      %v315 = vld [vmem:[%s302 + $0x2c] sm:$0x1]
      %vm316 = vsmask.f32 3328
      %vm317 = vsmask.f32 7440
      %vm318 = vmor %vm316, %vm317
      %v320 = vshrl.u32 %v303, 16
      %v322 = vrot.slane %v320, 4
      %v323 = vshll.u32 %v303, 16
      %v325 = vrot.slane %v323, 5
      %v326 = vor.u32 %v322, %v325
      %v327 = vrot.slane %v326, 4
      %v329 = vshll.u32 %v304, 16
      %v331 = vrot.slane %v329, 5
      %v332 = vsel %vm318, %v327, %v331
      %v333 = vshrl.u32 %v304, 16
      %v335 = vrot.slane %v333, 4
      %v336 = vor.u32 %v335, %v331
      %v337 = vrot.slane %v336, 4
      %v339 = vshll.u32 %v312, 16
      %v341 = vrot.slane %v339, 5
      %v342 = vsel %vm318, %v337, %v341
      %v344 = vshrl.u32 %v305, 16
      %v346 = vrot.slane %v344, 4
      %v347 = vshll.u32 %v305, 16
      %v349 = vrot.slane %v347, 5
      %v350 = vor.u32 %v346, %v349
      %v351 = vrot.slane %v350, 4
      %v353 = vshll.u32 %v306, 16
      %v355 = vrot.slane %v353, 5
      %v356 = vsel %vm318, %v351, %v355
      %v357 = vshrl.u32 %v306, 16
      %v359 = vrot.slane %v357, 4
      %v360 = vor.u32 %v359, %v355
      %v361 = vrot.slane %v360, 4
      %v363 = vshll.u32 %v313, 16
      %v365 = vrot.slane %v363, 5
      %v366 = vsel %vm318, %v361, %v365
      %v368 = vshrl.u32 %v307, 16
      %v370 = vrot.slane %v368, 4
      %v371 = vshll.u32 %v307, 16
      %v373 = vrot.slane %v371, 5
      %v374 = vor.u32 %v370, %v373
      %v375 = vrot.slane %v374, 4
      %v377 = vshll.u32 %v308, 16
      %v379 = vrot.slane %v377, 5
      %v380 = vsel %vm318, %v375, %v379
      %v381 = vshrl.u32 %v308, 16
      %v383 = vrot.slane %v381, 4
      %v384 = vor.u32 %v383, %v379
      %v385 = vrot.slane %v384, 4
      %v387 = vshll.u32 %v314, 16
      %v389 = vrot.slane %v387, 5
      %v390 = vsel %vm318, %v385, %v389
      %v392 = vshrl.u32 %v309, 16
      %v394 = vrot.slane %v392, 4
      %v395 = vshll.u32 %v309, 16
      %v397 = vrot.slane %v395, 5
      %v398 = vor.u32 %v394, %v397
      %v399 = vrot.slane %v398, 4
      %v401 = vshll.u32 %v310, 16
      %v403 = vrot.slane %v401, 5
      %v404 = vsel %vm318, %v399, %v403
      %v405 = vshrl.u32 %v310, 16
      %v407 = vrot.slane %v405, 4
      %v408 = vor.u32 %v407, %v403
      %v409 = vrot.slane %v408, 4
      %v411 = vshll.u32 %v315, 16
      %v413 = vrot.slane %v411, 5
      %v414 = vsel %vm318, %v409, %v413
      %s415 = scalar_lea.vmem %s1, 4
      %v416 = vld [vmem:[%s415] sm:$0xf]
      %v417 = vunpack.c.l.b16 %v332
      %v418 = vunpack.c.l.b16 %v342
      %v419 = vunpack.c.l.b16 %v356
      %v420 = vunpack.c.l.b16 %v366
      %v421 = vunpack.c.l.b16 %v380
      %v422 = vunpack.c.l.b16 %v390
      %v423 = vunpack.c.l.b16 %v404
      %v424 = vunpack.c.l.b16 %v414
      %v425 = vpack.c.b16 %v418, %v417
      %v426 = vpack.c.b16 %v420, %v419
      %v427 = vpack.c.b16 %v422, %v421
      %v428 = vpack.c.b16 %v424, %v423
      %vm429 = vcmask 64512
      %v431 = vsel %vm429, %v425, 0
      %v434 = vsel %vm429, %v426, 0
      %v437 = vsel %vm429, %v427, 0
      %v440 = vsel %vm429, %v428, 0
      %vm442 = vcmask 1043456
      %v444 = vsel %vm442, %v416, 0
      %446 = vmatprep.subr.bf16.mxu0 0
      %447 = vmatpush1.bf16.msra.mxu0 %v444
      %448 = vmatprep.subr.bf16.mxu0 0
      %449 = vmatpush1.bf16.msra.mxu0 0
      %450 = vmatprep.subr.bf16.mxu0 0
      %451 = vmatpush1.bf16.msra.mxu0 0
      %452 = vmatprep.subr.bf16.mxu0 0
      %453 = vmatpush1.bf16.msra.mxu0 0
      %454 = vmatprep.subr.bf16.mxu0 0
      %455 = vmatpush1.bf16.msra.mxu0 0
      %456 = vmatprep.subr.bf16.mxu0 0
      %457 = vmatpush1.bf16.msra.mxu0 0
      %458 = vmatprep.subr.bf16.mxu0 0
      %459 = vmatpush1.bf16.msra.mxu0 0
      %460 = vmatprep.subr.bf16.mxu0 0
      %461 = vmatpush1.bf16.msra.mxu0 0
      %462 = vmatprep.subr.bf16.mxu0 0
      %463 = vmatpush1.bf16.msra.mxu0 0
      %464 = vmatprep.subr.bf16.mxu0 0
      %465 = vmatpush1.bf16.msra.mxu0 0
      %466 = vmatprep.subr.bf16.mxu0 0
      %467 = vmatpush1.bf16.msra.mxu0 0
      %468 = vmatprep.subr.bf16.mxu0 0
      %469 = vmatpush1.bf16.msra.mxu0 0
      %470 = vmatprep.subr.bf16.mxu0 0
      %471 = vmatpush1.bf16.msra.mxu0 0
      %472 = vmatprep.subr.bf16.mxu0 0
      %473 = vmatpush1.bf16.msra.mxu0 0
      %474 = vmatprep.subr.bf16.mxu0 0
      %475 = vmatpush1.bf16.msra.mxu0 0
      %476 = vmatprep.subr.bf16.mxu0 0
      %477 = vmatpush1.bf16.msra.mxu0 0
      %478 = vmatprep.mubr.bf16.mxu0 0
      %479 = vmatmul.mubr.bf16.gmra.mrb[0].mxu0 %v431
      %v480 = vpop.f32.mrb[0].mxu0
      %v481 = vadd.f32 0.0, %v480
      %v482 = vpop.f32.mrb[0].mxu0
      %v483 = vpop.f32.mrb[0].mxu0
      %v484 = vadd.f32 0.0, %v483
      %v485 = vpop.f32.mrb[0].mxu0
      %486 = vmatprep.mubr.bf16.mxu0 0
      %487 = vmatmul.mubr.bf16.gmra.mrb[0].mxu0 %v434
      %v488 = vpop.f32.mrb[0].mxu0
      %v489 = vadd.f32 0.0, %v488
      %v490 = vpop.f32.mrb[0].mxu0
      %v491 = vpop.f32.mrb[0].mxu0
      %v492 = vadd.f32 0.0, %v491
      %v493 = vpop.f32.mrb[0].mxu0
      %494 = vmatprep.mubr.bf16.mxu0 0
      %495 = vmatmul.mubr.bf16.gmra.mrb[0].mxu0 %v437
      %v496 = vpop.f32.mrb[0].mxu0
      %v497 = vadd.f32 0.0, %v496
      %v498 = vpop.f32.mrb[0].mxu0
      %v499 = vpop.f32.mrb[0].mxu0
      %v500 = vadd.f32 0.0, %v499
      %v501 = vpop.f32.mrb[0].mxu0
      %502 = vmatprep.mubr.bf16.mxu0 0
      %503 = vmatmul.mubr.bf16.gmra.mrb[0].mxu0 %v440
      %v504 = vpop.f32.mrb[0].mxu0
      %v505 = vadd.f32 0.0, %v504
      %v506 = vpop.f32.mrb[0].mxu0
      %v507 = vpop.f32.mrb[0].mxu0
      %v508 = vadd.f32 0.0, %v507
      %v509 = vpop.f32.mrb[0].mxu0
      %510 = vdwg.mxu0
      %v519 = vunpack.c.l.b16 %v303
      %v520 = vunpack.c.l.b16 %v304
      %v521 = vunpack.c.l.b16 %v305
      %v522 = vunpack.c.l.b16 %v306
      %v523 = vunpack.c.l.b16 %v307
      %v524 = vunpack.c.l.b16 %v308
      %v525 = vunpack.c.l.b16 %v309
      %v526 = vunpack.c.l.b16 %v310
      %v527 = vpack.c.b16 %v520, %v519
      %v528 = vpack.c.b16 %v522, %v521
      %v529 = vpack.c.b16 %v524, %v523
      %v530 = vpack.c.b16 %v526, %v525
      %v532 = vsel %vm429, %v527, 0
      %v535 = vsel %vm429, %v528, 0
      %v538 = vsel %vm429, %v529, 0
      %v541 = vsel %vm429, %v530, 0
      %v544 = vsel %vm442, %v311, 0
      %546 = vmatprep.subr.bf16.mxu0 0
      %547 = vmatpush1.bf16.msra.mxu0 %v544
      %548 = vmatprep.subr.bf16.mxu0 0
      %549 = vmatpush1.bf16.msra.mxu0 0
      %550 = vmatprep.subr.bf16.mxu0 0
      %551 = vmatpush1.bf16.msra.mxu0 0
      %552 = vmatprep.subr.bf16.mxu0 0
      %553 = vmatpush1.bf16.msra.mxu0 0
      %554 = vmatprep.subr.bf16.mxu0 0
      %555 = vmatpush1.bf16.msra.mxu0 0
      %556 = vmatprep.subr.bf16.mxu0 0
      %557 = vmatpush1.bf16.msra.mxu0 0
      %558 = vmatprep.subr.bf16.mxu0 0
      %559 = vmatpush1.bf16.msra.mxu0 0
      %560 = vmatprep.subr.bf16.mxu0 0
      %561 = vmatpush1.bf16.msra.mxu0 0
      %562 = vmatprep.subr.bf16.mxu0 0
      %563 = vmatpush1.bf16.msra.mxu0 0
      %564 = vmatprep.subr.bf16.mxu0 0
      %565 = vmatpush1.bf16.msra.mxu0 0
      %566 = vmatprep.subr.bf16.mxu0 0
      %567 = vmatpush1.bf16.msra.mxu0 0
      %568 = vmatprep.subr.bf16.mxu0 0
      %569 = vmatpush1.bf16.msra.mxu0 0
      %570 = vmatprep.subr.bf16.mxu0 0
      %571 = vmatpush1.bf16.msra.mxu0 0
      %572 = vmatprep.subr.bf16.mxu0 0
      %573 = vmatpush1.bf16.msra.mxu0 0
      %574 = vmatprep.subr.bf16.mxu0 0
      %575 = vmatpush1.bf16.msra.mxu0 0
      %576 = vmatprep.subr.bf16.mxu0 0
      %577 = vmatpush1.bf16.msra.mxu0 0
      %578 = vmatprep.mubr.bf16.mxu0 0
      %579 = vmatmul.mubr.bf16.gmra.mrb[0].mxu0 %v532
      %v580 = vpop.f32.mrb[0].mxu0
      %v581 = vadd.f32 %v481, %v580
      %v582 = vpop.f32.mrb[0].mxu0
      %v583 = vpop.f32.mrb[0].mxu0
      %v584 = vadd.f32 %v484, %v583
      %v585 = vpop.f32.mrb[0].mxu0
      %586 = vmatprep.mubr.bf16.mxu0 0
      %587 = vmatmul.mubr.bf16.gmra.mrb[0].mxu0 %v535
      %v588 = vpop.f32.mrb[0].mxu0
      %v589 = vadd.f32 %v489, %v588
      %v590 = vpop.f32.mrb[0].mxu0
      %v591 = vpop.f32.mrb[0].mxu0
      %v592 = vadd.f32 %v492, %v591
      %v593 = vpop.f32.mrb[0].mxu0
      %594 = vmatprep.mubr.bf16.mxu0 0
      %595 = vmatmul.mubr.bf16.gmra.mrb[0].mxu0 %v538
      %v596 = vpop.f32.mrb[0].mxu0
      %v597 = vadd.f32 %v497, %v596
      %v598 = vpop.f32.mrb[0].mxu0
      %v599 = vpop.f32.mrb[0].mxu0
      %v600 = vadd.f32 %v500, %v599
      %v601 = vpop.f32.mrb[0].mxu0
      %602 = vmatprep.mubr.bf16.mxu0 0
      %603 = vmatmul.mubr.bf16.gmra.mrb[0].mxu0 %v541
      %v604 = vpop.f32.mrb[0].mxu0
      %v605 = vadd.f32 %v505, %v604
      %v606 = vpop.f32.mrb[0].mxu0
      %v607 = vpop.f32.mrb[0].mxu0
      %v608 = vadd.f32 %v508, %v607
      %v609 = vpop.f32.mrb[0].mxu0
      %610 = vdwg.mxu0
      %v611 = vld [vmem:[%s302] sm:$0xe]
      %v612 = vld [vmem:[%s302 + $0xc] sm:$0xe]
      %v613 = vld [vmem:[%s302 + $0x18] sm:$0xe]
      %v614 = vld [vmem:[%s302 + $0x24] sm:$0xe]
      %vm623 = vcmask 1042432
      %vm624 = vcmask 1046532
      %vm625 = vmor %vm623, %vm624
      %v626 = vrot.slane %v611, 5
      %v627 = vrot.slane %v626, 4
      %v628 = vrot.slane %v304, 5
      %v629 = vsel %vm625, %v627, %v628
      %v630 = vrot.slane %v628, 4
      %v631 = vrot.slane %v312, 5
      %v632 = vsel %vm625, %v630, %v631
      %v633 = vrot.slane %v612, 5
      %v634 = vrot.slane %v633, 4
      %v635 = vrot.slane %v306, 5
      %v636 = vsel %vm625, %v634, %v635
      %v637 = vrot.slane %v635, 4
      %v638 = vrot.slane %v313, 5
      %v639 = vsel %vm625, %v637, %v638
      %v640 = vrot.slane %v613, 5
      %v641 = vrot.slane %v640, 4
      %v642 = vrot.slane %v308, 5
      %v643 = vsel %vm625, %v641, %v642
      %v644 = vrot.slane %v642, 4
      %v645 = vrot.slane %v314, 5
      %v646 = vsel %vm625, %v644, %v645
      %v647 = vrot.slane %v614, 5
      %v648 = vrot.slane %v647, 4
      %v649 = vrot.slane %v310, 5
      %v650 = vsel %vm625, %v648, %v649
      %v651 = vrot.slane %v649, 4
      %v652 = vrot.slane %v315, 5
      %v653 = vsel %vm625, %v651, %v652
      %s654 = scalar_lea.vmem %s1, 8
      %v655 = vld [vmem:[%s654] sm:$0xf]
      %v656 = vunpack.c.l.b16 %v629
      %v657 = vunpack.c.l.b16 %v632
      %v658 = vunpack.c.l.b16 %v636
      %v659 = vunpack.c.l.b16 %v639
      %v660 = vunpack.c.l.b16 %v643
      %v661 = vunpack.c.l.b16 %v646
      %v662 = vunpack.c.l.b16 %v650
      %v663 = vunpack.c.l.b16 %v653
      %v664 = vpack.c.b16 %v657, %v656
      %v665 = vpack.c.b16 %v659, %v658
      %v666 = vpack.c.b16 %v661, %v660
      %v667 = vpack.c.b16 %v663, %v662
      %v669 = vsel %vm429, %v664, 0
      %v672 = vsel %vm429, %v665, 0
      %v675 = vsel %vm429, %v666, 0
      %v678 = vsel %vm429, %v667, 0
      %v681 = vsel %vm442, %v655, 0
      %683 = vmatprep.subr.bf16.mxu0 0
      %684 = vmatpush1.bf16.msra.mxu0 %v681
      %685 = vmatprep.subr.bf16.mxu0 0
      %686 = vmatpush1.bf16.msra.mxu0 0
      %687 = vmatprep.subr.bf16.mxu0 0
      %688 = vmatpush1.bf16.msra.mxu0 0
      %689 = vmatprep.subr.bf16.mxu0 0
      %690 = vmatpush1.bf16.msra.mxu0 0
      %691 = vmatprep.subr.bf16.mxu0 0
      %692 = vmatpush1.bf16.msra.mxu0 0
      %693 = vmatprep.subr.bf16.mxu0 0
      %694 = vmatpush1.bf16.msra.mxu0 0
      %695 = vmatprep.subr.bf16.mxu0 0
      %696 = vmatpush1.bf16.msra.mxu0 0
      %697 = vmatprep.subr.bf16.mxu0 0
      %698 = vmatpush1.bf16.msra.mxu0 0
      %699 = vmatprep.subr.bf16.mxu0 0
      %700 = vmatpush1.bf16.msra.mxu0 0
      %701 = vmatprep.subr.bf16.mxu0 0
      %702 = vmatpush1.bf16.msra.mxu0 0
      %703 = vmatprep.subr.bf16.mxu0 0
      %704 = vmatpush1.bf16.msra.mxu0 0
      %705 = vmatprep.subr.bf16.mxu0 0
      %706 = vmatpush1.bf16.msra.mxu0 0
      %707 = vmatprep.subr.bf16.mxu0 0
      %708 = vmatpush1.bf16.msra.mxu0 0
      %709 = vmatprep.subr.bf16.mxu0 0
      %710 = vmatpush1.bf16.msra.mxu0 0
      %711 = vmatprep.subr.bf16.mxu0 0
      %712 = vmatpush1.bf16.msra.mxu0 0
      %713 = vmatprep.subr.bf16.mxu0 0
      %714 = vmatpush1.bf16.msra.mxu0 0
      %715 = vmatprep.mubr.bf16.mxu0 0
      %716 = vmatmul.mubr.bf16.gmra.mrb[0].mxu0 %v669
      %v717 = vpop.f32.mrb[0].mxu0
      %v718 = vadd.f32 0.0, %v717
      %v719 = vpop.f32.mrb[0].mxu0
      %v720 = vpop.f32.mrb[0].mxu0
      %v721 = vadd.f32 0.0, %v720
      %v722 = vpop.f32.mrb[0].mxu0
      %723 = vmatprep.mubr.bf16.mxu0 0
      %724 = vmatmul.mubr.bf16.gmra.mrb[0].mxu0 %v672
      %v725 = vpop.f32.mrb[0].mxu0
      %v726 = vadd.f32 0.0, %v725
      %v727 = vpop.f32.mrb[0].mxu0
      %v728 = vpop.f32.mrb[0].mxu0
      %v729 = vadd.f32 0.0, %v728
      %v730 = vpop.f32.mrb[0].mxu0
      %731 = vmatprep.mubr.bf16.mxu0 0
      %732 = vmatmul.mubr.bf16.gmra.mrb[0].mxu0 %v675
      %v733 = vpop.f32.mrb[0].mxu0
      %v734 = vadd.f32 0.0, %v733
      %v735 = vpop.f32.mrb[0].mxu0
      %v736 = vpop.f32.mrb[0].mxu0
      %v737 = vadd.f32 0.0, %v736
      %v738 = vpop.f32.mrb[0].mxu0
      %739 = vmatprep.mubr.bf16.mxu0 0
      %740 = vmatmul.mubr.bf16.gmra.mrb[0].mxu0 %v678
      %v741 = vpop.f32.mrb[0].mxu0
      %v742 = vadd.f32 0.0, %v741
      %v743 = vpop.f32.mrb[0].mxu0
      %v744 = vpop.f32.mrb[0].mxu0
      %v745 = vadd.f32 0.0, %v744
      %v746 = vpop.f32.mrb[0].mxu0
      %747 = vdwg.mxu0
      %v748 = vadd.f32 %v581, %v718
      %v749 = vadd.f32 %v584, %v721
      %v750 = vadd.f32 %v589, %v726
      %v751 = vadd.f32 %v592, %v729
      %v752 = vadd.f32 %v597, %v734
      %v753 = vadd.f32 %v600, %v737
      %v754 = vadd.f32 %v605, %v742
      %v755 = vadd.f32 %v608, %v745
      %s756 = sadd.s32 %s299, 1
      %s757 = smul.u32 %s756, 3
      %s758 = smul.addr %s757, 4
      %s759 = scalar_lea.vmem %s278, %s758
      %v760 = vld [vmem:[%s759] sm:$0xf]
      %v761 = vld [vmem:[%s759 + $0x4] sm:$0xf]
      %v762 = vld [vmem:[%s759 + $0xc] sm:$0xf]
      %v763 = vld [vmem:[%s759 + $0x10] sm:$0xf]
      %v764 = vld [vmem:[%s759 + $0x18] sm:$0xf]
      %v765 = vld [vmem:[%s759 + $0x1c] sm:$0xf]
      %v766 = vld [vmem:[%s759 + $0x24] sm:$0xf]
      %v767 = vld [vmem:[%s759 + $0x28] sm:$0xf]
      %s768 = scalar_lea.vmem %s1, 12
      %v769 = vld [vmem:[%s768] sm:$0xf]
      %v778 = vunpack.c.l.b16 %v760
      %v779 = vunpack.c.l.b16 %v761
      %v780 = vunpack.c.l.b16 %v762
      %v781 = vunpack.c.l.b16 %v763
      %v782 = vunpack.c.l.b16 %v764
      %v783 = vunpack.c.l.b16 %v765
      %v784 = vunpack.c.l.b16 %v766
      %v785 = vunpack.c.l.b16 %v767
      %v786 = vpack.c.b16 %v779, %v778
      %v787 = vpack.c.b16 %v781, %v780
      %v788 = vpack.c.b16 %v783, %v782
      %v789 = vpack.c.b16 %v785, %v784
      %v791 = vsel %vm429, %v786, 0
      %v794 = vsel %vm429, %v787, 0
      %v797 = vsel %vm429, %v788, 0
      %v800 = vsel %vm429, %v789, 0
      %v803 = vsel %vm442, %v769, 0
      %805 = vmatprep.subr.bf16.mxu0 0
      %806 = vmatpush1.bf16.msra.mxu0 %v803
      %807 = vmatprep.subr.bf16.mxu0 0
      %808 = vmatpush1.bf16.msra.mxu0 0
      %809 = vmatprep.subr.bf16.mxu0 0
      %810 = vmatpush1.bf16.msra.mxu0 0
      %811 = vmatprep.subr.bf16.mxu0 0
      %812 = vmatpush1.bf16.msra.mxu0 0
      %813 = vmatprep.subr.bf16.mxu0 0
      %814 = vmatpush1.bf16.msra.mxu0 0
      %815 = vmatprep.subr.bf16.mxu0 0
      %816 = vmatpush1.bf16.msra.mxu0 0
      %817 = vmatprep.subr.bf16.mxu0 0
      %818 = vmatpush1.bf16.msra.mxu0 0
      %819 = vmatprep.subr.bf16.mxu0 0
      %820 = vmatpush1.bf16.msra.mxu0 0
      %821 = vmatprep.subr.bf16.mxu0 0
      %822 = vmatpush1.bf16.msra.mxu0 0
      %823 = vmatprep.subr.bf16.mxu0 0
      %824 = vmatpush1.bf16.msra.mxu0 0
      %825 = vmatprep.subr.bf16.mxu0 0
      %826 = vmatpush1.bf16.msra.mxu0 0
      %827 = vmatprep.subr.bf16.mxu0 0
      %828 = vmatpush1.bf16.msra.mxu0 0
      %829 = vmatprep.subr.bf16.mxu0 0
      %830 = vmatpush1.bf16.msra.mxu0 0
      %831 = vmatprep.subr.bf16.mxu0 0
      %832 = vmatpush1.bf16.msra.mxu0 0
      %833 = vmatprep.subr.bf16.mxu0 0
      %834 = vmatpush1.bf16.msra.mxu0 0
      %835 = vmatprep.subr.bf16.mxu0 0
      %836 = vmatpush1.bf16.msra.mxu0 0
      %837 = vmatprep.mubr.bf16.mxu0 0
      %838 = vmatmul.mubr.bf16.gmra.mrb[0].mxu0 %v791
      %v839 = vpop.f32.mrb[0].mxu0
      %v840 = vadd.f32 0.0, %v839
      %v841 = vpop.f32.mrb[0].mxu0
      %v842 = vpop.f32.mrb[0].mxu0
      %v843 = vadd.f32 0.0, %v842
      %v844 = vpop.f32.mrb[0].mxu0
      %845 = vmatprep.mubr.bf16.mxu0 0
      %846 = vmatmul.mubr.bf16.gmra.mrb[0].mxu0 %v794
      %v847 = vpop.f32.mrb[0].mxu0
      %v848 = vadd.f32 0.0, %v847
      %v849 = vpop.f32.mrb[0].mxu0
      %v850 = vpop.f32.mrb[0].mxu0
      %v851 = vadd.f32 0.0, %v850
      %v852 = vpop.f32.mrb[0].mxu0
      %853 = vmatprep.mubr.bf16.mxu0 0
      %854 = vmatmul.mubr.bf16.gmra.mrb[0].mxu0 %v797
      %v855 = vpop.f32.mrb[0].mxu0
      %v856 = vadd.f32 0.0, %v855
      %v857 = vpop.f32.mrb[0].mxu0
      %v858 = vpop.f32.mrb[0].mxu0
      %v859 = vadd.f32 0.0, %v858
      %v860 = vpop.f32.mrb[0].mxu0
      %861 = vmatprep.mubr.bf16.mxu0 0
      %862 = vmatmul.mubr.bf16.gmra.mrb[0].mxu0 %v800
      %v863 = vpop.f32.mrb[0].mxu0
      %v864 = vadd.f32 0.0, %v863
      %v865 = vpop.f32.mrb[0].mxu0
      %v866 = vpop.f32.mrb[0].mxu0
      %v867 = vadd.f32 0.0, %v866
      %v868 = vpop.f32.mrb[0].mxu0
      %869 = vdwg.mxu0
      %v870 = vadd.f32 %v748, %v840
      %v871 = vadd.f32 %v749, %v843
      %v872 = vadd.f32 %v750, %v848
      %v873 = vadd.f32 %v751, %v851
      %v874 = vadd.f32 %v752, %v856
      %v875 = vadd.f32 %v753, %v859
      %v876 = vadd.f32 %v754, %v864
      %v877 = vadd.f32 %v755, %v867
      %v878 = vld [vmem:[%s759] sm:$0xf]
      %v879 = vld [vmem:[%s759 + $0x4] sm:$0xf]
      %v880 = vld [vmem:[%s759 + $0x8] sm:$0x1]
      %v881 = vld [vmem:[%s759 + $0xc] sm:$0xf]
      %v882 = vld [vmem:[%s759 + $0x10] sm:$0xf]
      %v883 = vld [vmem:[%s759 + $0x14] sm:$0x1]
      %v884 = vld [vmem:[%s759 + $0x18] sm:$0xf]
      %v885 = vld [vmem:[%s759 + $0x1c] sm:$0xf]
      %v886 = vld [vmem:[%s759 + $0x20] sm:$0x1]
      %v887 = vld [vmem:[%s759 + $0x24] sm:$0xf]
      %v888 = vld [vmem:[%s759 + $0x28] sm:$0xf]
      %v889 = vld [vmem:[%s759 + $0x2c] sm:$0x1]
      %v891 = vshrl.u32 %v878, 16
      %v893 = vrot.slane %v891, 4
      %v894 = vshll.u32 %v878, 16
      %v896 = vrot.slane %v894, 5
      %v897 = vor.u32 %v893, %v896
      %v898 = vrot.slane %v897, 4
      %v900 = vshll.u32 %v879, 16
      %v902 = vrot.slane %v900, 5
      %v903 = vsel %vm318, %v898, %v902
      %v904 = vshrl.u32 %v879, 16
      %v906 = vrot.slane %v904, 4
      %v907 = vor.u32 %v906, %v902
      %v908 = vrot.slane %v907, 4
      %v910 = vshll.u32 %v880, 16
      %v912 = vrot.slane %v910, 5
      %v913 = vsel %vm318, %v908, %v912
      %v915 = vshrl.u32 %v881, 16
      %v917 = vrot.slane %v915, 4
      %v918 = vshll.u32 %v881, 16
      %v920 = vrot.slane %v918, 5
      %v921 = vor.u32 %v917, %v920
      %v922 = vrot.slane %v921, 4
      %v924 = vshll.u32 %v882, 16
      %v926 = vrot.slane %v924, 5
      %v927 = vsel %vm318, %v922, %v926
      %v928 = vshrl.u32 %v882, 16
      %v930 = vrot.slane %v928, 4
      %v931 = vor.u32 %v930, %v926
      %v932 = vrot.slane %v931, 4
      %v934 = vshll.u32 %v883, 16
      %v936 = vrot.slane %v934, 5
      %v937 = vsel %vm318, %v932, %v936
      %v939 = vshrl.u32 %v884, 16
      %v941 = vrot.slane %v939, 4
      %v942 = vshll.u32 %v884, 16
      %v944 = vrot.slane %v942, 5
      %v945 = vor.u32 %v941, %v944
      %v946 = vrot.slane %v945, 4
      %v948 = vshll.u32 %v885, 16
      %v950 = vrot.slane %v948, 5
      %v951 = vsel %vm318, %v946, %v950
      %v952 = vshrl.u32 %v885, 16
      %v954 = vrot.slane %v952, 4
      %v955 = vor.u32 %v954, %v950
      %v956 = vrot.slane %v955, 4
      %v958 = vshll.u32 %v886, 16
      %v960 = vrot.slane %v958, 5
      %v961 = vsel %vm318, %v956, %v960
      %v963 = vshrl.u32 %v887, 16
      %v965 = vrot.slane %v963, 4
      %v966 = vshll.u32 %v887, 16
      %v968 = vrot.slane %v966, 5
      %v969 = vor.u32 %v965, %v968
      %v970 = vrot.slane %v969, 4
      %v972 = vshll.u32 %v888, 16
      %v974 = vrot.slane %v972, 5
      %v975 = vsel %vm318, %v970, %v974
      %v976 = vshrl.u32 %v888, 16
      %v978 = vrot.slane %v976, 4
      %v979 = vor.u32 %v978, %v974
      %v980 = vrot.slane %v979, 4
      %v982 = vshll.u32 %v889, 16
      %v984 = vrot.slane %v982, 5
      %v985 = vsel %vm318, %v980, %v984
      %s986 = scalar_lea.vmem %s1, 16
      %v987 = vld [vmem:[%s986] sm:$0xf]
      %v988 = vunpack.c.l.b16 %v903
      %v989 = vunpack.c.l.b16 %v913
      %v990 = vunpack.c.l.b16 %v927
      %v991 = vunpack.c.l.b16 %v937
      %v992 = vunpack.c.l.b16 %v951
      %v993 = vunpack.c.l.b16 %v961
      %v994 = vunpack.c.l.b16 %v975
      %v995 = vunpack.c.l.b16 %v985
      %v996 = vpack.c.b16 %v989, %v988
      %v997 = vpack.c.b16 %v991, %v990
      %v998 = vpack.c.b16 %v993, %v992
      %v999 = vpack.c.b16 %v995, %v994
      %v1001 = vsel %vm429, %v996, 0
      %v1004 = vsel %vm429, %v997, 0
      %v1007 = vsel %vm429, %v998, 0
      %v1010 = vsel %vm429, %v999, 0
      %v1013 = vsel %vm442, %v987, 0
      %1015 = vmatprep.subr.bf16.mxu0 0
      %1016 = vmatpush1.bf16.msra.mxu0 %v1013
      %1017 = vmatprep.subr.bf16.mxu0 0
      %1018 = vmatpush1.bf16.msra.mxu0 0
      %1019 = vmatprep.subr.bf16.mxu0 0
      %1020 = vmatpush1.bf16.msra.mxu0 0
      %1021 = vmatprep.subr.bf16.mxu0 0
      %1022 = vmatpush1.bf16.msra.mxu0 0
      %1023 = vmatprep.subr.bf16.mxu0 0
      %1024 = vmatpush1.bf16.msra.mxu0 0
      %1025 = vmatprep.subr.bf16.mxu0 0
      %1026 = vmatpush1.bf16.msra.mxu0 0
      %1027 = vmatprep.subr.bf16.mxu0 0
      %1028 = vmatpush1.bf16.msra.mxu0 0
      %1029 = vmatprep.subr.bf16.mxu0 0
      %1030 = vmatpush1.bf16.msra.mxu0 0
      %1031 = vmatprep.subr.bf16.mxu0 0
      %1032 = vmatpush1.bf16.msra.mxu0 0
      %1033 = vmatprep.subr.bf16.mxu0 0
      %1034 = vmatpush1.bf16.msra.mxu0 0
      %1035 = vmatprep.subr.bf16.mxu0 0
      %1036 = vmatpush1.bf16.msra.mxu0 0
      %1037 = vmatprep.subr.bf16.mxu0 0
      %1038 = vmatpush1.bf16.msra.mxu0 0
      %1039 = vmatprep.subr.bf16.mxu0 0
      %1040 = vmatpush1.bf16.msra.mxu0 0
      %1041 = vmatprep.subr.bf16.mxu0 0
      %1042 = vmatpush1.bf16.msra.mxu0 0
      %1043 = vmatprep.subr.bf16.mxu0 0
      %1044 = vmatpush1.bf16.msra.mxu0 0
      %1045 = vmatprep.subr.bf16.mxu0 0
      %1046 = vmatpush1.bf16.msra.mxu0 0
      %1047 = vmatprep.mubr.bf16.mxu0 0
      %1048 = vmatmul.mubr.bf16.gmra.mrb[0].mxu0 %v1001
      %v1049 = vpop.f32.mrb[0].mxu0
      %v1050 = vadd.f32 0.0, %v1049
      %v1051 = vpop.f32.mrb[0].mxu0
      %v1052 = vpop.f32.mrb[0].mxu0
      %v1053 = vadd.f32 0.0, %v1052
      %v1054 = vpop.f32.mrb[0].mxu0
      %1055 = vmatprep.mubr.bf16.mxu0 0
      %1056 = vmatmul.mubr.bf16.gmra.mrb[0].mxu0 %v1004
      %v1057 = vpop.f32.mrb[0].mxu0
      %v1058 = vadd.f32 0.0, %v1057
      %v1059 = vpop.f32.mrb[0].mxu0
      %v1060 = vpop.f32.mrb[0].mxu0
      %v1061 = vadd.f32 0.0, %v1060
      %v1062 = vpop.f32.mrb[0].mxu0
      %1063 = vmatprep.mubr.bf16.mxu0 0
      %1064 = vmatmul.mubr.bf16.gmra.mrb[0].mxu0 %v1007
      %v1065 = vpop.f32.mrb[0].mxu0
      %v1066 = vadd.f32 0.0, %v1065
      %v1067 = vpop.f32.mrb[0].mxu0
      %v1068 = vpop.f32.mrb[0].mxu0
      %v1069 = vadd.f32 0.0, %v1068
      %v1070 = vpop.f32.mrb[0].mxu0
      %1071 = vmatprep.mubr.bf16.mxu0 0
      %1072 = vmatmul.mubr.bf16.gmra.mrb[0].mxu0 %v1010
      %v1073 = vpop.f32.mrb[0].mxu0
      %v1074 = vadd.f32 0.0, %v1073
      %v1075 = vpop.f32.mrb[0].mxu0
      %v1076 = vpop.f32.mrb[0].mxu0
      %v1077 = vadd.f32 0.0, %v1076
      %v1078 = vpop.f32.mrb[0].mxu0
      %1079 = vdwg.mxu0
      %v1080 = vadd.f32 %v870, %v1050
      %v1081 = vadd.f32 %v871, %v1053
      %v1082 = vadd.f32 %v872, %v1058
      %v1083 = vadd.f32 %v873, %v1061
      %v1084 = vadd.f32 %v874, %v1066
      %v1085 = vadd.f32 %v875, %v1069
      %v1086 = vadd.f32 %v876, %v1074
      %v1087 = vadd.f32 %v877, %v1077
      %v1088 = vld [vmem:[%s759] sm:$0xe]
      %v1089 = vld [vmem:[%s759 + $0xc] sm:$0xe]
      %v1090 = vld [vmem:[%s759 + $0x18] sm:$0xe]
      %v1091 = vld [vmem:[%s759 + $0x24] sm:$0xe]
      %v1104 = vrot.slane %v1088, 5
      %v1105 = vrot.slane %v1104, 4
      %v1106 = vrot.slane %v879, 5
      %v1107 = vsel %vm625, %v1105, %v1106
      %v1108 = vrot.slane %v1106, 4
      %v1109 = vrot.slane %v880, 5
      %v1110 = vsel %vm625, %v1108, %v1109
      %v1111 = vrot.slane %v1089, 5
      %v1112 = vrot.slane %v1111, 4
      %v1113 = vrot.slane %v882, 5
      %v1114 = vsel %vm625, %v1112, %v1113
      %v1115 = vrot.slane %v1113, 4
      %v1116 = vrot.slane %v883, 5
      %v1117 = vsel %vm625, %v1115, %v1116
      %v1118 = vrot.slane %v1090, 5
      %v1119 = vrot.slane %v1118, 4
      %v1120 = vrot.slane %v885, 5
      %v1121 = vsel %vm625, %v1119, %v1120
      %v1122 = vrot.slane %v1120, 4
      %v1123 = vrot.slane %v886, 5
      %v1124 = vsel %vm625, %v1122, %v1123
      %v1125 = vrot.slane %v1091, 5
      %v1126 = vrot.slane %v1125, 4
      %v1127 = vrot.slane %v888, 5
      %v1128 = vsel %vm625, %v1126, %v1127
      %v1129 = vrot.slane %v1127, 4
      %v1130 = vrot.slane %v889, 5
      %v1131 = vsel %vm625, %v1129, %v1130
      %s1132 = scalar_lea.vmem %s1, 20
      %v1133 = vld [vmem:[%s1132] sm:$0xf]
      %v1134 = vunpack.c.l.b16 %v1107
      %v1135 = vunpack.c.l.b16 %v1110
      %v1136 = vunpack.c.l.b16 %v1114
      %v1137 = vunpack.c.l.b16 %v1117
      %v1138 = vunpack.c.l.b16 %v1121
      %v1139 = vunpack.c.l.b16 %v1124
      %v1140 = vunpack.c.l.b16 %v1128
      %v1141 = vunpack.c.l.b16 %v1131
      %v1142 = vpack.c.b16 %v1135, %v1134
      %v1143 = vpack.c.b16 %v1137, %v1136
      %v1144 = vpack.c.b16 %v1139, %v1138
      %v1145 = vpack.c.b16 %v1141, %v1140
      %v1147 = vsel %vm429, %v1142, 0
      %v1150 = vsel %vm429, %v1143, 0
      %v1153 = vsel %vm429, %v1144, 0
      %v1156 = vsel %vm429, %v1145, 0
      %v1159 = vsel %vm442, %v1133, 0
      %1161 = vmatprep.subr.bf16.mxu0 0
      %1162 = vmatpush1.bf16.msra.mxu0 %v1159
      %1163 = vmatprep.subr.bf16.mxu0 0
      %1164 = vmatpush1.bf16.msra.mxu0 0
      %1165 = vmatprep.subr.bf16.mxu0 0
      %1166 = vmatpush1.bf16.msra.mxu0 0
      %1167 = vmatprep.subr.bf16.mxu0 0
      %1168 = vmatpush1.bf16.msra.mxu0 0
      %1169 = vmatprep.subr.bf16.mxu0 0
      %1170 = vmatpush1.bf16.msra.mxu0 0
      %1171 = vmatprep.subr.bf16.mxu0 0
      %1172 = vmatpush1.bf16.msra.mxu0 0
      %1173 = vmatprep.subr.bf16.mxu0 0
      %1174 = vmatpush1.bf16.msra.mxu0 0
      %1175 = vmatprep.subr.bf16.mxu0 0
      %1176 = vmatpush1.bf16.msra.mxu0 0
      %1177 = vmatprep.subr.bf16.mxu0 0
      %1178 = vmatpush1.bf16.msra.mxu0 0
      %1179 = vmatprep.subr.bf16.mxu0 0
      %1180 = vmatpush1.bf16.msra.mxu0 0
      %1181 = vmatprep.subr.bf16.mxu0 0
      %1182 = vmatpush1.bf16.msra.mxu0 0
      %1183 = vmatprep.subr.bf16.mxu0 0
      %1184 = vmatpush1.bf16.msra.mxu0 0
      %1185 = vmatprep.subr.bf16.mxu0 0
      %1186 = vmatpush1.bf16.msra.mxu0 0
      %1187 = vmatprep.subr.bf16.mxu0 0
      %1188 = vmatpush1.bf16.msra.mxu0 0
      %1189 = vmatprep.subr.bf16.mxu0 0
      %1190 = vmatpush1.bf16.msra.mxu0 0
      %1191 = vmatprep.subr.bf16.mxu0 0
      %1192 = vmatpush1.bf16.msra.mxu0 0
      %1193 = vmatprep.mubr.bf16.mxu0 0
      %1194 = vmatmul.mubr.bf16.gmra.mrb[0].mxu0 %v1147
      %v1195 = vpop.f32.mrb[0].mxu0
      %v1196 = vadd.f32 0.0, %v1195
      %v1197 = vpop.f32.mrb[0].mxu0
      %v1198 = vpop.f32.mrb[0].mxu0
      %v1199 = vadd.f32 0.0, %v1198
      %v1200 = vpop.f32.mrb[0].mxu0
      %1201 = vmatprep.mubr.bf16.mxu0 0
      %1202 = vmatmul.mubr.bf16.gmra.mrb[0].mxu0 %v1150
      %v1203 = vpop.f32.mrb[0].mxu0
      %v1204 = vadd.f32 0.0, %v1203
      %v1205 = vpop.f32.mrb[0].mxu0
      %v1206 = vpop.f32.mrb[0].mxu0
      %v1207 = vadd.f32 0.0, %v1206
      %v1208 = vpop.f32.mrb[0].mxu0
      %1209 = vmatprep.mubr.bf16.mxu0 0
      %1210 = vmatmul.mubr.bf16.gmra.mrb[0].mxu0 %v1153
      %v1211 = vpop.f32.mrb[0].mxu0
      %v1212 = vadd.f32 0.0, %v1211
      %v1213 = vpop.f32.mrb[0].mxu0
      %v1214 = vpop.f32.mrb[0].mxu0
      %v1215 = vadd.f32 0.0, %v1214
      %v1216 = vpop.f32.mrb[0].mxu0
      %1217 = vmatprep.mubr.bf16.mxu0 0
      %1218 = vmatmul.mubr.bf16.gmra.mrb[0].mxu0 %v1156
      %v1219 = vpop.f32.mrb[0].mxu0
      %v1220 = vadd.f32 0.0, %v1219
      %v1221 = vpop.f32.mrb[0].mxu0
      %v1222 = vpop.f32.mrb[0].mxu0
      %v1223 = vadd.f32 0.0, %v1222
      %v1224 = vpop.f32.mrb[0].mxu0
      %1225 = vdwg.mxu0
      %v1226 = vadd.f32 %v1080, %v1196
      %v1227 = vadd.f32 %v1081, %v1199
      %v1228 = vadd.f32 %v1082, %v1204
      %v1229 = vadd.f32 %v1083, %v1207
      %v1230 = vadd.f32 %v1084, %v1212
      %v1231 = vadd.f32 %v1085, %v1215
      %v1232 = vadd.f32 %v1086, %v1220
      %v1233 = vadd.f32 %v1087, %v1223
      %s1234 = sadd.s32 %s299, 2
      %s1235 = smul.u32 %s1234, 3
      %s1236 = smul.addr %s1235, 4
      %s1237 = scalar_lea.vmem %s278, %s1236
      %v1238 = vld [vmem:[%s1237] sm:$0xf]
      %v1239 = vld [vmem:[%s1237 + $0x4] sm:$0xf]
      %v1240 = vld [vmem:[%s1237 + $0xc] sm:$0xf]
      %v1241 = vld [vmem:[%s1237 + $0x10] sm:$0xf]
      %v1242 = vld [vmem:[%s1237 + $0x18] sm:$0xf]
      %v1243 = vld [vmem:[%s1237 + $0x1c] sm:$0xf]
      %v1244 = vld [vmem:[%s1237 + $0x24] sm:$0xf]
      %v1245 = vld [vmem:[%s1237 + $0x28] sm:$0xf]
      %s1246 = scalar_lea.vmem %s1, 24
      %v1247 = vld [vmem:[%s1246] sm:$0xf]
      %v1256 = vunpack.c.l.b16 %v1238
      %v1257 = vunpack.c.l.b16 %v1239
      %v1258 = vunpack.c.l.b16 %v1240
      %v1259 = vunpack.c.l.b16 %v1241
      %v1260 = vunpack.c.l.b16 %v1242
      %v1261 = vunpack.c.l.b16 %v1243
      %v1262 = vunpack.c.l.b16 %v1244
      %v1263 = vunpack.c.l.b16 %v1245
      %v1264 = vpack.c.b16 %v1257, %v1256
      %v1265 = vpack.c.b16 %v1259, %v1258
      %v1266 = vpack.c.b16 %v1261, %v1260
      %v1267 = vpack.c.b16 %v1263, %v1262
      %v1269 = vsel %vm429, %v1264, 0
      %v1272 = vsel %vm429, %v1265, 0
      %v1275 = vsel %vm429, %v1266, 0
      %v1278 = vsel %vm429, %v1267, 0
      %v1281 = vsel %vm442, %v1247, 0
      %1283 = vmatprep.subr.bf16.mxu0 0
      %1284 = vmatpush1.bf16.msra.mxu0 %v1281
      %1285 = vmatprep.subr.bf16.mxu0 0
      %1286 = vmatpush1.bf16.msra.mxu0 0
      %1287 = vmatprep.subr.bf16.mxu0 0
      %1288 = vmatpush1.bf16.msra.mxu0 0
      %1289 = vmatprep.subr.bf16.mxu0 0
      %1290 = vmatpush1.bf16.msra.mxu0 0
      %1291 = vmatprep.subr.bf16.mxu0 0
      %1292 = vmatpush1.bf16.msra.mxu0 0
      %1293 = vmatprep.subr.bf16.mxu0 0
      %1294 = vmatpush1.bf16.msra.mxu0 0
      %1295 = vmatprep.subr.bf16.mxu0 0
      %1296 = vmatpush1.bf16.msra.mxu0 0
      %1297 = vmatprep.subr.bf16.mxu0 0
      %1298 = vmatpush1.bf16.msra.mxu0 0
      %1299 = vmatprep.subr.bf16.mxu0 0
      %1300 = vmatpush1.bf16.msra.mxu0 0
      %1301 = vmatprep.subr.bf16.mxu0 0
      %1302 = vmatpush1.bf16.msra.mxu0 0
      %1303 = vmatprep.subr.bf16.mxu0 0
      %1304 = vmatpush1.bf16.msra.mxu0 0
      %1305 = vmatprep.subr.bf16.mxu0 0
      %1306 = vmatpush1.bf16.msra.mxu0 0
      %1307 = vmatprep.subr.bf16.mxu0 0
      %1308 = vmatpush1.bf16.msra.mxu0 0
      %1309 = vmatprep.subr.bf16.mxu0 0
      %1310 = vmatpush1.bf16.msra.mxu0 0
      %1311 = vmatprep.subr.bf16.mxu0 0
      %1312 = vmatpush1.bf16.msra.mxu0 0
      %1313 = vmatprep.subr.bf16.mxu0 0
      %1314 = vmatpush1.bf16.msra.mxu0 0
      %1315 = vmatprep.mubr.bf16.mxu0 0
      %1316 = vmatmul.mubr.bf16.gmra.mrb[0].mxu0 %v1269
      %v1317 = vpop.f32.mrb[0].mxu0
      %v1318 = vadd.f32 0.0, %v1317
      %v1319 = vpop.f32.mrb[0].mxu0
      %v1320 = vpop.f32.mrb[0].mxu0
      %v1321 = vadd.f32 0.0, %v1320
      %v1322 = vpop.f32.mrb[0].mxu0
      %1323 = vmatprep.mubr.bf16.mxu0 0
      %1324 = vmatmul.mubr.bf16.gmra.mrb[0].mxu0 %v1272
      %v1325 = vpop.f32.mrb[0].mxu0
      %v1326 = vadd.f32 0.0, %v1325
      %v1327 = vpop.f32.mrb[0].mxu0
      %v1328 = vpop.f32.mrb[0].mxu0
      %v1329 = vadd.f32 0.0, %v1328
      %v1330 = vpop.f32.mrb[0].mxu0
      %1331 = vmatprep.mubr.bf16.mxu0 0
      %1332 = vmatmul.mubr.bf16.gmra.mrb[0].mxu0 %v1275
      %v1333 = vpop.f32.mrb[0].mxu0
      %v1334 = vadd.f32 0.0, %v1333
      %v1335 = vpop.f32.mrb[0].mxu0
      %v1336 = vpop.f32.mrb[0].mxu0
      %v1337 = vadd.f32 0.0, %v1336
      %v1338 = vpop.f32.mrb[0].mxu0
      %1339 = vmatprep.mubr.bf16.mxu0 0
      %1340 = vmatmul.mubr.bf16.gmra.mrb[0].mxu0 %v1278
      %v1341 = vpop.f32.mrb[0].mxu0
      %v1342 = vadd.f32 0.0, %v1341
      %v1343 = vpop.f32.mrb[0].mxu0
      %v1344 = vpop.f32.mrb[0].mxu0
      %v1345 = vadd.f32 0.0, %v1344
      %v1346 = vpop.f32.mrb[0].mxu0
      %1347 = vdwg.mxu0
      %v1348 = vadd.f32 %v1226, %v1318
      %v1349 = vadd.f32 %v1227, %v1321
      %v1350 = vadd.f32 %v1228, %v1326
      %v1351 = vadd.f32 %v1229, %v1329
      %v1352 = vadd.f32 %v1230, %v1334
      %v1353 = vadd.f32 %v1231, %v1337
      %v1354 = vadd.f32 %v1232, %v1342
      %v1355 = vadd.f32 %v1233, %v1345
      %v1356 = vld [vmem:[%s1237] sm:$0xf]
      %v1357 = vld [vmem:[%s1237 + $0x4] sm:$0xf]
      %v1358 = vld [vmem:[%s1237 + $0x8] sm:$0x1]
      %v1359 = vld [vmem:[%s1237 + $0xc] sm:$0xf]
      %v1360 = vld [vmem:[%s1237 + $0x10] sm:$0xf]
      %v1361 = vld [vmem:[%s1237 + $0x14] sm:$0x1]
      %v1362 = vld [vmem:[%s1237 + $0x18] sm:$0xf]
      %v1363 = vld [vmem:[%s1237 + $0x1c] sm:$0xf]
      %v1364 = vld [vmem:[%s1237 + $0x20] sm:$0x1]
      %v1365 = vld [vmem:[%s1237 + $0x24] sm:$0xf]
      %v1366 = vld [vmem:[%s1237 + $0x28] sm:$0xf]
      %v1367 = vld [vmem:[%s1237 + $0x2c] sm:$0x1]
      %v1369 = vshrl.u32 %v1356, 16
      %v1371 = vrot.slane %v1369, 4
      %v1372 = vshll.u32 %v1356, 16
      %v1374 = vrot.slane %v1372, 5
      %v1375 = vor.u32 %v1371, %v1374
      %v1376 = vrot.slane %v1375, 4
      %v1378 = vshll.u32 %v1357, 16
      %v1380 = vrot.slane %v1378, 5
      %v1381 = vsel %vm318, %v1376, %v1380
      %v1382 = vshrl.u32 %v1357, 16
      %v1384 = vrot.slane %v1382, 4
      %v1385 = vor.u32 %v1384, %v1380
      %v1386 = vrot.slane %v1385, 4
      %v1388 = vshll.u32 %v1358, 16
      %v1390 = vrot.slane %v1388, 5
      %v1391 = vsel %vm318, %v1386, %v1390
      %v1393 = vshrl.u32 %v1359, 16
      %v1395 = vrot.slane %v1393, 4
      %v1396 = vshll.u32 %v1359, 16
      %v1398 = vrot.slane %v1396, 5
      %v1399 = vor.u32 %v1395, %v1398
      %v1400 = vrot.slane %v1399, 4
      %v1402 = vshll.u32 %v1360, 16
      %v1404 = vrot.slane %v1402, 5
      %v1405 = vsel %vm318, %v1400, %v1404
      %v1406 = vshrl.u32 %v1360, 16
      %v1408 = vrot.slane %v1406, 4
      %v1409 = vor.u32 %v1408, %v1404
      %v1410 = vrot.slane %v1409, 4
      %v1412 = vshll.u32 %v1361, 16
      %v1414 = vrot.slane %v1412, 5
      %v1415 = vsel %vm318, %v1410, %v1414
      %v1417 = vshrl.u32 %v1362, 16
      %v1419 = vrot.slane %v1417, 4
      %v1420 = vshll.u32 %v1362, 16
      %v1422 = vrot.slane %v1420, 5
      %v1423 = vor.u32 %v1419, %v1422
      %v1424 = vrot.slane %v1423, 4
      %v1426 = vshll.u32 %v1363, 16
      %v1428 = vrot.slane %v1426, 5
      %v1429 = vsel %vm318, %v1424, %v1428
      %v1430 = vshrl.u32 %v1363, 16
      %v1432 = vrot.slane %v1430, 4
      %v1433 = vor.u32 %v1432, %v1428
      %v1434 = vrot.slane %v1433, 4
      %v1436 = vshll.u32 %v1364, 16
      %v1438 = vrot.slane %v1436, 5
      %v1439 = vsel %vm318, %v1434, %v1438
      %v1441 = vshrl.u32 %v1365, 16
      %v1443 = vrot.slane %v1441, 4
      %v1444 = vshll.u32 %v1365, 16
      %v1446 = vrot.slane %v1444, 5
      %v1447 = vor.u32 %v1443, %v1446
      %v1448 = vrot.slane %v1447, 4
      %v1450 = vshll.u32 %v1366, 16
      %v1452 = vrot.slane %v1450, 5
      %v1453 = vsel %vm318, %v1448, %v1452
      %v1454 = vshrl.u32 %v1366, 16
      %v1456 = vrot.slane %v1454, 4
      %v1457 = vor.u32 %v1456, %v1452
      %v1458 = vrot.slane %v1457, 4
      %v1460 = vshll.u32 %v1367, 16
      %v1462 = vrot.slane %v1460, 5
      %v1463 = vsel %vm318, %v1458, %v1462
      %s1464 = scalar_lea.vmem %s1, 28
      %v1465 = vld [vmem:[%s1464] sm:$0xf]
      %v1466 = vunpack.c.l.b16 %v1381
      %v1467 = vunpack.c.l.b16 %v1391
      %v1468 = vunpack.c.l.b16 %v1405
      %v1469 = vunpack.c.l.b16 %v1415
      %v1470 = vunpack.c.l.b16 %v1429
      %v1471 = vunpack.c.l.b16 %v1439
      %v1472 = vunpack.c.l.b16 %v1453
      %v1473 = vunpack.c.l.b16 %v1463
      %v1474 = vpack.c.b16 %v1467, %v1466
      %v1475 = vpack.c.b16 %v1469, %v1468
      %v1476 = vpack.c.b16 %v1471, %v1470
      %v1477 = vpack.c.b16 %v1473, %v1472
      %v1479 = vsel %vm429, %v1474, 0
      %v1482 = vsel %vm429, %v1475, 0
      %v1485 = vsel %vm429, %v1476, 0
      %v1488 = vsel %vm429, %v1477, 0
      %v1491 = vsel %vm442, %v1465, 0
      %1493 = vmatprep.subr.bf16.mxu0 0
      %1494 = vmatpush1.bf16.msra.mxu0 %v1491
      %1495 = vmatprep.subr.bf16.mxu0 0
      %1496 = vmatpush1.bf16.msra.mxu0 0
      %1497 = vmatprep.subr.bf16.mxu0 0
      %1498 = vmatpush1.bf16.msra.mxu0 0
      %1499 = vmatprep.subr.bf16.mxu0 0
      %1500 = vmatpush1.bf16.msra.mxu0 0
      %1501 = vmatprep.subr.bf16.mxu0 0
      %1502 = vmatpush1.bf16.msra.mxu0 0
      %1503 = vmatprep.subr.bf16.mxu0 0
      %1504 = vmatpush1.bf16.msra.mxu0 0
      %1505 = vmatprep.subr.bf16.mxu0 0
      %1506 = vmatpush1.bf16.msra.mxu0 0
      %1507 = vmatprep.subr.bf16.mxu0 0
      %1508 = vmatpush1.bf16.msra.mxu0 0
      %1509 = vmatprep.subr.bf16.mxu0 0
      %1510 = vmatpush1.bf16.msra.mxu0 0
      %1511 = vmatprep.subr.bf16.mxu0 0
      %1512 = vmatpush1.bf16.msra.mxu0 0
      %1513 = vmatprep.subr.bf16.mxu0 0
      %1514 = vmatpush1.bf16.msra.mxu0 0
      %1515 = vmatprep.subr.bf16.mxu0 0
      %1516 = vmatpush1.bf16.msra.mxu0 0
      %1517 = vmatprep.subr.bf16.mxu0 0
      %1518 = vmatpush1.bf16.msra.mxu0 0
      %1519 = vmatprep.subr.bf16.mxu0 0
      %1520 = vmatpush1.bf16.msra.mxu0 0
      %1521 = vmatprep.subr.bf16.mxu0 0
      %1522 = vmatpush1.bf16.msra.mxu0 0
      %1523 = vmatprep.subr.bf16.mxu0 0
      %1524 = vmatpush1.bf16.msra.mxu0 0
      %1525 = vmatprep.mubr.bf16.mxu0 0
      %1526 = vmatmul.mubr.bf16.gmra.mrb[0].mxu0 %v1479
      %v1527 = vpop.f32.mrb[0].mxu0
      %v1528 = vadd.f32 0.0, %v1527
      %v1529 = vpop.f32.mrb[0].mxu0
      %v1530 = vpop.f32.mrb[0].mxu0
      %v1531 = vadd.f32 0.0, %v1530
      %v1532 = vpop.f32.mrb[0].mxu0
      %1533 = vmatprep.mubr.bf16.mxu0 0
      %1534 = vmatmul.mubr.bf16.gmra.mrb[0].mxu0 %v1482
      %v1535 = vpop.f32.mrb[0].mxu0
      %v1536 = vadd.f32 0.0, %v1535
      %v1537 = vpop.f32.mrb[0].mxu0
      %v1538 = vpop.f32.mrb[0].mxu0
      %v1539 = vadd.f32 0.0, %v1538
      %v1540 = vpop.f32.mrb[0].mxu0
      %1541 = vmatprep.mubr.bf16.mxu0 0
      %1542 = vmatmul.mubr.bf16.gmra.mrb[0].mxu0 %v1485
      %v1543 = vpop.f32.mrb[0].mxu0
      %v1544 = vadd.f32 0.0, %v1543
      %v1545 = vpop.f32.mrb[0].mxu0
      %v1546 = vpop.f32.mrb[0].mxu0
      %v1547 = vadd.f32 0.0, %v1546
      %v1548 = vpop.f32.mrb[0].mxu0
      %1549 = vmatprep.mubr.bf16.mxu0 0
      %1550 = vmatmul.mubr.bf16.gmra.mrb[0].mxu0 %v1488
      %v1551 = vpop.f32.mrb[0].mxu0
      %v1552 = vadd.f32 0.0, %v1551
      %v1553 = vpop.f32.mrb[0].mxu0
      %v1554 = vpop.f32.mrb[0].mxu0
      %v1555 = vadd.f32 0.0, %v1554
      %v1556 = vpop.f32.mrb[0].mxu0
      %1557 = vdwg.mxu0
      %v1558 = vadd.f32 %v1348, %v1528
      %v1559 = vadd.f32 %v1349, %v1531
      %v1560 = vadd.f32 %v1350, %v1536
      %v1561 = vadd.f32 %v1351, %v1539
      %v1562 = vadd.f32 %v1352, %v1544
      %v1563 = vadd.f32 %v1353, %v1547
      %v1564 = vadd.f32 %v1354, %v1552
      %v1565 = vadd.f32 %v1355, %v1555
      %v1566 = vld [vmem:[%s1237] sm:$0xe]
      %v1567 = vld [vmem:[%s1237 + $0xc] sm:$0xe]
      %v1568 = vld [vmem:[%s1237 + $0x18] sm:$0xe]
      %v1569 = vld [vmem:[%s1237 + $0x24] sm:$0xe]
      %v1582 = vrot.slane %v1566, 5
      %v1583 = vrot.slane %v1582, 4
      %v1584 = vrot.slane %v1357, 5
      %v1585 = vsel %vm625, %v1583, %v1584
      %v1586 = vrot.slane %v1584, 4
      %v1587 = vrot.slane %v1358, 5
      %v1588 = vsel %vm625, %v1586, %v1587
      %v1589 = vrot.slane %v1567, 5
      %v1590 = vrot.slane %v1589, 4
      %v1591 = vrot.slane %v1360, 5
      %v1592 = vsel %vm625, %v1590, %v1591
      %v1593 = vrot.slane %v1591, 4
      %v1594 = vrot.slane %v1361, 5
      %v1595 = vsel %vm625, %v1593, %v1594
      %v1596 = vrot.slane %v1568, 5
      %v1597 = vrot.slane %v1596, 4
      %v1598 = vrot.slane %v1363, 5
      %v1599 = vsel %vm625, %v1597, %v1598
      %v1600 = vrot.slane %v1598, 4
      %v1601 = vrot.slane %v1364, 5
      %v1602 = vsel %vm625, %v1600, %v1601
      %v1603 = vrot.slane %v1569, 5
      %v1604 = vrot.slane %v1603, 4
      %v1605 = vrot.slane %v1366, 5
      %v1606 = vsel %vm625, %v1604, %v1605
      %v1607 = vrot.slane %v1605, 4
      %v1608 = vrot.slane %v1367, 5
      %v1609 = vsel %vm625, %v1607, %v1608
      %s1610 = scalar_lea.vmem %s1, 32
      %v1611 = vld [vmem:[%s1610] sm:$0xf]
      %v1612 = vunpack.c.l.b16 %v1585
      %v1613 = vunpack.c.l.b16 %v1588
      %v1614 = vunpack.c.l.b16 %v1592
      %v1615 = vunpack.c.l.b16 %v1595
      %v1616 = vunpack.c.l.b16 %v1599
      %v1617 = vunpack.c.l.b16 %v1602
      %v1618 = vunpack.c.l.b16 %v1606
      %v1619 = vunpack.c.l.b16 %v1609
      %v1620 = vpack.c.b16 %v1613, %v1612
      %v1621 = vpack.c.b16 %v1615, %v1614
      %v1622 = vpack.c.b16 %v1617, %v1616
      %v1623 = vpack.c.b16 %v1619, %v1618
      %v1625 = vsel %vm429, %v1620, 0
      %v1628 = vsel %vm429, %v1621, 0
      %v1631 = vsel %vm429, %v1622, 0
      %v1634 = vsel %vm429, %v1623, 0
      %v1637 = vsel %vm442, %v1611, 0
      %1639 = vmatprep.subr.bf16.mxu0 0
      %1640 = vmatpush1.bf16.msra.mxu0 %v1637
      %1641 = vmatprep.subr.bf16.mxu0 0
      %1642 = vmatpush1.bf16.msra.mxu0 0
      %1643 = vmatprep.subr.bf16.mxu0 0
      %1644 = vmatpush1.bf16.msra.mxu0 0
      %1645 = vmatprep.subr.bf16.mxu0 0
      %1646 = vmatpush1.bf16.msra.mxu0 0
      %1647 = vmatprep.subr.bf16.mxu0 0
      %1648 = vmatpush1.bf16.msra.mxu0 0
      %1649 = vmatprep.subr.bf16.mxu0 0
      %1650 = vmatpush1.bf16.msra.mxu0 0
      %1651 = vmatprep.subr.bf16.mxu0 0
      %1652 = vmatpush1.bf16.msra.mxu0 0
      %1653 = vmatprep.subr.bf16.mxu0 0
      %1654 = vmatpush1.bf16.msra.mxu0 0
      %1655 = vmatprep.subr.bf16.mxu0 0
      %1656 = vmatpush1.bf16.msra.mxu0 0
      %1657 = vmatprep.subr.bf16.mxu0 0
      %1658 = vmatpush1.bf16.msra.mxu0 0
      %1659 = vmatprep.subr.bf16.mxu0 0
      %1660 = vmatpush1.bf16.msra.mxu0 0
      %1661 = vmatprep.subr.bf16.mxu0 0
      %1662 = vmatpush1.bf16.msra.mxu0 0
      %1663 = vmatprep.subr.bf16.mxu0 0
      %1664 = vmatpush1.bf16.msra.mxu0 0
      %1665 = vmatprep.subr.bf16.mxu0 0
      %1666 = vmatpush1.bf16.msra.mxu0 0
      %1667 = vmatprep.subr.bf16.mxu0 0
      %1668 = vmatpush1.bf16.msra.mxu0 0
      %1669 = vmatprep.subr.bf16.mxu0 0
      %1670 = vmatpush1.bf16.msra.mxu0 0
      %1671 = vmatprep.mubr.bf16.mxu0 0
      %1672 = vmatmul.mubr.bf16.gmra.mrb[0].mxu0 %v1625
      %v1673 = vpop.f32.mrb[0].mxu0
      %v1674 = vadd.f32 0.0, %v1673
      %v1675 = vpop.f32.mrb[0].mxu0
      %v1676 = vpop.f32.mrb[0].mxu0
      %v1677 = vadd.f32 0.0, %v1676
      %v1678 = vpop.f32.mrb[0].mxu0
      %1679 = vmatprep.mubr.bf16.mxu0 0
      %1680 = vmatmul.mubr.bf16.gmra.mrb[0].mxu0 %v1628
      %v1681 = vpop.f32.mrb[0].mxu0
      %v1682 = vadd.f32 0.0, %v1681
      %v1683 = vpop.f32.mrb[0].mxu0
      %v1684 = vpop.f32.mrb[0].mxu0
      %v1685 = vadd.f32 0.0, %v1684
      %v1686 = vpop.f32.mrb[0].mxu0
      %1687 = vmatprep.mubr.bf16.mxu0 0
      %1688 = vmatmul.mubr.bf16.gmra.mrb[0].mxu0 %v1631
      %v1689 = vpop.f32.mrb[0].mxu0
      %v1690 = vadd.f32 0.0, %v1689
      %v1691 = vpop.f32.mrb[0].mxu0
      %v1692 = vpop.f32.mrb[0].mxu0
      %v1693 = vadd.f32 0.0, %v1692
      %v1694 = vpop.f32.mrb[0].mxu0
      %1695 = vmatprep.mubr.bf16.mxu0 0
      %1696 = vmatmul.mubr.bf16.gmra.mrb[0].mxu0 %v1634
      %v1697 = vpop.f32.mrb[0].mxu0
      %v1698 = vadd.f32 0.0, %v1697
      %v1699 = vpop.f32.mrb[0].mxu0
      %v1700 = vpop.f32.mrb[0].mxu0
      %v1701 = vadd.f32 0.0, %v1700
      %v1702 = vpop.f32.mrb[0].mxu0
      %1703 = vdwg.mxu0
      %v1704 = vadd.f32 %v1558, %v1674
      %v1705 = vadd.f32 %v1559, %v1677
      %v1706 = vadd.f32 %v1560, %v1682
      %v1707 = vadd.f32 %v1561, %v1685
      %v1708 = vadd.f32 %v1562, %v1690
      %v1709 = vadd.f32 %v1563, %v1693
      %v1710 = vadd.f32 %v1564, %v1698
      %v1711 = vadd.f32 %v1565, %v1701
      %v1712 = vld [vmem:[%s2] sm:$0x1]
      %v1714 = vlaneseq
      %v1715 = vshrl.u32 %v1714, 7
      %v1716 = vsub.s32 0, %v1715
      %v1717 = vrot.slane %v1712, %v1716
      %v1719 = vmul.f32 %v1704, %v1717
      %v1720 = vmul.f32 %v1705, %v1717
      %v1721 = vmul.f32 %v1706, %v1717
      %v1722 = vmul.f32 %v1707, %v1717
      %v1723 = vmul.f32 %v1708, %v1717
      %v1724 = vmul.f32 %v1709, %v1717
      %v1725 = vmul.f32 %v1710, %v1717
      %v1726 = vmul.f32 %v1711, %v1717
      %v1727 = vld [vmem:[%s3] sm:$0x1]
      %v1729 = vlaneseq
      %v1730 = vshrl.u32 %v1729, 7
      %v1731 = vsub.s32 0, %v1730
      %v1732 = vrot.slane %v1727, %v1731
      %v1734 = vadd.f32 %v1719, %v1732
      %v1735 = vadd.f32 %v1720, %v1732
      %v1736 = vadd.f32 %v1721, %v1732
      %v1737 = vadd.f32 %v1722, %v1732
      %v1738 = vadd.f32 %v1723, %v1732
      %v1739 = vadd.f32 %v1724, %v1732
      %v1740 = vadd.f32 %v1725, %v1732
      %v1741 = vadd.f32 %v1726, %v1732
      %v1742 = vmax.f32 %v1734, 0.0
      %v1743 = vmax.f32 %v1735, 0.0
      %v1744 = vmax.f32 %v1736, 0.0
      %v1745 = vmax.f32 %v1737, 0.0
      %v1746 = vmax.f32 %v1738, 0.0
      %v1747 = vmax.f32 %v1739, 0.0
      %v1748 = vmax.f32 %v1740, 0.0
      %v1749 = vmax.f32 %v1741, 0.0
      %v1750 = vpack.c.bf16 %v1743, %v1742
      %v1751 = vpack.c.bf16 %v1745, %v1744
      %v1752 = vpack.c.bf16 %v1747, %v1746
      %v1753 = vpack.c.bf16 %v1749, %v1748
      %v1754 = vld [vmem:[%s4] sm:$0xf]
      %v1756 = vsel %vm429, %v1750, 0
      %v1759 = vsel %vm429, %v1751, 0
      %v1762 = vsel %vm429, %v1752, 0
      %v1765 = vsel %vm429, %v1753, 0
      %v1768 = vsel %vm442, %v1754, 0
      %1770 = vmatprep.subr.bf16.mxu0 0
      %1771 = vmatpush1.bf16.msra.mxu0 %v1768
      %1772 = vmatprep.subr.bf16.mxu0 0
      %1773 = vmatpush1.bf16.msra.mxu0 0
      %1774 = vmatprep.subr.bf16.mxu0 0
      %1775 = vmatpush1.bf16.msra.mxu0 0
      %1776 = vmatprep.subr.bf16.mxu0 0
      %1777 = vmatpush1.bf16.msra.mxu0 0
      %1778 = vmatprep.subr.bf16.mxu0 0
      %1779 = vmatpush1.bf16.msra.mxu0 0
      %1780 = vmatprep.subr.bf16.mxu0 0
      %1781 = vmatpush1.bf16.msra.mxu0 0
      %1782 = vmatprep.subr.bf16.mxu0 0
      %1783 = vmatpush1.bf16.msra.mxu0 0
      %1784 = vmatprep.subr.bf16.mxu0 0
      %1785 = vmatpush1.bf16.msra.mxu0 0
      %1786 = vmatprep.subr.bf16.mxu0 0
      %1787 = vmatpush1.bf16.msra.mxu0 0
      %1788 = vmatprep.subr.bf16.mxu0 0
      %1789 = vmatpush1.bf16.msra.mxu0 0
      %1790 = vmatprep.subr.bf16.mxu0 0
      %1791 = vmatpush1.bf16.msra.mxu0 0
      %1792 = vmatprep.subr.bf16.mxu0 0
      %1793 = vmatpush1.bf16.msra.mxu0 0
      %1794 = vmatprep.subr.bf16.mxu0 0
      %1795 = vmatpush1.bf16.msra.mxu0 0
      %1796 = vmatprep.subr.bf16.mxu0 0
      %1797 = vmatpush1.bf16.msra.mxu0 0
      %1798 = vmatprep.subr.bf16.mxu0 0
      %1799 = vmatpush1.bf16.msra.mxu0 0
      %1800 = vmatprep.subr.bf16.mxu0 0
      %1801 = vmatpush1.bf16.msra.mxu0 0
      %1802 = vmatprep.mubr.bf16.mxu0 0
      %1803 = vmatmul.mubr.bf16.gmra.mrb[0].mxu0 %v1756
      %v1804 = vpop.f32.mrb[0].mxu0
      %v1805 = vadd.f32 0.0, %v1804
      %v1806 = vpop.f32.mrb[0].mxu0
      %v1807 = vpop.f32.mrb[0].mxu0
      %v1808 = vadd.f32 0.0, %v1807
      %v1809 = vpop.f32.mrb[0].mxu0
      %1810 = vmatprep.mubr.bf16.mxu0 0
      %1811 = vmatmul.mubr.bf16.gmra.mrb[0].mxu0 %v1759
      %v1812 = vpop.f32.mrb[0].mxu0
      %v1813 = vadd.f32 0.0, %v1812
      %v1814 = vpop.f32.mrb[0].mxu0
      %v1815 = vpop.f32.mrb[0].mxu0
      %v1816 = vadd.f32 0.0, %v1815
      %v1817 = vpop.f32.mrb[0].mxu0
      %1818 = vmatprep.mubr.bf16.mxu0 0
      %1819 = vmatmul.mubr.bf16.gmra.mrb[0].mxu0 %v1762
      %v1820 = vpop.f32.mrb[0].mxu0
      %v1821 = vadd.f32 0.0, %v1820
      %v1822 = vpop.f32.mrb[0].mxu0
      %v1823 = vpop.f32.mrb[0].mxu0
      %v1824 = vadd.f32 0.0, %v1823
      %v1825 = vpop.f32.mrb[0].mxu0
      %1826 = vmatprep.mubr.bf16.mxu0 0
      %1827 = vmatmul.mubr.bf16.gmra.mrb[0].mxu0 %v1765
      %v1828 = vpop.f32.mrb[0].mxu0
      %v1829 = vadd.f32 0.0, %v1828
      %v1830 = vpop.f32.mrb[0].mxu0
      %v1831 = vpop.f32.mrb[0].mxu0
      %v1832 = vadd.f32 0.0, %v1831
      %v1833 = vpop.f32.mrb[0].mxu0
      %1834 = vdwg.mxu0
      %vm1835 = vcmask 261120
      %1836 = vst.msk [vmem:[%s288] sm:$0xff] %vm1835, %v1805
      %1837 = vst.msk [vmem:[%s288 + $0x8] sm:$0xff] %vm1835, %v1808
      %1838 = vst.msk [vmem:[%s288 + $0x10] sm:$0xff] %vm1835, %v1813
      %1839 = vst.msk [vmem:[%s288 + $0x18] sm:$0xff] %vm1835, %v1816
      %1840 = vst.msk [vmem:[%s288 + $0x20] sm:$0xff] %vm1835, %v1821
      %1841 = vst.msk [vmem:[%s288 + $0x28] sm:$0xff] %vm1835, %v1824
      %1842 = vst.msk [vmem:[%s288 + $0x30] sm:$0xff] %vm1835, %v1829
      %1843 = vst.msk [vmem:[%s288 + $0x38] sm:$0xff] %vm1835, %v1832
      %v1844 = vsel %vm1835, %v1805, 0.0
      %v1845 = vsel %vm1835, %v1813, 0.0
      %v1846 = vadd.f32 %v1844, %v1845
      %v1847 = vsel %vm1835, %v1821, 0.0
      %v1848 = vadd.f32 %v1846, %v1847
      %v1849 = vsel %vm1835, %v1829, 0.0
      %v1850 = vadd.f32 %v1848, %v1849
      %v1851 = vsel %vm1835, %v1808, 0.0
      %v1852 = vsel %vm1835, %v1816, 0.0
      %v1853 = vadd.f32 %v1851, %v1852
      %v1854 = vsel %vm1835, %v1824, 0.0
      %v1855 = vadd.f32 %v1853, %v1854
      %v1856 = vsel %vm1835, %v1832, 0.0
      %v1857 = vadd.f32 %v1855, %v1856
      %vm1858 = vcmask 257024
      %v1859 = vsel %vm1858, %v1850, 0.0
      %v1860 = vrot.slane %v1859, 4
      %v1861 = vadd.f32 %v1859, %v1860
      %v1862 = vrot.slane %v1861, 2
      %v1863 = vadd.f32 %v1861, %v1862
      %v1864 = vrot.slane %v1863, 1
      %v1865 = vadd.f32 %v1863, %v1864
      %v1866 = vmul.f32 %v1865, 0.0625
      %v1868 = vrot.slane %v1850, 4
      %v1870 = vsel %vm1858, %v1868, 0.0
      %v1871 = vrot.slane %v1870, 4
      %v1872 = vadd.f32 %v1870, %v1871
      %v1873 = vrot.slane %v1872, 2
      %v1874 = vadd.f32 %v1872, %v1873
      %v1875 = vrot.slane %v1874, 1
      %v1876 = vadd.f32 %v1874, %v1875
      %v1877 = vmul.f32 %v1876, 0.0625
      %v1878 = vsel %vm1858, %v1857, 0.0
      %v1879 = vrot.slane %v1878, 4
      %v1880 = vadd.f32 %v1878, %v1879
      %v1881 = vrot.slane %v1880, 2
      %v1882 = vadd.f32 %v1880, %v1881
      %v1883 = vrot.slane %v1882, 1
      %v1884 = vadd.f32 %v1882, %v1883
      %v1885 = vmul.f32 %v1884, 0.0625
      %v1887 = vrot.slane %v1857, 4
      %v1889 = vsel %vm1858, %v1887, 0.0
      %v1890 = vrot.slane %v1889, 4
      %v1891 = vadd.f32 %v1889, %v1890
      %v1892 = vrot.slane %v1891, 2
      %v1893 = vadd.f32 %v1891, %v1892
      %v1894 = vrot.slane %v1893, 1
      %v1895 = vadd.f32 %v1893, %v1894
      %v1896 = vmul.f32 %v1895, 0.0625
      %vm1897 = vcmask 1040384
      %v1898 = vsel %vm1897, %v1866, %v1877
      %vm1899 = vcmask 1041408
      %v1900 = vsel %vm1899, %v1898, %v1885
      %vm1901 = vcmask 1042432
      %v1902 = vsel %vm1901, %v1900, %v1896
      %1903 = vst.msk [vmem:[%s297] sm:$0xf] %vm1858, %v1902
      %s1904 = smul.u32 4, %s23
      %p1905 = scmp.lt.s32.totalorder %s22, 1
      %s1906 = scalar_select %p1905, %s22, 1
      %p1907 = scmp.lt.s32.totalorder %s1904, 15
      %s1908 = scalar_select %p1907, %s1904, 15
      %s1909 = smul.addr %s1908, 2
      %s1910 = smul.addr %s1906, 32
      %s1911 = sadd.s32 %s1909, %s1910
      %s1912 = smul.addr %s1911, 8
      %s1913 = scalar_lea.vmem %s5, %s1912
      %p1914 = scmp.lt.s32.totalorder %s22, 1
      %s1915 = scalar_select %p1914, %s22, 1
      %p1916 = scmp.lt.s32.totalorder %s23, 3
      %s1917 = scalar_select %p1916, %s23, 3
      %s1918 = smul.addr %s1915, 4
      %s1919 = sadd.s32 %s1917, %s1918
      %s1920 = smul.addr %s1919, 4
      %s1921 = scalar_lea.vmem %s6, %s1920
      // Predicated region
      $region41: #{preact_bottleneck_forward.5} parent=39 // pred_check
        %p1922 = pneg %p160
      $region42: #{preact_bottleneck_forward.5} parent=39 // pred_check_branch
        %1924 = sbr.rel (%p1922) target = $region44
      $region43: #{preact_bottleneck_forward.5} parent=39 // pred_region
        %s1925 = smul.u32 4, %s23
      $region44: #{preact_bottleneck_forward.5} parent=39 // pred_fallthru
        _
      // Predicated region
      $region45: #{preact_bottleneck_forward.5} parent=39 // pred_check
        %p1926 = pneg %p188
      $region46: #{preact_bottleneck_forward.5} parent=39 // pred_check_branch
        %1928 = sbr.rel (%p1926) target = $region48
      $region47: #{preact_bottleneck_forward.5} parent=39 // pred_region
        _
      $region48: #{preact_bottleneck_forward.5} parent=39 // pred_fallthru
        _
    $region40: #{preact_bottleneck_forward.5} parent=5 // pred_fallthru
      _
    %p1929 = scmp.le.s32.totalorder 2, %s13
    // Predicated region
    $region49: #{preact_bottleneck_forward.5} parent=5 // pred_check
      %p1930 = pneg %p1929
    $region50: #{preact_bottleneck_forward.5} parent=5 // pred_check_branch
      %1932 = sbr.rel (%p1930) target = $region52
    $region51: #{preact_bottleneck_forward.5} parent=5 // pred_region
      %s1933 = ssub.s32 %s13, 2
      // Predicated region
      $region53: #{preact_bottleneck_forward.5} parent=51 // pred_check
        %p1934 = pneg %p166
      $region54: #{preact_bottleneck_forward.5} parent=51 // pred_check_branch
        %1936 = sbr.rel (%p1934) target = $region56
      $region55: #{preact_bottleneck_forward.5} parent=51 // pred_region
        %s1937 = smul.u32 4, %s25
        %p1938 = scmp.lt.s32.totalorder %s24, 1
        %s1939 = scalar_select %p1938, %s24, 1
        %p1940 = scmp.lt.s32.totalorder %s1937, 15
        %s1941 = scalar_select %p1940, %s1937, 15
        %s1942 = smul.addr %s1941, 2
        %s1943 = smul.addr %s1939, 32
        %s1944 = sadd.s32 %s1942, %s1943
        %s1945 = smul.addr %s1944, 8
        %s1946 = scalar_lea.vmem %s5, %s1945
      $region56: #{preact_bottleneck_forward.5} parent=51 // pred_fallthru
        _
      // Predicated region
      $region57: #{preact_bottleneck_forward.5} parent=51 // pred_check
        %p1947 = pneg %p194
      $region58: #{preact_bottleneck_forward.5} parent=51 // pred_check_branch
        %1949 = sbr.rel (%p1947) target = $region60
      $region59: #{preact_bottleneck_forward.5} parent=51 // pred_region
        %p1950 = scmp.lt.s32.totalorder %s24, 1
        %s1951 = scalar_select %p1950, %s24, 1
        %p1952 = scmp.lt.s32.totalorder %s25, 3
        %s1953 = scalar_select %p1952, %s25, 3
        %s1954 = smul.addr %s1951, 4
        %s1955 = sadd.s32 %s1953, %s1954
        %s1956 = smul.addr %s1955, 4
        %s1957 = scalar_lea.vmem %s6, %s1956
      $region60: #{preact_bottleneck_forward.5} parent=51 // pred_fallthru
        _
    $region52: #{preact_bottleneck_forward.5} parent=5 // pred_fallthru
      _
  $region6: #{preact_bottleneck_forward.5} parent=0 // loop_footer
    %s17 = sadd.s32 1, %s13
  $region7: #{preact_bottleneck_forward.5} parent=0 // loop_footer_branch
    %12 = sbr.rel target = $region3
  $region8: #{preact_bottleneck_forward.5} parent=0 // loop_exit
    _

// kernel: preact_bottleneck_forward.6
$region0: #{preact_bottleneck_forward.6}
  #allocation0 [shape = 'u32[]', space=smem, size = 0x4, offset = 0x4, fixed_abs, tag = 'smem constant byte address 0x4 - core index']
  #allocation1 [shape = 'u32[144,128]{1,0:T(1,128)}', space=vmem, size = 0x12000, scoped, tag = 'internal scratch']
  %s0 = inlined_call_operand.vmem [shape: f32[2,4,4,32], index: 0, kind: input, shape index: {}]
  %s1 = inlined_call_operand.vmem [shape: f32[2,32], index: 1, kind: input, shape index: {}]
  %s2 = inlined_call_operand.vmem [shape: bf16[32,2], index: 2, kind: input, shape index: {}]
  %s3 = inlined_call_operand.vmem [shape: bf16[2,32], index: 3, kind: input, shape index: {}]
  %s4 = inlined_call_operand.vmem [shape: f32[27], index: 4, kind: input, shape index: {}]
  %s5 = inlined_call_operand.vmem [shape: f32[9], index: 5, kind: input, shape index: {}]
  %s6 = inlined_call_operand.hbm [shape: f32[2,32], index: 6, kind: output, shape index: {0}]
  %s7 = inlined_call_operand.vmem [shape: f32[2,32], index: 7, kind: output, shape index: {1}]
  %8 = xla_tuple %s6, %s7
  %s9 = sld [smem:[#allocation0]]
  $region50: #{preact_bottleneck_forward.6} parent=0
    _
  %s11 = ssub.s32 1, %s9
  %s12 = scalar_select 0, %s11, %s9
  $region1: #{preact_bottleneck_forward.6} parent=0
    #allocation2 [shape = 'u8[512]{0}', space=smem, size = 0x200, scoped, tag = 'input window, operand 4, single buffered']
    #allocation3 [shape = 's32[1]{0}', space=sflag, size = 0x4, scoped, tag = 'scoped memory for preact_bottleneck_forward.6']
    #allocation4 [shape = 's32[1]{0}', space=sflag, size = 0x4, scoped, tag = 'scoped memory for preact_bottleneck_forward.6']
    #allocation5 [shape = 'u8[512]{0}', space=smem, size = 0x200, scoped, tag = 'input window, operand 5, single buffered']
    #allocation6 [shape = 's32[1]{0}', space=sflag, size = 0x4, scoped, tag = 'scoped memory for preact_bottleneck_forward.6']
    #allocation7 [shape = 'u8[1024]{0}', space=vmem, size = 0x400, scoped, tag = 'output window, operand 0, single buffered']
    %13 = vsyncpa [#allocation4], 0
    %14 = vsyncpa [#allocation6], 0
    %15 = vsyncpa [#allocation3], 0
    // Predicated region
    $region2: #{preact_bottleneck_forward.6} parent=1 // pred_check
      _
    $region3: #{preact_bottleneck_forward.6} parent=1 // pred_check_branch
      %17 = sbr.rel (0) target = $region5
    $region4: #{preact_bottleneck_forward.6} parent=1 // pred_region
      _
    $region5: #{preact_bottleneck_forward.6} parent=1 // pred_fallthru
      _
    // Predicated region
    $region6: #{preact_bottleneck_forward.6} parent=1 // pred_check
      _
    $region7: #{preact_bottleneck_forward.6} parent=1 // pred_check_branch
      %19 = sbr.rel (0) target = $region9
    $region8: #{preact_bottleneck_forward.6} parent=1 // pred_region
      _
    $region9: #{preact_bottleneck_forward.6} parent=1 // pred_fallthru
      _
    // Predicated region
    $region10: #{preact_bottleneck_forward.6} parent=1 // pred_check
      _
    $region11: #{preact_bottleneck_forward.6} parent=1 // pred_check_branch
      %21 = sbr.rel (0) target = $region13
    $region12: #{preact_bottleneck_forward.6} parent=1 // pred_region
      _
    $region13: #{preact_bottleneck_forward.6} parent=1 // pred_fallthru
      _
    // Predicated region
    $region14: #{preact_bottleneck_forward.6} parent=1 // pred_check
      _
    $region15: #{preact_bottleneck_forward.6} parent=1 // pred_check_branch
      %23 = sbr.rel (0) target = $region17
    $region16: #{preact_bottleneck_forward.6} parent=1 // pred_region
      _
    $region17: #{preact_bottleneck_forward.6} parent=1 // pred_fallthru
      _
    // Predicated region
    $region18: #{preact_bottleneck_forward.6} parent=1 // pred_check
      _
    $region19: #{preact_bottleneck_forward.6} parent=1 // pred_check_branch
      %25 = sbr.rel (0) target = $region21
    $region20: #{preact_bottleneck_forward.6} parent=1 // pred_region
      %s27 = ssub.s32 16, 16
      %28 = vsyncadd [#allocation4], %s27
      %s30 = sshll.u32 %s4, 4
      %s31 = int_to_ptr.vmem [resolvable:$true] %s30
      %33 = dma.vmem_to_smem %s31, 16, [#allocation2], [#allocation4]
    $region21: #{preact_bottleneck_forward.6} parent=1 // pred_fallthru
      _
    // Predicated region
    $region22: #{preact_bottleneck_forward.6} parent=1 // pred_check
      _
    $region23: #{preact_bottleneck_forward.6} parent=1 // pred_check_branch
      %35 = sbr.rel (0) target = $region25
    $region24: #{preact_bottleneck_forward.6} parent=1 // pred_region
      %s37 = ssub.s32 16, 16
      %38 = vsyncadd [#allocation6], %s37
      %s40 = sshll.u32 %s5, 4
      %s41 = int_to_ptr.vmem [resolvable:$true] %s40
      %43 = dma.vmem_to_smem %s41, 16, [#allocation5], [#allocation6]
    $region25: #{preact_bottleneck_forward.6} parent=1 // pred_fallthru
      _
    // Predicated region
    $region26: #{preact_bottleneck_forward.6} parent=1 // pred_check
      _
    $region27: #{preact_bottleneck_forward.6} parent=1 // pred_check_branch
      %45 = sbr.rel (0) target = $region29
    $region28: #{preact_bottleneck_forward.6} parent=1 // pred_region
      %46 = dma.done [#allocation4], 16
    $region29: #{preact_bottleneck_forward.6} parent=1 // pred_fallthru
      _
    // Predicated region
    $region30: #{preact_bottleneck_forward.6} parent=1 // pred_check
      _
    $region31: #{preact_bottleneck_forward.6} parent=1 // pred_check_branch
      %48 = sbr.rel (0) target = $region33
    $region32: #{preact_bottleneck_forward.6} parent=1 // pred_region
      %49 = dma.done [#allocation6], 16
    $region33: #{preact_bottleneck_forward.6} parent=1 // pred_fallthru
      _
    %50 = sfence
    %v52 = vld [vmem:[%s0] sm:$0xf]
    %v53 = vld [vmem:[%s0 + $0x4] sm:$0xf]
    %v54 = vld [vmem:[%s0 + $0x8] sm:$0xf]
    %v55 = vld [vmem:[%s0 + $0xc] sm:$0xf]
    %v56 = vld [vmem:[%s0 + $0x10] sm:$0xf]
    %v57 = vld [vmem:[%s0 + $0x14] sm:$0xf]
    %v58 = vld [vmem:[%s0 + $0x18] sm:$0xf]
    %v59 = vld [vmem:[%s0 + $0x1c] sm:$0xf]
    %v60 = vld [vmem:[%s2] sm:$0xf]
    %v61 = vld [vmem:[%s2 + $0x4] sm:$0xf]
    %v62 = vld [vmem:[%s2 + $0x8] sm:$0xf]
    %v63 = vld [vmem:[%s2 + $0xc] sm:$0xf]
    %v64 = vld [vmem:[%s3] sm:$0x1]
    %v65 = vld [vmem:[%s1] sm:$0x3]
    %v68 = vrot.slane %v52, 1
    %v69 = vrot.slane %v56, 1
    %v72 = vadd.f32 %v52, %v68
    %v73 = vadd.f32 %v56, %v69
    %v74 = vadd.f32 %v72, %v53
    %v75 = vadd.f32 %v73, %v57
    %v78 = vrot.slane %v53, 1
    %v79 = vrot.slane %v57, 1
    %v82 = vadd.f32 %v74, %v78
    %v83 = vadd.f32 %v75, %v79
    %v84 = vmul.f32 %v82, 0.25
    %v85 = vmul.f32 %v83, 0.25
    %v88 = vrot.slane %v54, 1
    %v89 = vrot.slane %v58, 1
    %v92 = vadd.f32 %v54, %v88
    %v93 = vadd.f32 %v58, %v89
    %v94 = vadd.f32 %v92, %v55
    %v95 = vadd.f32 %v93, %v59
    %v98 = vrot.slane %v55, 1
    %v99 = vrot.slane %v59, 1
    %v102 = vadd.f32 %v94, %v98
    %v103 = vadd.f32 %v95, %v99
    %v104 = vmul.f32 %v102, 0.25
    %v105 = vmul.f32 %v103, 0.25
    %v106 = vadd.f32 %v52, 0.0
    %v107 = vadd.f32 %v56, 0.0
    %v108 = vadd.f32 %v106, %v68
    %v109 = vadd.f32 %v107, %v69
    %v110 = vrot.slane %v52, 2
    %v111 = vrot.slane %v56, 2
    %v114 = vadd.f32 %v108, %v110
    %v115 = vadd.f32 %v109, %v111
    %v116 = vrot.slane %v52, 3
    %v117 = vrot.slane %v56, 3
    %v120 = vadd.f32 %v114, %v116
    %v121 = vadd.f32 %v115, %v117
    %v122 = vadd.f32 %v120, %v53
    %v123 = vadd.f32 %v121, %v57
    %v124 = vadd.f32 %v122, %v78
    %v125 = vadd.f32 %v123, %v79
    %v126 = vrot.slane %v53, 2
    %v127 = vrot.slane %v57, 2
    %v130 = vadd.f32 %v124, %v126
    %v131 = vadd.f32 %v125, %v127
    %v132 = vrot.slane %v53, 3
    %v133 = vrot.slane %v57, 3
    %v136 = vadd.f32 %v130, %v132
    %v137 = vadd.f32 %v131, %v133
    %v138 = vadd.f32 %v136, %v54
    %v139 = vadd.f32 %v137, %v58
    %v140 = vadd.f32 %v138, %v88
    %v141 = vadd.f32 %v139, %v89
    %v142 = vrot.slane %v54, 2
    %v143 = vrot.slane %v58, 2
    %v146 = vadd.f32 %v140, %v142
    %v147 = vadd.f32 %v141, %v143
    %v148 = vrot.slane %v54, 3
    %v149 = vrot.slane %v58, 3
    %v152 = vadd.f32 %v146, %v148
    %v153 = vadd.f32 %v147, %v149
    %v154 = vadd.f32 %v152, %v55
    %v155 = vadd.f32 %v153, %v59
    %v156 = vadd.f32 %v154, %v98
    %v157 = vadd.f32 %v155, %v99
    %v158 = vrot.slane %v55, 2
    %v159 = vrot.slane %v59, 2
    %v162 = vadd.f32 %v156, %v158
    %v163 = vadd.f32 %v157, %v159
    %v164 = vrot.slane %v55, 3
    %v165 = vrot.slane %v59, 3
    %v168 = vadd.f32 %v162, %v164
    %v169 = vadd.f32 %v163, %v165
    %v170 = vmul.f32 %v168, 0.0625
    %v171 = vmul.f32 %v169, 0.0625
    %s172 = sld [smem:[#allocation2]]
    %v173 = vstv %s172
    %v174 = vmul.f32 %v173, %v170
    %v175 = vmul.f32 %v173, %v171
    %v176 = vadd.f32 %v174, 0.0
    %v177 = vadd.f32 %v175, 0.0
    %s178 = sld [smem:[#allocation2 + $0x9]]
    %v179 = vstv %s178
    %v180 = vmul.f32 %v179, %v84
    %v181 = vmul.f32 %v179, %v85
    %v182 = vadd.f32 %v176, %v180
    %v183 = vadd.f32 %v177, %v181
    %s184 = sld [smem:[#allocation2 + $0x12]]
    %v185 = vstv %s184
    %v186 = vmul.f32 %v185, %v52
    %v187 = vmul.f32 %v185, %v56
    %v188 = vadd.f32 %v182, %v186
    %v189 = vadd.f32 %v183, %v187
    %s190 = sld [smem:[#allocation2 + $0x1]]
    %v191 = vstv %s190
    %v192 = vmul.f32 %v191, %v170
    %v193 = vmul.f32 %v191, %v171
    %v194 = vadd.f32 %v188, %v192
    %v195 = vadd.f32 %v189, %v193
    %s196 = sld [smem:[#allocation2 + $0xa]]
    %v197 = vstv %s196
    %v198 = vmul.f32 %v197, %v84
    %v199 = vmul.f32 %v197, %v85
    %v200 = vadd.f32 %v194, %v198
    %v201 = vadd.f32 %v195, %v199
    %s202 = sld [smem:[#allocation2 + $0x13]]
    %v203 = vstv %s202
    %v204 = vmul.f32 %v203, %v52
    %v205 = vmul.f32 %v203, %v56
    %v208 = vrot.slane %v204, 1
    %v209 = vrot.slane %v205, 1
    %v212 = vadd.f32 %v200, %v208
    %v213 = vadd.f32 %v201, %v209
    %s214 = sld [smem:[#allocation2 + $0x2]]
    %v215 = vstv %s214
    %v216 = vmul.f32 %v215, %v170
    %v217 = vmul.f32 %v215, %v171
    %v218 = vadd.f32 %v212, %v216
    %v219 = vadd.f32 %v213, %v217
    %s220 = sld [smem:[#allocation2 + $0xb]]
    %v221 = vstv %s220
    %v222 = vmul.f32 %v221, %v84
    %v223 = vmul.f32 %v221, %v85
    %v226 = vrot.slane %v222, 2
    %v227 = vrot.slane %v223, 2
    %v230 = vadd.f32 %v218, %v226
    %v231 = vadd.f32 %v219, %v227
    %s232 = sld [smem:[#allocation2 + $0x14]]
    %v233 = vstv %s232
    %v234 = vmul.f32 %v233, %v52
    %v235 = vmul.f32 %v233, %v56
    %v238 = vrot.slane %v234, 2
    %v239 = vrot.slane %v235, 2
    %v242 = vadd.f32 %v230, %v238
    %v243 = vadd.f32 %v231, %v239
    %s244 = sld [smem:[#allocation2 + $0x3]]
    %v245 = vstv %s244
    %v246 = vmul.f32 %v245, %v170
    %v247 = vmul.f32 %v245, %v171
    %v248 = vadd.f32 %v242, %v246
    %v249 = vadd.f32 %v243, %v247
    %s250 = sld [smem:[#allocation2 + $0xc]]
    %v251 = vstv %s250
    %v252 = vmul.f32 %v251, %v84
    %v253 = vmul.f32 %v251, %v85
    %v254 = vadd.f32 %v248, %v252
    %v255 = vadd.f32 %v249, %v253
    %s256 = sld [smem:[#allocation2 + $0x15]]
    %v257 = vstv %s256
    %v258 = vmul.f32 %v257, %v53
    %v259 = vmul.f32 %v257, %v57
    %v260 = vadd.f32 %v254, %v258
    %v261 = vadd.f32 %v255, %v259
    %s262 = sld [smem:[#allocation2 + $0x4]]
    %v263 = vstv %s262
    %v264 = vmul.f32 %v263, %v170
    %v265 = vmul.f32 %v263, %v171
    %v266 = vadd.f32 %v260, %v264
    %v267 = vadd.f32 %v261, %v265
    %s268 = sld [smem:[#allocation2 + $0xd]]
    %v269 = vstv %s268
    %v270 = vmul.f32 %v269, %v84
    %v271 = vmul.f32 %v269, %v85
    %v272 = vadd.f32 %v266, %v270
    %v273 = vadd.f32 %v267, %v271
    %s274 = sld [smem:[#allocation2 + $0x16]]
    %v275 = vstv %s274
    %v276 = vmul.f32 %v275, %v53
    %v277 = vmul.f32 %v275, %v57
    %v280 = vrot.slane %v276, 1
    %v281 = vrot.slane %v277, 1
    %v284 = vadd.f32 %v272, %v280
    %v285 = vadd.f32 %v273, %v281
    %s286 = sld [smem:[#allocation2 + $0x5]]
    %v287 = vstv %s286
    %v288 = vmul.f32 %v287, %v170
    %v289 = vmul.f32 %v287, %v171
    %v290 = vadd.f32 %v284, %v288
    %v291 = vadd.f32 %v285, %v289
    %s292 = sld [smem:[#allocation2 + $0xe]]
    %v293 = vstv %s292
    %v294 = vmul.f32 %v293, %v84
    %v295 = vmul.f32 %v293, %v85
    %v298 = vrot.slane %v294, 2
    %v299 = vrot.slane %v295, 2
    %v302 = vadd.f32 %v290, %v298
    %v303 = vadd.f32 %v291, %v299
    %s304 = sld [smem:[#allocation2 + $0x17]]
    %v305 = vstv %s304
    %v306 = vmul.f32 %v305, %v53
    %v307 = vmul.f32 %v305, %v57
    %v310 = vrot.slane %v306, 2
    %v311 = vrot.slane %v307, 2
    %v314 = vadd.f32 %v302, %v310
    %v315 = vadd.f32 %v303, %v311
    %s316 = sld [smem:[#allocation2 + $0x6]]
    %v317 = vstv %s316
    %v318 = vmul.f32 %v317, %v170
    %v319 = vmul.f32 %v317, %v171
    %v320 = vadd.f32 %v314, %v318
    %v321 = vadd.f32 %v315, %v319
    %s322 = sld [smem:[#allocation2 + $0xf]]
    %v323 = vstv %s322
    %v324 = vmul.f32 %v323, %v104
    %v325 = vmul.f32 %v323, %v105
    %v326 = vadd.f32 %v320, %v324
    %v327 = vadd.f32 %v321, %v325
    %s328 = sld [smem:[#allocation2 + $0x18]]
    %v329 = vstv %s328
    %v330 = vmul.f32 %v329, %v54
    %v331 = vmul.f32 %v329, %v58
    %v332 = vadd.f32 %v326, %v330
    %v333 = vadd.f32 %v327, %v331
    %s334 = sld [smem:[#allocation2 + $0x7]]
    %v335 = vstv %s334
    %v336 = vmul.f32 %v335, %v170
    %v337 = vmul.f32 %v335, %v171
    %v338 = vadd.f32 %v332, %v336
    %v339 = vadd.f32 %v333, %v337
    %s340 = sld [smem:[#allocation2 + $0x10]]
    %v341 = vstv %s340
    %v342 = vmul.f32 %v341, %v104
    %v343 = vmul.f32 %v341, %v105
    %v344 = vadd.f32 %v338, %v342
    %v345 = vadd.f32 %v339, %v343
    %s346 = sld [smem:[#allocation2 + $0x19]]
    %v347 = vstv %s346
    %v348 = vmul.f32 %v347, %v54
    %v349 = vmul.f32 %v347, %v58
    %v352 = vrot.slane %v348, 1
    %v353 = vrot.slane %v349, 1
    %v356 = vadd.f32 %v344, %v352
    %v357 = vadd.f32 %v345, %v353
    %s358 = sld [smem:[#allocation2 + $0x8]]
    %v359 = vstv %s358
    %v360 = vmul.f32 %v359, %v170
    %v361 = vmul.f32 %v359, %v171
    %v362 = vadd.f32 %v356, %v360
    %v363 = vadd.f32 %v357, %v361
    %s364 = sld [smem:[#allocation2 + $0x11]]
    %v365 = vstv %s364
    %v366 = vmul.f32 %v365, %v104
    %v367 = vmul.f32 %v365, %v105
    %v370 = vrot.slane %v366, 2
    %v371 = vrot.slane %v367, 2
    %v374 = vadd.f32 %v362, %v370
    %v375 = vadd.f32 %v363, %v371
    %s376 = sld [smem:[#allocation2 + $0x1a]]
    %v377 = vstv %s376
    %v378 = vmul.f32 %v377, %v54
    %v379 = vmul.f32 %v377, %v58
    %v382 = vrot.slane %v378, 2
    %v383 = vrot.slane %v379, 2
    %v386 = vadd.f32 %v374, %v382
    %v387 = vadd.f32 %v375, %v383
    %v390 = vrot.slane %v186, 1
    %v391 = vrot.slane %v187, 1
    %v394 = vadd.f32 %v182, %v390
    %v395 = vadd.f32 %v183, %v391
    %v396 = vadd.f32 %v394, %v192
    %v397 = vadd.f32 %v395, %v193
    %v400 = vrot.slane %v198, 2
    %v401 = vrot.slane %v199, 2
    %v404 = vadd.f32 %v396, %v400
    %v405 = vadd.f32 %v397, %v401
    %v406 = vrot.slane %v204, 2
    %v407 = vrot.slane %v205, 2
    %v410 = vadd.f32 %v404, %v406
    %v411 = vadd.f32 %v405, %v407
    %v412 = vadd.f32 %v410, %v216
    %v413 = vadd.f32 %v411, %v217
    %v414 = vadd.f32 %v412, %v226
    %v415 = vadd.f32 %v413, %v227
    %v416 = vrot.slane %v234, 3
    %v417 = vrot.slane %v235, 3
    %v420 = vadd.f32 %v414, %v416
    %v421 = vadd.f32 %v415, %v417
    %v422 = vadd.f32 %v420, %v246
    %v423 = vadd.f32 %v421, %v247
    %v424 = vadd.f32 %v422, %v252
    %v425 = vadd.f32 %v423, %v253
    %v428 = vrot.slane %v258, 1
    %v429 = vrot.slane %v259, 1
    %v432 = vadd.f32 %v424, %v428
    %v433 = vadd.f32 %v425, %v429
    %v434 = vadd.f32 %v432, %v264
    %v435 = vadd.f32 %v433, %v265
    %v438 = vrot.slane %v270, 2
    %v439 = vrot.slane %v271, 2
    %v442 = vadd.f32 %v434, %v438
    %v443 = vadd.f32 %v435, %v439
    %v444 = vrot.slane %v276, 2
    %v445 = vrot.slane %v277, 2
    %v448 = vadd.f32 %v442, %v444
    %v449 = vadd.f32 %v443, %v445
    %v450 = vadd.f32 %v448, %v288
    %v451 = vadd.f32 %v449, %v289
    %v452 = vadd.f32 %v450, %v298
    %v453 = vadd.f32 %v451, %v299
    %v454 = vrot.slane %v306, 3
    %v455 = vrot.slane %v307, 3
    %v458 = vadd.f32 %v452, %v454
    %v459 = vadd.f32 %v453, %v455
    %v460 = vadd.f32 %v458, %v318
    %v461 = vadd.f32 %v459, %v319
    %v462 = vadd.f32 %v460, %v324
    %v463 = vadd.f32 %v461, %v325
    %v466 = vrot.slane %v330, 1
    %v467 = vrot.slane %v331, 1
    %v470 = vadd.f32 %v462, %v466
    %v471 = vadd.f32 %v463, %v467
    %v472 = vadd.f32 %v470, %v336
    %v473 = vadd.f32 %v471, %v337
    %v476 = vrot.slane %v342, 2
    %v477 = vrot.slane %v343, 2
    %v480 = vadd.f32 %v472, %v476
    %v481 = vadd.f32 %v473, %v477
    %v482 = vrot.slane %v348, 2
    %v483 = vrot.slane %v349, 2
    %v486 = vadd.f32 %v480, %v482
    %v487 = vadd.f32 %v481, %v483
    %v488 = vadd.f32 %v486, %v360
    %v489 = vadd.f32 %v487, %v361
    %v490 = vadd.f32 %v488, %v370
    %v491 = vadd.f32 %v489, %v371
    %v492 = vrot.slane %v378, 3
    %v493 = vrot.slane %v379, 3
    %v496 = vadd.f32 %v490, %v492
    %v497 = vadd.f32 %v491, %v493
    %v498 = vmul.f32 %v185, %v53
    %v499 = vmul.f32 %v185, %v57
    %v500 = vadd.f32 %v182, %v498
    %v501 = vadd.f32 %v183, %v499
    %v502 = vadd.f32 %v500, %v192
    %v503 = vadd.f32 %v501, %v193
    %v504 = vadd.f32 %v502, %v198
    %v505 = vadd.f32 %v503, %v199
    %v506 = vmul.f32 %v203, %v53
    %v507 = vmul.f32 %v203, %v57
    %v510 = vrot.slane %v506, 1
    %v511 = vrot.slane %v507, 1
    %v514 = vadd.f32 %v504, %v510
    %v515 = vadd.f32 %v505, %v511
    %v516 = vadd.f32 %v514, %v216
    %v517 = vadd.f32 %v515, %v217
    %v518 = vadd.f32 %v516, %v226
    %v519 = vadd.f32 %v517, %v227
    %v520 = vmul.f32 %v233, %v53
    %v521 = vmul.f32 %v233, %v57
    %v524 = vrot.slane %v520, 2
    %v525 = vrot.slane %v521, 2
    %v528 = vadd.f32 %v518, %v524
    %v529 = vadd.f32 %v519, %v525
    %v530 = vadd.f32 %v528, %v246
    %v531 = vadd.f32 %v529, %v247
    %v532 = vmul.f32 %v251, %v104
    %v533 = vmul.f32 %v251, %v105
    %v534 = vadd.f32 %v530, %v532
    %v535 = vadd.f32 %v531, %v533
    %v536 = vmul.f32 %v257, %v54
    %v537 = vmul.f32 %v257, %v58
    %v538 = vadd.f32 %v534, %v536
    %v539 = vadd.f32 %v535, %v537
    %v540 = vadd.f32 %v538, %v264
    %v541 = vadd.f32 %v539, %v265
    %v542 = vmul.f32 %v269, %v104
    %v543 = vmul.f32 %v269, %v105
    %v544 = vadd.f32 %v540, %v542
    %v545 = vadd.f32 %v541, %v543
    %v546 = vmul.f32 %v275, %v54
    %v547 = vmul.f32 %v275, %v58
    %v550 = vrot.slane %v546, 1
    %v551 = vrot.slane %v547, 1
    %v554 = vadd.f32 %v544, %v550
    %v555 = vadd.f32 %v545, %v551
    %v556 = vadd.f32 %v554, %v288
    %v557 = vadd.f32 %v555, %v289
    %v558 = vmul.f32 %v293, %v104
    %v559 = vmul.f32 %v293, %v105
    %v562 = vrot.slane %v558, 2
    %v563 = vrot.slane %v559, 2
    %v566 = vadd.f32 %v556, %v562
    %v567 = vadd.f32 %v557, %v563
    %v568 = vmul.f32 %v305, %v54
    %v569 = vmul.f32 %v305, %v58
    %v572 = vrot.slane %v568, 2
    %v573 = vrot.slane %v569, 2
    %v576 = vadd.f32 %v566, %v572
    %v577 = vadd.f32 %v567, %v573
    %v578 = vadd.f32 %v576, %v318
    %v579 = vadd.f32 %v577, %v319
    %v580 = vadd.f32 %v578, %v324
    %v581 = vadd.f32 %v579, %v325
    %v582 = vmul.f32 %v329, %v55
    %v583 = vmul.f32 %v329, %v59
    %v584 = vadd.f32 %v580, %v582
    %v585 = vadd.f32 %v581, %v583
    %v586 = vadd.f32 %v584, %v336
    %v587 = vadd.f32 %v585, %v337
    %v588 = vadd.f32 %v586, %v342
    %v589 = vadd.f32 %v587, %v343
    %v590 = vmul.f32 %v347, %v55
    %v591 = vmul.f32 %v347, %v59
    %v594 = vrot.slane %v590, 1
    %v595 = vrot.slane %v591, 1
    %v598 = vadd.f32 %v588, %v594
    %v599 = vadd.f32 %v589, %v595
    %v600 = vadd.f32 %v598, %v360
    %v601 = vadd.f32 %v599, %v361
    %v602 = vadd.f32 %v600, %v370
    %v603 = vadd.f32 %v601, %v371
    %v604 = vmul.f32 %v377, %v55
    %v605 = vmul.f32 %v377, %v59
    %v608 = vrot.slane %v604, 2
    %v609 = vrot.slane %v605, 2
    %v612 = vadd.f32 %v602, %v608
    %v613 = vadd.f32 %v603, %v609
    %v616 = vrot.slane %v498, 1
    %v617 = vrot.slane %v499, 1
    %v620 = vadd.f32 %v182, %v616
    %v621 = vadd.f32 %v183, %v617
    %v622 = vadd.f32 %v620, %v192
    %v623 = vadd.f32 %v621, %v193
    %v624 = vadd.f32 %v622, %v400
    %v625 = vadd.f32 %v623, %v401
    %v626 = vrot.slane %v506, 2
    %v627 = vrot.slane %v507, 2
    %v630 = vadd.f32 %v624, %v626
    %v631 = vadd.f32 %v625, %v627
    %v632 = vadd.f32 %v630, %v216
    %v633 = vadd.f32 %v631, %v217
    %v634 = vadd.f32 %v632, %v226
    %v635 = vadd.f32 %v633, %v227
    %v636 = vrot.slane %v520, 3
    %v637 = vrot.slane %v521, 3
    %v640 = vadd.f32 %v634, %v636
    %v641 = vadd.f32 %v635, %v637
    %v642 = vadd.f32 %v640, %v246
    %v643 = vadd.f32 %v641, %v247
    %v644 = vadd.f32 %v642, %v532
    %v645 = vadd.f32 %v643, %v533
    %v648 = vrot.slane %v536, 1
    %v649 = vrot.slane %v537, 1
    %v652 = vadd.f32 %v644, %v648
    %v653 = vadd.f32 %v645, %v649
    %v654 = vadd.f32 %v652, %v264
    %v655 = vadd.f32 %v653, %v265
    %v658 = vrot.slane %v542, 2
    %v659 = vrot.slane %v543, 2
    %v662 = vadd.f32 %v654, %v658
    %v663 = vadd.f32 %v655, %v659
    %v664 = vrot.slane %v546, 2
    %v665 = vrot.slane %v547, 2
    %v668 = vadd.f32 %v662, %v664
    %v669 = vadd.f32 %v663, %v665
    %v670 = vadd.f32 %v668, %v288
    %v671 = vadd.f32 %v669, %v289
    %v672 = vadd.f32 %v670, %v562
    %v673 = vadd.f32 %v671, %v563
    %v674 = vrot.slane %v568, 3
    %v675 = vrot.slane %v569, 3
    %v678 = vadd.f32 %v672, %v674
    %v679 = vadd.f32 %v673, %v675
    %v680 = vadd.f32 %v678, %v318
    %v681 = vadd.f32 %v679, %v319
    %v682 = vadd.f32 %v680, %v324
    %v683 = vadd.f32 %v681, %v325
    %v686 = vrot.slane %v582, 1
    %v687 = vrot.slane %v583, 1
    %v690 = vadd.f32 %v682, %v686
    %v691 = vadd.f32 %v683, %v687
    %v692 = vadd.f32 %v690, %v336
    %v693 = vadd.f32 %v691, %v337
    %v694 = vadd.f32 %v692, %v476
    %v695 = vadd.f32 %v693, %v477
    %v696 = vrot.slane %v590, 2
    %v697 = vrot.slane %v591, 2
    %v700 = vadd.f32 %v694, %v696
    %v701 = vadd.f32 %v695, %v697
    %v702 = vadd.f32 %v700, %v360
    %v703 = vadd.f32 %v701, %v361
    %v704 = vadd.f32 %v702, %v370
    %v705 = vadd.f32 %v703, %v371
    %v706 = vrot.slane %v604, 3
    %v707 = vrot.slane %v605, 3
    %v710 = vadd.f32 %v704, %v706
    %v711 = vadd.f32 %v705, %v707
    %s712 = sld [smem:[#allocation5 + $0x4]]
    %v713 = vstv %s712
    %v714 = vmul.f32 %v713, %v386
    %v715 = vmul.f32 %v713, %v387
    %s716 = sld [smem:[#allocation5 + $0x5]]
    %v717 = vstv %s716
    %v718 = vmul.f32 %v717, %v496
    %v719 = vmul.f32 %v717, %v497
    %v720 = vadd.f32 %v714, %v718
    %v721 = vadd.f32 %v715, %v719
    %s722 = sld [smem:[#allocation5 + $0x7]]
    %v723 = vstv %s722
    %v724 = vmul.f32 %v723, %v612
    %v725 = vmul.f32 %v723, %v613
    %v726 = vadd.f32 %v720, %v724
    %v727 = vadd.f32 %v721, %v725
    %s728 = sld [smem:[#allocation5 + $0x8]]
    %v729 = vstv %s728
    %v730 = vmul.f32 %v729, %v710
    %v731 = vmul.f32 %v729, %v711
    %v732 = vadd.f32 %v726, %v730
    %v733 = vadd.f32 %v727, %v731
    %v734 = vpack.c.bf16 %v732, %v732
    %v735 = vpack.c.bf16 %v733, %v733
    %v738 = vunpack.c.l.b16 %v734
    %v739 = vunpack.c.l.b16 %v735
    %v740 = vrot.slane %v739, 7
    %vm741 = vcmask 1041409
    %v742 = vsel %vm741, %v740, %v738
    %v743 = vpack.c.b16 %v742, %v742
    %v748 = vunpack.c.l.b16 %v60
    %v749 = vunpack.c.l.b16 %v61
    %v750 = vunpack.c.l.b16 %v62
    %v751 = vunpack.c.l.b16 %v63
    %v752 = vpack.c.b16 %v749, %v748
    %v753 = vpack.c.b16 %v751, %v750
    %vm756 = vcmask 261120
    %v758 = vsel %vm756, %v743, 0
    %760 = vmatprep.subr.bf16.mxu0 0
    %761 = vmatpush1.bf16.msra.mxu0 %v752
    %762 = vmatprep.subr.bf16.mxu0 0
    %763 = vmatpush1.bf16.msra.mxu0 %v753
    %764 = vmatprep.subr.bf16.mxu0 0
    %765 = vmatpush1.bf16.msra.mxu0 0
    %766 = vmatprep.subr.bf16.mxu0 0
    %767 = vmatpush1.bf16.msra.mxu0 0
    %768 = vmatprep.subr.bf16.mxu0 0
    %769 = vmatpush1.bf16.msra.mxu0 0
    %770 = vmatprep.subr.bf16.mxu0 0
    %771 = vmatpush1.bf16.msra.mxu0 0
    %772 = vmatprep.subr.bf16.mxu0 0
    %773 = vmatpush1.bf16.msra.mxu0 0
    %774 = vmatprep.subr.bf16.mxu0 0
    %775 = vmatpush1.bf16.msra.mxu0 0
    %776 = vmatprep.subr.bf16.mxu0 0
    %777 = vmatpush1.bf16.msra.mxu0 0
    %778 = vmatprep.subr.bf16.mxu0 0
    %779 = vmatpush1.bf16.msra.mxu0 0
    %780 = vmatprep.subr.bf16.mxu0 0
    %781 = vmatpush1.bf16.msra.mxu0 0
    %782 = vmatprep.subr.bf16.mxu0 0
    %783 = vmatpush1.bf16.msra.mxu0 0
    %784 = vmatprep.subr.bf16.mxu0 0
    %785 = vmatpush1.bf16.msra.mxu0 0
    %786 = vmatprep.subr.bf16.mxu0 0
    %787 = vmatpush1.bf16.msra.mxu0 0
    %788 = vmatprep.subr.bf16.mxu0 0
    %789 = vmatpush1.bf16.msra.mxu0 0
    %790 = vmatprep.subr.bf16.mxu0 0
    %791 = vmatpush1.bf16.msra.mxu0 0
    %792 = vmatprep.mubr.bf16.mxu0 0
    %793 = vmatmul.mubr.bf16.gmra.mrb[0].mxu0 %v758
    %v794 = vpop.f32.mrb[0].mxu0
    %v795 = vadd.f32 0.0, %v794
    %v796 = vpop.f32.mrb[0].mxu0
    %v797 = vpop.f32.mrb[0].mxu0
    %v798 = vpop.f32.mrb[0].mxu0
    %799 = vdwg.mxu0
    %v800 = vmax.f32 %v795, 0.0
    %v801 = vpack.c.bf16 %v800, %v800
    %vm802 = vcmask 15360
    %v804 = vsel %vm802, %v801, 0
    %vm806 = vcmask 1040384
    %v808 = vsel %vm806, %v64, 0
    %810 = vmatprep.subr.bf16.mxu0 0
    %811 = vmatpush1.bf16.msra.mxu0 %v808
    %812 = vmatprep.subr.bf16.mxu0 0
    %813 = vmatpush1.bf16.msra.mxu0 0
    %814 = vmatprep.subr.bf16.mxu0 0
    %815 = vmatpush1.bf16.msra.mxu0 0
    %816 = vmatprep.subr.bf16.mxu0 0
    %817 = vmatpush1.bf16.msra.mxu0 0
    %818 = vmatprep.subr.bf16.mxu0 0
    %819 = vmatpush1.bf16.msra.mxu0 0
    %820 = vmatprep.subr.bf16.mxu0 0
    %821 = vmatpush1.bf16.msra.mxu0 0
    %822 = vmatprep.subr.bf16.mxu0 0
    %823 = vmatpush1.bf16.msra.mxu0 0
    %824 = vmatprep.subr.bf16.mxu0 0
    %825 = vmatpush1.bf16.msra.mxu0 0
    %826 = vmatprep.subr.bf16.mxu0 0
    %827 = vmatpush1.bf16.msra.mxu0 0
    %828 = vmatprep.subr.bf16.mxu0 0
    %829 = vmatpush1.bf16.msra.mxu0 0
    %830 = vmatprep.subr.bf16.mxu0 0
    %831 = vmatpush1.bf16.msra.mxu0 0
    %832 = vmatprep.subr.bf16.mxu0 0
    %833 = vmatpush1.bf16.msra.mxu0 0
    %834 = vmatprep.subr.bf16.mxu0 0
    %835 = vmatpush1.bf16.msra.mxu0 0
    %836 = vmatprep.subr.bf16.mxu0 0
    %837 = vmatpush1.bf16.msra.mxu0 0
    %838 = vmatprep.subr.bf16.mxu0 0
    %839 = vmatpush1.bf16.msra.mxu0 0
    %840 = vmatprep.subr.bf16.mxu0 0
    %841 = vmatpush1.bf16.msra.mxu0 0
    %842 = vmatprep.mubr.bf16.mxu0 0
    %843 = vmatmul.mubr.bf16.gmra.mrb[0].mxu0 %v804
    %v844 = vpop.f32.mrb[0].mxu0
    %v845 = vadd.f32 %v65, %v844
    %v846 = vpop.f32.mrb[0].mxu0
    %v847 = vpop.f32.mrb[0].mxu0
    %v848 = vpop.f32.mrb[0].mxu0
    %849 = vdwg.mxu0
    %vm850 = vcmask 254976
    %851 = vst.msk [vmem:[#allocation7] sm:$0x3] %vm850, %v845
    %v852 = vsub.f32 0.0, %v845
    %v853 = vmul.f32 %v852, 1.442695
    %v854 = vpow.pop %v853
    %v855 = vadd.f32 %v854, 1.0
    %v856 = vrcp.pop %v855
    %857 = vst.msk [vmem:[%s7] sm:$0x3] %vm850, %v856
    // Predicated region
    $region34: #{preact_bottleneck_forward.6} parent=1 // pred_check
      _
    $region35: #{preact_bottleneck_forward.6} parent=1 // pred_check_branch
      %859 = sbr.rel (0) target = $region37
    $region36: #{preact_bottleneck_forward.6} parent=1 // pred_region
      %s861 = ssub.s32 32, 32
      %862 = vsyncadd [#allocation3], %s861
      %s864 = sshll.u32 [#allocation7], 4
      %s865 = int_to_ptr.vmem [resolvable:$true] %s864
      %867 = dma.vmem_to_hbm [thread:$0]  %s865, 32, %s6, [#allocation3]
    $region37: #{preact_bottleneck_forward.6} parent=1 // pred_fallthru
      _
    // Predicated region
    $region38: #{preact_bottleneck_forward.6} parent=1 // pred_check
      _
    $region39: #{preact_bottleneck_forward.6} parent=1 // pred_check_branch
      %869 = sbr.rel (0) target = $region41
    $region40: #{preact_bottleneck_forward.6} parent=1 // pred_region
      _
    $region41: #{preact_bottleneck_forward.6} parent=1 // pred_fallthru
      _
    // Predicated region
    $region42: #{preact_bottleneck_forward.6} parent=1 // pred_check
      _
    $region43: #{preact_bottleneck_forward.6} parent=1 // pred_check_branch
      %871 = sbr.rel (0) target = $region45
    $region44: #{preact_bottleneck_forward.6} parent=1 // pred_region
      %872 = dma.done [#allocation3], 32
    $region45: #{preact_bottleneck_forward.6} parent=1 // pred_fallthru
      _
    // Predicated region
    $region46: #{preact_bottleneck_forward.6} parent=1 // pred_check
      _
    $region47: #{preact_bottleneck_forward.6} parent=1 // pred_check_branch
      %874 = sbr.rel (0) target = $region49
    $region48: #{preact_bottleneck_forward.6} parent=1 // pred_region
      _
    $region49: #{preact_bottleneck_forward.6} parent=1 // pred_fallthru
      _
    %875 = vsyncpa [#allocation3], 1
    %876 = vsyncpa [#allocation4], 1
    %877 = vsyncpa [#allocation6], 1

</llo_original>
